<compile_context>
chip_gen: v6e
topology: v6e:2x2x1
jax: 0.10.0
libtpu: 0.0.40
codegen_flags: <defaults>
</compile_context>

<pallas_src>
import functools

import jax
import jax.numpy as jnp
from jax.experimental import pallas as pl
from jax.experimental.pallas import tpu as pltpu

# ----------------------------- configuration --------------------------------
HEAD_CLASSES = {
    "wealth": 5,
    "water_src": 7,
    "toilet_type": 6,
    "roof": 4,
    "cooking_fuel": 5,
    "drought": 3,
    "pop_density": 8,
    "livestock_bin": 2,
    "agriculture_land_bin": 2,
}
TOTAL_CLASSES = sum(HEAD_CLASSES.values())    # 42
HEAD_PAD = 128                                # lane-dense fused-head output
FEAT_CH = 512                                 # per-backbone channels -> concat 1024
HIDDEN1 = 512                                 # Linear(1024, 512)
HIDDEN2 = 256                                 # Linear(512, 256)
K_RGB = 9 * 3                                 # 3x3 conv taps * 3 channels = 27
K_NIR = 9 * 1                                 # 3x3 conv taps * 1 channel  = 9
K_TOTAL = K_RGB + K_NIR                       # 36 (no 128-lane padding in HBM)
IMG_H = 16
IMG_W = 16
HW = IMG_H * IMG_W
FEAT_SLAB = 256                               # conv-output chunk for fused bias+ReLU+GAP-sum


# ----------------------------- Pallas kernel ---------------------------------
def _fused_forward_kernel(p_ref, wc_ref, bc_ref, w1_ref, b1_ref,
                          w2_ref, b2_ref, wh_ref, bh_ref, out_ref):
    """Entire SentinelResNet forward for one batch tile.

    p_ref : (TB, HW, 36)    bf16  rgb|nir im2col patches (un-padded K)
    wc_ref: (36, 1024)      bf16  block-diagonal rgb/nir conv weight
    bc_ref: (1, 1024)       f32   concat conv bias
    w1/b1 : Linear(1024,512)  (w1 already scaled by 1/HW at init)
    w2/b2 : Linear(512,256)
    wh/bh : all 9 heads fused, zero-padded to HEAD_PAD columns
    out_ref: (TB, 1, HEAD_PAD) f32
    """
    tb, hw, kdim = p_ref.shape
    n_feat = wc_ref.shape[1]                              # 1024

    patches = p_ref[...].reshape(tb * hw, kdim)           # (M, 36) bf16, fold batch into M

    # ---- backbone stand-in: 3x3 conv + bias + ReLU, fused with GAP ----------
    # Chunk the 1024-wide conv output into FEAT_SLAB-column slabs and reduce
    # each slab to its per-batch spatial SUM immediately, so the full
    # (M, 1024) f32 activation never has to be stored and re-loaded for the
    # pooling reduction.  AdaptiveAvgPool2d(1)'s 1/HW is folded into w1.
    feat_slabs = []
    for n0 in range(0, n_feat, FEAT_SLAB):
        slab = jnp.dot(patches, wc_ref[:, n0:n0 + FEAT_SLAB],
                       preferred_element_type=jnp.float32)
        slab = jnp.maximum(slab + bc_ref[:, n0:n0 + FEAT_SLAB], 0.0)     # (M, SLAB)
        feat_slabs.append(jnp.sum(slab.reshape(tb, hw, FEAT_SLAB), axis=1))
    feat = jnp.concatenate(feat_slabs, axis=-1)            # (TB, 1024) f32 GAP-sum

    # ---- classifier: Dropout(id) -> Linear -> ReLU -> Dropout(id) -> ... ----
    h = jnp.dot(feat.astype(jnp.bfloat16), w1_ref[...],
                preferred_element_type=jnp.float32)
    h = jnp.maximum(h + b1_ref[...], 0.0)                  # (TB, 512)
    h = jnp.dot(h.astype(jnp.bfloat16), w2_ref[...],
                preferred_element_type=jnp.float32)
    h = jnp.maximum(h + b2_ref[...], 0.0)                  # (TB, 256)

    # ---- all 9 heads fused into one lane-dense matmul ------------------------
    logits = jnp.dot(h.astype(jnp.bfloat16), wh_ref[...],
                     preferred_element_type=jnp.float32) + bh_ref[...]
    out_ref[...] = logits.reshape(tb, 1, -1)


# ----------------------------- kernel wrapper --------------------------------
def _replicated_spec(shape):
    """Grid-invariant operand: constant index_map + single buffer (no point
    double-buffering something whose block never changes)."""
    n = len(shape)
    return pl.BlockSpec(shape, lambda i, n=n: (0,) * n,
                        pipeline_mode=pl.Buffered(buffer_count=1))


def _num_batch_tiles(batch, hw):
    """Adaptive megacore split.

    v5e/v6e have one TensorCore: extra grid steps are pure per-step overhead
    and halve matmul M, so use a single step.  On v7x, a 2-way split
    duplicates the ~1.4 MiB replicated-weight DMA per core, so only split once
    the per-tile conv work is large enough to amortize it.  The split is only
    taken for even batch so the tile is always an exact divisor of B.
    """
    if batch % 2 == 0 and batch * hw >= 8192:
        return 2
    return 1


def fused_forward(patches, wc, bc, w1, b1, w2, b2, wh, bh):
    """patches: (B, HW, 36) bf16 -> padded fused-head logits (B, HEAD_PAD) f32."""
    B, hw, kdim = patches.shape
    cpad = wh.shape[1]
    nb = _num_batch_tiles(B, hw)
    batch_tile = B // nb

    out = pl.pallas_call(
        _fused_forward_kernel,
        out_shape=jax.ShapeDtypeStruct((B, 1, cpad), jnp.float32),
        grid=(nb,),
        in_specs=[
            pl.BlockSpec((batch_tile, hw, kdim), lambda i: (i, 0, 0)),
            _replicated_spec(wc.shape), _replicated_spec(bc.shape),
            _replicated_spec(w1.shape), _replicated_spec(b1.shape),
            _replicated_spec(w2.shape), _replicated_spec(b2.shape),
            _replicated_spec(wh.shape), _replicated_spec(bh.shape),
        ],
        out_specs=pl.BlockSpec((batch_tile, 1, cpad), lambda i: (i, 0, 0)),
        compiler_params=pltpu.CompilerParams(
            dimension_semantics=("parallel",) if nb > 1 else ("arbitrary",)),
    )(patches, wc, bc, w1, b1, w2, b2, wh, bh)
    return out.reshape(B, cpad)


# ----------------------------- glue (plain JAX) -------------------------------
def im2col_3x3(x_nhwc):
    """3x3 / pad=1 / stride=1 im2col.  (B,H,W,C) -> (B, H*W, 9*C)."""
    B, H, W, C = x_nhwc.shape
    xp = jnp.pad(x_nhwc, ((0, 0), (1, 1), (1, 1), (0, 0)))
    cols = [xp[:, kh:kh + H, kw:kw + W, :]
            for kh in range(3) for kw in range(3)]
    p = jnp.stack(cols, axis=3)                   # (B, H, W, 9, C)
    return p.reshape(B, H * W, 9 * C)


def make_patches(rgb_nchw, nir_nchw):
    """Wrapper-side im2col of both streams, concatenated along K so the
    block-diagonal conv weight produces [rgb_feat | nir_feat] directly."""
    rgb_p = im2col_3x3(jnp.transpose(rgb_nchw, (0, 2, 3, 1)))   # (B, HW, 27)
    nir_p = im2col_3x3(jnp.transpose(nir_nchw, (0, 2, 3, 1)))   # (B, HW, 9)
    return jnp.concatenate([rgb_p, nir_p], axis=2).astype(jnp.bfloat16)  # (B, HW, 36)


def init_params(key, hw=HW):
    keys = jax.random.split(key, 8 + 2 * len(HEAD_CLASSES))
    s = 0.05
    # backbone stand-ins (rgb: 3 in-channels, nir: 1 in-channel)
    rgb_w = s * jax.random.normal(keys[0], (K_RGB, FEAT_CH), jnp.float32)
    rgb_b = s * jax.random.normal(keys[1], (1, FEAT_CH), jnp.float32)
    nir_w = s * jax.random.normal(keys[2], (K_NIR, FEAT_CH), jnp.float32)
    nir_b = s * jax.random.normal(keys[3], (1, FEAT_CH), jnp.float32)

    # block-diagonal merged conv weight (36, 1024): rgb taps -> cols [0, 512),
    # nir taps -> cols [512, 1024).  No 128-lane K padding in HBM.
    wc = jnp.zeros((K_TOTAL, 2 * FEAT_CH), jnp.float32)
    wc = wc.at[:K_RGB, :FEAT_CH].set(rgb_w)
    wc = wc.at[K_RGB:, FEAT_CH:].set(nir_w)
    bc = jnp.concatenate([rgb_b, nir_b], axis=1)                # (1, 1024)

    # AdaptiveAvgPool2d(1)'s 1/HW is folded into w1 (exact: pooling is linear),
    # so the kernel only computes spatial sums (no full-feature divide).
    w1 = s * jax.random.normal(keys[4], (2 * FEAT_CH, HIDDEN1), jnp.float32)
    w1 = w1 * (1.0 / float(hw))

    p = {
        "wc": wc.astype(jnp.bfloat16),
        "bc": bc,
        "w1": w1.astype(jnp.bfloat16),
        "b1": s * jax.random.normal(keys[5], (1, HIDDEN1), jnp.float32),
        "w2": (s * jax.random.normal(keys[6], (HIDDEN1, HIDDEN2),
                                     jnp.float32)).astype(jnp.bfloat16),
        "b2": s * jax.random.normal(keys[7], (1, HIDDEN2), jnp.float32),
    }

    # fused heads, zero-padded to HEAD_PAD columns (sliced back in the wrapper)
    head_ws, head_bs = [], []
    for idx, (_, n) in enumerate(HEAD_CLASSES.items()):
        head_ws.append(
            s * jax.random.normal(keys[8 + 2 * idx], (HIDDEN2, n), jnp.float32))
        head_bs.append(
            s * jax.random.normal(keys[9 + 2 * idx], (1, n), jnp.float32))
    wh = jnp.concatenate(head_ws, axis=1)                       # (256, 42)
    bh = jnp.concatenate(head_bs, axis=1)                       # (1, 42)
    wh = jnp.pad(wh, ((0, 0), (0, HEAD_PAD - TOTAL_CLASSES)))
    bh = jnp.pad(bh, ((0, 0), (0, HEAD_PAD - TOTAL_CLASSES)))
    p["wh"] = wh.astype(jnp.bfloat16)
    p["bh"] = bh
    return p


def sentinel_resnet_forward(params, rgb_nchw, nir_nchw):
    """Mirrors SentinelResNet.forward(xb) with xb = (rgb, nir), NCHW inputs."""
    patches = make_patches(rgb_nchw, nir_nchw)                  # (B, HW, 36) bf16
    logits_pad = fused_forward(
        patches, params["wc"], params["bc"],
        params["w1"], params["b1"], params["w2"], params["b2"],
        params["wh"], params["bh"])                             # (B, 128)
    logits = logits_pad[:, :TOTAL_CLASSES]                      # (B, 42)

    outs, off = [], 0
    for _, n in HEAD_CLASSES.items():
        outs.append(logits[:, off:off + n])
        off += n
    return tuple(outs)


def reference_forward_f32(params, rgb_nchw, nir_nchw):
    """Pure-JAX fp32 reference of the same math (no Pallas, no bf16 matmuls)."""
    patches = make_patches(rgb_nchw, nir_nchw).astype(jnp.float32)
    conv = jnp.maximum(
        jnp.einsum("bmk,kn->bmn", patches, params["wc"].astype(jnp.float32))
        + params["bc"], 0.0)
    feat = jnp.sum(conv, axis=1)                                # GAP-sum (B, 1024)
    h = jnp.maximum(feat @ params["w1"].astype(jnp.float32) + params["b1"], 0.0)
    h = jnp.maximum(h @ params["w2"].astype(jnp.float32) + params["b2"], 0.0)
    logits = h @ params["wh"].astype(jnp.float32) + params["bh"]
    return logits[:, :TOTAL_CLASSES]


# ----------------------------- main --------------------------------
if __name__ == "__main__":
    key = jax.random.PRNGKey(0)
    k_params, k_rgb, k_nir = jax.random.split(key, 3)
    params = init_params(k_params)

    B = 2
    rgb = jax.random.normal(k_rgb, (B, 3, IMG_H, IMG_W), jnp.float32)   # NCHW, xb[0]
    nir = jax.random.normal(k_nir, (B, 1, IMG_H, IMG_W), jnp.float32)   # NCHW, xb[1]

    fwd = jax.jit(functools.partial(sentinel_resnet_forward, params))
    outs = jax.block_until_ready(fwd(rgb, nir))

    # per-head shape / sanity checks
    for (name, n), o in zip(HEAD_CLASSES.items(), outs):
        assert o.shape == (B, n), (name, o.shape)
        assert bool(jnp.all(jnp.isfinite(o))), name

    # tolerance check of the bf16/MXU Pallas kernel against the fp32 reference
    ref = reference_forward_f32(params, rgb, nir)
    got = jnp.concatenate(outs, axis=1)
    max_err = float(jnp.max(jnp.abs(got - ref)))
    assert bool(jnp.allclose(got, ref, rtol=1e-1, atol=1e-1)), max_err

    print("KERNEL_OK")
</pallas_src>

<mosaic_0001>
module attributes {stable_mosaic.version = 11 : i64} {
  func.func @_fused_forward_kernel(%arg0: i32, %arg1: memref<2x256x36xbf16, #tpu.memory_space<vmem>>, %arg2: memref<36x1024xbf16, #tpu.memory_space<vmem>>, %arg3: memref<1x1024xf32, #tpu.memory_space<vmem>>, %arg4: memref<1024x512xbf16, #tpu.memory_space<vmem>>, %arg5: memref<1x512xf32, #tpu.memory_space<vmem>>, %arg6: memref<512x256xbf16, #tpu.memory_space<vmem>>, %arg7: memref<1x256xf32, #tpu.memory_space<vmem>>, %arg8: memref<256x128xbf16, #tpu.memory_space<vmem>>, %arg9: memref<1x128xf32, #tpu.memory_space<vmem>>, %arg10: memref<2x1x128xf32, #tpu.memory_space<vmem>>) attributes {dimension_semantics = [#tpu.dimension_semantics<arbitrary>], iteration_bounds = array<i64: 1>, scalar_prefetch = 0 : i64, scratch_operands = 0 : i64, tpu.core_type = #tpu.core_type<tc>, window_params = [{transform_indices = @transform_0, window_bounds = array<i64: 2, 256, 36>}, {pipeline_mode = #tpu.pipeline_mode<synchronous>, transform_indices = @transform_1, window_bounds = array<i64: 36, 1024>}, {pipeline_mode = #tpu.pipeline_mode<synchronous>, transform_indices = @transform_2, window_bounds = array<i64: 1, 1024>}, {pipeline_mode = #tpu.pipeline_mode<synchronous>, transform_indices = @transform_3, window_bounds = array<i64: 1024, 512>}, {pipeline_mode = #tpu.pipeline_mode<synchronous>, transform_indices = @transform_4, window_bounds = array<i64: 1, 512>}, {pipeline_mode = #tpu.pipeline_mode<synchronous>, transform_indices = @transform_5, window_bounds = array<i64: 512, 256>}, {pipeline_mode = #tpu.pipeline_mode<synchronous>, transform_indices = @transform_6, window_bounds = array<i64: 1, 256>}, {pipeline_mode = #tpu.pipeline_mode<synchronous>, transform_indices = @transform_7, window_bounds = array<i64: 256, 128>}, {pipeline_mode = #tpu.pipeline_mode<synchronous>, transform_indices = @transform_8, window_bounds = array<i64: 1, 128>}, {transform_indices = @transform_9, window_bounds = array<i64: 2, 1, 128>}]} {
    %c0 = arith.constant 0 : index
    %c0_0 = arith.constant 0 : index
    %c0_1 = arith.constant 0 : index
    %0 = vector.load %arg1[%c0, %c0_0, %c0_1] : memref<2x256x36xbf16, #tpu.memory_space<vmem>>, vector<2x256x36xbf16>
    %1 = vector.shape_cast %0 : vector<2x256x36xbf16> to vector<512x36xbf16>
    %c0_2 = arith.constant 0 : index
    %c0_3 = arith.constant 0 : index
    %2 = vector.load %arg2[%c0_2, %c0_3] : memref<36x1024xbf16, #tpu.memory_space<vmem>>, vector<36x256xbf16>
    %cst = arith.constant dense<0.000000e+00> : vector<512x256xf32>
    %3 = tpu.matmul %1, %2, %cst {dimension_numbers = #tpu.dot_dimension_numbers<[1], [0], [0], [1], [0, 0, 1, 1], [], []>} : vector<512x36xbf16>, vector<36x256xbf16>, vector<512x256xf32> -> vector<512x256xf32>
    %c0_4 = arith.constant 0 : index
    %c0_5 = arith.constant 0 : index
    %4 = vector.load %arg3[%c0_4, %c0_5] : memref<1x1024xf32, #tpu.memory_space<vmem>>, vector<1x256xf32>
    %5 = vector.broadcast %4 : vector<1x256xf32> to vector<512x256xf32>
    %6 = arith.addf %3, %5 : vector<512x256xf32>
    %cst_6 = arith.constant 0.000000e+00 : f32
    %7 = vector.broadcast %cst_6 : f32 to vector<512x256xf32>
    %8 = arith.maximumf %6, %7 : vector<512x256xf32>
    %9 = vector.shape_cast %8 : vector<512x256xf32> to vector<2x256x256xf32>
    %cst_7 = arith.constant dense<0.000000e+00> : vector<2x256xf32>
    %10 = vector.multi_reduction <add>, %9, %cst_7 [1] : vector<2x256x256xf32> to vector<2x256xf32>
    %c0_8 = arith.constant 0 : index
    %c256 = arith.constant 256 : index
    %11 = vector.load %arg2[%c0_8, %c256] : memref<36x1024xbf16, #tpu.memory_space<vmem>>, vector<36x256xbf16>
    %cst_9 = arith.constant dense<0.000000e+00> : vector<512x256xf32>
    %12 = tpu.matmul %1, %11, %cst_9 {dimension_numbers = #tpu.dot_dimension_numbers<[1], [0], [0], [1], [0, 0, 1, 1], [], []>} : vector<512x36xbf16>, vector<36x256xbf16>, vector<512x256xf32> -> vector<512x256xf32>
    %c0_10 = arith.constant 0 : index
    %c256_11 = arith.constant 256 : index
    %13 = vector.load %arg3[%c0_10, %c256_11] : memref<1x1024xf32, #tpu.memory_space<vmem>>, vector<1x256xf32>
    %14 = vector.broadcast %13 : vector<1x256xf32> to vector<512x256xf32>
    %15 = arith.addf %12, %14 : vector<512x256xf32>
    %cst_12 = arith.constant 0.000000e+00 : f32
    %16 = vector.broadcast %cst_12 : f32 to vector<512x256xf32>
    %17 = arith.maximumf %15, %16 : vector<512x256xf32>
    %18 = vector.shape_cast %17 : vector<512x256xf32> to vector<2x256x256xf32>
    %cst_13 = arith.constant dense<0.000000e+00> : vector<2x256xf32>
    %19 = vector.multi_reduction <add>, %18, %cst_13 [1] : vector<2x256x256xf32> to vector<2x256xf32>
    %c0_14 = arith.constant 0 : index
    %c512 = arith.constant 512 : index
    %20 = vector.load %arg2[%c0_14, %c512] : memref<36x1024xbf16, #tpu.memory_space<vmem>>, vector<36x256xbf16>
    %cst_15 = arith.constant dense<0.000000e+00> : vector<512x256xf32>
    %21 = tpu.matmul %1, %20, %cst_15 {dimension_numbers = #tpu.dot_dimension_numbers<[1], [0], [0], [1], [0, 0, 1, 1], [], []>} : vector<512x36xbf16>, vector<36x256xbf16>, vector<512x256xf32> -> vector<512x256xf32>
    %c0_16 = arith.constant 0 : index
    %c512_17 = arith.constant 512 : index
    %22 = vector.load %arg3[%c0_16, %c512_17] : memref<1x1024xf32, #tpu.memory_space<vmem>>, vector<1x256xf32>
    %23 = vector.broadcast %22 : vector<1x256xf32> to vector<512x256xf32>
    %24 = arith.addf %21, %23 : vector<512x256xf32>
    %cst_18 = arith.constant 0.000000e+00 : f32
    %25 = vector.broadcast %cst_18 : f32 to vector<512x256xf32>
    %26 = arith.maximumf %24, %25 : vector<512x256xf32>
    %27 = vector.shape_cast %26 : vector<512x256xf32> to vector<2x256x256xf32>
    %cst_19 = arith.constant dense<0.000000e+00> : vector<2x256xf32>
    %28 = vector.multi_reduction <add>, %27, %cst_19 [1] : vector<2x256x256xf32> to vector<2x256xf32>
    %c0_20 = arith.constant 0 : index
    %c768 = arith.constant 768 : index
    %29 = vector.load %arg2[%c0_20, %c768] : memref<36x1024xbf16, #tpu.memory_space<vmem>>, vector<36x256xbf16>
    %cst_21 = arith.constant dense<0.000000e+00> : vector<512x256xf32>
    %30 = tpu.matmul %1, %29, %cst_21 {dimension_numbers = #tpu.dot_dimension_numbers<[1], [0], [0], [1], [0, 0, 1, 1], [], []>} : vector<512x36xbf16>, vector<36x256xbf16>, vector<512x256xf32> -> vector<512x256xf32>
    %c0_22 = arith.constant 0 : index
    %c768_23 = arith.constant 768 : index
    %31 = vector.load %arg3[%c0_22, %c768_23] : memref<1x1024xf32, #tpu.memory_space<vmem>>, vector<1x256xf32>
    %32 = vector.broadcast %31 : vector<1x256xf32> to vector<512x256xf32>
    %33 = arith.addf %30, %32 : vector<512x256xf32>
    %cst_24 = arith.constant 0.000000e+00 : f32
    %34 = vector.broadcast %cst_24 : f32 to vector<512x256xf32>
    %35 = arith.maximumf %33, %34 : vector<512x256xf32>
    %36 = vector.shape_cast %35 : vector<512x256xf32> to vector<2x256x256xf32>
    %cst_25 = arith.constant dense<0.000000e+00> : vector<2x256xf32>
    %37 = vector.multi_reduction <add>, %36, %cst_25 [1] : vector<2x256x256xf32> to vector<2x256xf32>
    %38 = tpu.concatenate %10, %19, %28, %37 in 1 : vector<2x256xf32>, vector<2x256xf32>, vector<2x256xf32>, vector<2x256xf32> -> vector<2x1024xf32>
    %39 = arith.truncf %38 : vector<2x1024xf32> to vector<2x1024xbf16>
    %c0_26 = arith.constant 0 : index
    %c0_27 = arith.constant 0 : index
    %40 = vector.load %arg4[%c0_26, %c0_27] : memref<1024x512xbf16, #tpu.memory_space<vmem>>, vector<1024x512xbf16>
    %cst_28 = arith.constant dense<0.000000e+00> : vector<2x512xf32>
    %41 = tpu.matmul %39, %40, %cst_28 {dimension_numbers = #tpu.dot_dimension_numbers<[1], [0], [0], [1], [0, 0, 1, 1], [], []>} : vector<2x1024xbf16>, vector<1024x512xbf16>, vector<2x512xf32> -> vector<2x512xf32>
    %c0_29 = arith.constant 0 : index
    %c0_30 = arith.constant 0 : index
    %42 = vector.load %arg5[%c0_29, %c0_30] : memref<1x512xf32, #tpu.memory_space<vmem>>, vector<1x512xf32>
    %43 = vector.broadcast %42 : vector<1x512xf32> to vector<2x512xf32>
    %44 = arith.addf %41, %43 : vector<2x512xf32>
    %cst_31 = arith.constant 0.000000e+00 : f32
    %45 = vector.broadcast %cst_31 : f32 to vector<2x512xf32>
    %46 = arith.maximumf %44, %45 : vector<2x512xf32>
    %47 = arith.truncf %46 : vector<2x512xf32> to vector<2x512xbf16>
    %c0_32 = arith.constant 0 : index
    %c0_33 = arith.constant 0 : index
    %48 = vector.load %arg6[%c0_32, %c0_33] : memref<512x256xbf16, #tpu.memory_space<vmem>>, vector<512x256xbf16>
    %cst_34 = arith.constant dense<0.000000e+00> : vector<2x256xf32>
    %49 = tpu.matmul %47, %48, %cst_34 {dimension_numbers = #tpu.dot_dimension_numbers<[1], [0], [0], [1], [0, 0, 1, 1], [], []>} : vector<2x512xbf16>, vector<512x256xbf16>, vector<2x256xf32> -> vector<2x256xf32>
    %c0_35 = arith.constant 0 : index
    %c0_36 = arith.constant 0 : index
    %50 = vector.load %arg7[%c0_35, %c0_36] : memref<1x256xf32, #tpu.memory_space<vmem>>, vector<1x256xf32>
    %51 = vector.broadcast %50 : vector<1x256xf32> to vector<2x256xf32>
    %52 = arith.addf %49, %51 : vector<2x256xf32>
    %cst_37 = arith.constant 0.000000e+00 : f32
    %53 = vector.broadcast %cst_37 : f32 to vector<2x256xf32>
    %54 = arith.maximumf %52, %53 : vector<2x256xf32>
    %55 = arith.truncf %54 : vector<2x256xf32> to vector<2x256xbf16>
    %c0_38 = arith.constant 0 : index
    %c0_39 = arith.constant 0 : index
    %56 = vector.load %arg8[%c0_38, %c0_39] : memref<256x128xbf16, #tpu.memory_space<vmem>>, vector<256x128xbf16>
    %cst_40 = arith.constant dense<0.000000e+00> : vector<2x128xf32>
    %57 = tpu.matmul %55, %56, %cst_40 {dimension_numbers = #tpu.dot_dimension_numbers<[1], [0], [0], [1], [0, 0, 1, 1], [], []>} : vector<2x256xbf16>, vector<256x128xbf16>, vector<2x128xf32> -> vector<2x128xf32>
    %c0_41 = arith.constant 0 : index
    %c0_42 = arith.constant 0 : index
    %58 = vector.load %arg9[%c0_41, %c0_42] : memref<1x128xf32, #tpu.memory_space<vmem>>, vector<1x128xf32>
    %59 = vector.broadcast %58 : vector<1x128xf32> to vector<2x128xf32>
    %60 = arith.addf %57, %59 : vector<2x128xf32>
    %61 = vector.shape_cast %60 : vector<2x128xf32> to vector<2x1x128xf32>
    %c0_43 = arith.constant 0 : index
    %c0_44 = arith.constant 0 : index
    %c0_45 = arith.constant 0 : index
    %62 = vector.load %arg10[%c0_43, %c0_44, %c0_45] : memref<2x1x128xf32, #tpu.memory_space<vmem>>, vector<2x1x128xf32>
    tpu.vector_store %arg10[%c0_43, %c0_44, %c0_45], %61 {strides = array<i32>} : memref<2x1x128xf32, #tpu.memory_space<vmem>>, vector<2x1x128xf32>,
    return
  }
  func.func @transform_0(%arg0: i32) -> (i32, i32, i32) {
    %c0_i32 = arith.constant 0 : i32
    %c0_i32_0 = arith.constant 0 : i32
    %c0_i32_1 = arith.constant 0 : i32
    return %arg0, %c0_i32, %c0_i32_0 : i32, i32, i32
  }
  func.func @transform_1(%arg0: i32) -> (i32, i32) {
    %c0_i32 = arith.constant 0 : i32
    %c0_i32_0 = arith.constant 0 : i32
    %c0_i32_1 = arith.constant 0 : i32
    return %c0_i32, %c0_i32_0 : i32, i32
  }
  func.func @transform_2(%arg0: i32) -> (i32, i32) {
    %c0_i32 = arith.constant 0 : i32
    %c0_i32_0 = arith.constant 0 : i32
    %c0_i32_1 = arith.constant 0 : i32
    return %c0_i32, %c0_i32_0 : i32, i32
  }
  func.func @transform_3(%arg0: i32) -> (i32, i32) {
    %c0_i32 = arith.constant 0 : i32
    %c0_i32_0 = arith.constant 0 : i32
    %c0_i32_1 = arith.constant 0 : i32
    return %c0_i32, %c0_i32_0 : i32, i32
  }
  func.func @transform_4(%arg0: i32) -> (i32, i32) {
    %c0_i32 = arith.constant 0 : i32
    %c0_i32_0 = arith.constant 0 : i32
    %c0_i32_1 = arith.constant 0 : i32
    return %c0_i32, %c0_i32_0 : i32, i32
  }
  func.func @transform_5(%arg0: i32) -> (i32, i32) {
    %c0_i32 = arith.constant 0 : i32
    %c0_i32_0 = arith.constant 0 : i32
    %c0_i32_1 = arith.constant 0 : i32
    return %c0_i32, %c0_i32_0 : i32, i32
  }
  func.func @transform_6(%arg0: i32) -> (i32, i32) {
    %c0_i32 = arith.constant 0 : i32
    %c0_i32_0 = arith.constant 0 : i32
    %c0_i32_1 = arith.constant 0 : i32
    return %c0_i32, %c0_i32_0 : i32, i32
  }
  func.func @transform_7(%arg0: i32) -> (i32, i32) {
    %c0_i32 = arith.constant 0 : i32
    %c0_i32_0 = arith.constant 0 : i32
    %c0_i32_1 = arith.constant 0 : i32
    return %c0_i32, %c0_i32_0 : i32, i32
  }
  func.func @transform_8(%arg0: i32) -> (i32, i32) {
    %c0_i32 = arith.constant 0 : i32
    %c0_i32_0 = arith.constant 0 : i32
    %c0_i32_1 = arith.constant 0 : i32
    return %c0_i32, %c0_i32_0 : i32, i32
  }
  func.func @transform_9(%arg0: i32) -> (i32, i32, i32) {
    %c0_i32 = arith.constant 0 : i32
    %c0_i32_0 = arith.constant 0 : i32
    %c0_i32_1 = arith.constant 0 : i32
    return %arg0, %c0_i32, %c0_i32_0 : i32, i32, i32
  }
}

</mosaic_0001>

<llo_original>
// kernel: sentinel_resnet_forward.1
$region0: #{sentinel_resnet_forward.1}
  #allocation0 [shape = 'u32[]', space=smem, size = 0x4, offset = 0x4, fixed_abs, tag = 'smem constant byte address 0x4 - core index']
  #allocation1 [shape = 'u32[144,128]{1,0:T(1,128)}', space=vmem, size = 0x12000, scoped, tag = 'internal scratch']
  %s0 = inlined_call_operand.vmem [shape: bf16[2,256,36], index: 0, kind: input, shape index: {}]
  %s1 = inlined_call_operand.vmem [shape: bf16[36,1024], index: 1, kind: input, shape index: {}]
  %s2 = inlined_call_operand.vmem [shape: f32[1,1024], index: 2, kind: input, shape index: {}]
  %s3 = inlined_call_operand.vmem [shape: bf16[1024,512], index: 3, kind: input, shape index: {}]
  %s4 = inlined_call_operand.vmem [shape: f32[1,512], index: 4, kind: input, shape index: {}]
  %s5 = inlined_call_operand.vmem [shape: bf16[512,256], index: 5, kind: input, shape index: {}]
  %s6 = inlined_call_operand.vmem [shape: f32[1,256], index: 6, kind: input, shape index: {}]
  %s7 = inlined_call_operand.vmem [shape: bf16[256,128], index: 7, kind: input, shape index: {}]
  %s8 = inlined_call_operand.vmem [shape: f32[1,128], index: 8, kind: input, shape index: {}]
  %s9 = inlined_call_operand.vmem [shape: f32[2,1,128], index: 9, kind: output, shape index: {}]
  %s10 = sld [smem:[#allocation0]]
  $region46: #{sentinel_resnet_forward.1} parent=0
    _
  %s12 = ssub.s32 1, %s10
  %s13 = scalar_select 0, %s12, %s10
  // Predicated region
  $region2: #{sentinel_resnet_forward.1} parent=0 // pred_check
    _
  $region3: #{sentinel_resnet_forward.1} parent=0 // pred_check_branch
    %15 = sbr.rel (0) target = $region5
  $region4: #{sentinel_resnet_forward.1} parent=0 // pred_region
    _
  $region5: #{sentinel_resnet_forward.1} parent=0 // pred_fallthru
    _
  // Predicated region
  $region6: #{sentinel_resnet_forward.1} parent=0 // pred_check
    _
  $region7: #{sentinel_resnet_forward.1} parent=0 // pred_check_branch
    %17 = sbr.rel (0) target = $region9
  $region8: #{sentinel_resnet_forward.1} parent=0 // pred_region
    _
  $region9: #{sentinel_resnet_forward.1} parent=0 // pred_fallthru
    _
  // Predicated region
  $region10: #{sentinel_resnet_forward.1} parent=0 // pred_check
    _
  $region11: #{sentinel_resnet_forward.1} parent=0 // pred_check_branch
    %19 = sbr.rel (0) target = $region13
  $region12: #{sentinel_resnet_forward.1} parent=0 // pred_region
    _
  $region13: #{sentinel_resnet_forward.1} parent=0 // pred_fallthru
    _
  // Predicated region
  $region14: #{sentinel_resnet_forward.1} parent=0 // pred_check
    _
  $region15: #{sentinel_resnet_forward.1} parent=0 // pred_check_branch
    %21 = sbr.rel (0) target = $region17
  $region16: #{sentinel_resnet_forward.1} parent=0 // pred_region
    _
  $region17: #{sentinel_resnet_forward.1} parent=0 // pred_fallthru
    _
  // Predicated region
  $region18: #{sentinel_resnet_forward.1} parent=0 // pred_check
    _
  $region19: #{sentinel_resnet_forward.1} parent=0 // pred_check_branch
    %23 = sbr.rel (0) target = $region21
  $region20: #{sentinel_resnet_forward.1} parent=0 // pred_region
    _
  $region21: #{sentinel_resnet_forward.1} parent=0 // pred_fallthru
    _
  // Predicated region
  $region22: #{sentinel_resnet_forward.1} parent=0 // pred_check
    _
  $region23: #{sentinel_resnet_forward.1} parent=0 // pred_check_branch
    %25 = sbr.rel (0) target = $region25
  $region24: #{sentinel_resnet_forward.1} parent=0 // pred_region
    _
  $region25: #{sentinel_resnet_forward.1} parent=0 // pred_fallthru
    _
  // Predicated region
  $region26: #{sentinel_resnet_forward.1} parent=0 // pred_check
    _
  $region27: #{sentinel_resnet_forward.1} parent=0 // pred_check_branch
    %27 = sbr.rel (0) target = $region29
  $region28: #{sentinel_resnet_forward.1} parent=0 // pred_region
    _
  $region29: #{sentinel_resnet_forward.1} parent=0 // pred_fallthru
    _
  // Predicated region
  $region30: #{sentinel_resnet_forward.1} parent=0 // pred_check
    _
  $region31: #{sentinel_resnet_forward.1} parent=0 // pred_check_branch
    %29 = sbr.rel (0) target = $region33
  $region32: #{sentinel_resnet_forward.1} parent=0 // pred_region
    _
  $region33: #{sentinel_resnet_forward.1} parent=0 // pred_fallthru
    _
  // Predicated region
  $region34: #{sentinel_resnet_forward.1} parent=0 // pred_check
    _
  $region35: #{sentinel_resnet_forward.1} parent=0 // pred_check_branch
    %31 = sbr.rel (0) target = $region37
  $region36: #{sentinel_resnet_forward.1} parent=0 // pred_region
    _
  $region37: #{sentinel_resnet_forward.1} parent=0 // pred_fallthru
    _
  %v33 = vld [vmem:[%s0] sm:$0xf]
  %v34 = vld [vmem:[%s0 + $0x4] sm:$0xf]
  %v35 = vld [vmem:[%s0 + $0x8] sm:$0xf]
  %v36 = vld [vmem:[%s0 + $0xc] sm:$0xf]
  %v37 = vld [vmem:[%s0 + $0x10] sm:$0xf]
  %v38 = vld [vmem:[%s0 + $0x14] sm:$0xf]
  %v39 = vld [vmem:[%s0 + $0x18] sm:$0xf]
  %v40 = vld [vmem:[%s0 + $0x1c] sm:$0xf]
  %v41 = vld [vmem:[%s0 + $0x20] sm:$0xf]
  %v42 = vld [vmem:[%s0 + $0x24] sm:$0xf]
  %v43 = vld [vmem:[%s0 + $0x28] sm:$0xf]
  %v44 = vld [vmem:[%s0 + $0x2c] sm:$0xf]
  %v45 = vld [vmem:[%s0 + $0x30] sm:$0xf]
  %v46 = vld [vmem:[%s0 + $0x34] sm:$0xf]
  %v47 = vld [vmem:[%s0 + $0x38] sm:$0xf]
  %v48 = vld [vmem:[%s0 + $0x3c] sm:$0xf]
  %v49 = vld [vmem:[%s0 + $0x40] sm:$0xf]
  %v50 = vld [vmem:[%s0 + $0x44] sm:$0xf]
  %v51 = vld [vmem:[%s0 + $0x48] sm:$0xf]
  %v52 = vld [vmem:[%s0 + $0x4c] sm:$0xf]
  %v53 = vld [vmem:[%s0 + $0x50] sm:$0xf]
  %v54 = vld [vmem:[%s0 + $0x54] sm:$0xf]
  %v55 = vld [vmem:[%s0 + $0x58] sm:$0xf]
  %v56 = vld [vmem:[%s0 + $0x5c] sm:$0xf]
  %v57 = vld [vmem:[%s0 + $0x60] sm:$0xf]
  %v58 = vld [vmem:[%s0 + $0x64] sm:$0xf]
  %v59 = vld [vmem:[%s0 + $0x68] sm:$0xf]
  %v60 = vld [vmem:[%s0 + $0x6c] sm:$0xf]
  %v61 = vld [vmem:[%s0 + $0x70] sm:$0xf]
  %v62 = vld [vmem:[%s0 + $0x74] sm:$0xf]
  %v63 = vld [vmem:[%s0 + $0x78] sm:$0xf]
  %v64 = vld [vmem:[%s0 + $0x7c] sm:$0xf]
  %v65 = vld [vmem:[%s0 + $0x80] sm:$0xf]
  %v66 = vld [vmem:[%s0 + $0x84] sm:$0xf]
  %v67 = vld [vmem:[%s0 + $0x88] sm:$0xf]
  %v68 = vld [vmem:[%s0 + $0x8c] sm:$0xf]
  %v69 = vld [vmem:[%s0 + $0x90] sm:$0xf]
  %v70 = vld [vmem:[%s0 + $0x94] sm:$0xf]
  %v71 = vld [vmem:[%s0 + $0x98] sm:$0xf]
  %v72 = vld [vmem:[%s0 + $0x9c] sm:$0xf]
  %v73 = vld [vmem:[%s0 + $0xa0] sm:$0xf]
  %v74 = vld [vmem:[%s0 + $0xa4] sm:$0xf]
  %v75 = vld [vmem:[%s0 + $0xa8] sm:$0xf]
  %v76 = vld [vmem:[%s0 + $0xac] sm:$0xf]
  %v77 = vld [vmem:[%s0 + $0xb0] sm:$0xf]
  %v78 = vld [vmem:[%s0 + $0xb4] sm:$0xf]
  %v79 = vld [vmem:[%s0 + $0xb8] sm:$0xf]
  %v80 = vld [vmem:[%s0 + $0xbc] sm:$0xf]
  %v81 = vld [vmem:[%s0 + $0xc0] sm:$0xf]
  %v82 = vld [vmem:[%s0 + $0xc4] sm:$0xf]
  %v83 = vld [vmem:[%s0 + $0xc8] sm:$0xf]
  %v84 = vld [vmem:[%s0 + $0xcc] sm:$0xf]
  %v85 = vld [vmem:[%s0 + $0xd0] sm:$0xf]
  %v86 = vld [vmem:[%s0 + $0xd4] sm:$0xf]
  %v87 = vld [vmem:[%s0 + $0xd8] sm:$0xf]
  %v88 = vld [vmem:[%s0 + $0xdc] sm:$0xf]
  %v89 = vld [vmem:[%s0 + $0xe0] sm:$0xf]
  %v90 = vld [vmem:[%s0 + $0xe4] sm:$0xf]
  %v91 = vld [vmem:[%s0 + $0xe8] sm:$0xf]
  %v92 = vld [vmem:[%s0 + $0xec] sm:$0xf]
  %v93 = vld [vmem:[%s0 + $0xf0] sm:$0xf]
  %v94 = vld [vmem:[%s0 + $0xf4] sm:$0xf]
  %v95 = vld [vmem:[%s0 + $0xf8] sm:$0xf]
  %v96 = vld [vmem:[%s0 + $0xfc] sm:$0xf]
  %v97 = vld [vmem:[%s1] sm:$0xff]
  %v98 = vld [vmem:[%s1 + $0x20] sm:$0xff]
  %v99 = vld [vmem:[%s1 + $0x40] sm:$0xff]
  %v100 = vld [vmem:[%s1 + $0x60] sm:$0xff]
  %v101 = vld [vmem:[%s1 + $0x80] sm:$0x33]
  %v102 = vld [vmem:[%s2] sm:$0x3]
  %v104 = vlaneseq
  %v105 = vshrl.u32 %v104, 7
  %v106 = vsub.s32 0, %v105
  %v107 = vrot.slane %v102, %v106
  %v108 = vlaneseq
  %v109 = vshrl.u32 %v108, 7
  %v110 = vsub.s32 1, %v109
  %v111 = vrot.slane %v102, %v110
  %v178 = vunpack.c.l.b16 %v33
  %v179 = vunpack.c.l.b16 %v34
  %v180 = vunpack.c.l.b16 %v35
  %v181 = vunpack.c.l.b16 %v36
  %v182 = vunpack.c.l.b16 %v37
  %v183 = vunpack.c.l.b16 %v38
  %v184 = vunpack.c.l.b16 %v39
  %v185 = vunpack.c.l.b16 %v40
  %v186 = vunpack.c.l.b16 %v41
  %v187 = vunpack.c.l.b16 %v42
  %v188 = vunpack.c.l.b16 %v43
  %v189 = vunpack.c.l.b16 %v44
  %v190 = vunpack.c.l.b16 %v45
  %v191 = vunpack.c.l.b16 %v46
  %v192 = vunpack.c.l.b16 %v47
  %v193 = vunpack.c.l.b16 %v48
  %v194 = vunpack.c.l.b16 %v49
  %v195 = vunpack.c.l.b16 %v50
  %v196 = vunpack.c.l.b16 %v51
  %v197 = vunpack.c.l.b16 %v52
  %v198 = vunpack.c.l.b16 %v53
  %v199 = vunpack.c.l.b16 %v54
  %v200 = vunpack.c.l.b16 %v55
  %v201 = vunpack.c.l.b16 %v56
  %v202 = vunpack.c.l.b16 %v57
  %v203 = vunpack.c.l.b16 %v58
  %v204 = vunpack.c.l.b16 %v59
  %v205 = vunpack.c.l.b16 %v60
  %v206 = vunpack.c.l.b16 %v61
  %v207 = vunpack.c.l.b16 %v62
  %v208 = vunpack.c.l.b16 %v63
  %v209 = vunpack.c.l.b16 %v64
  %v210 = vunpack.c.l.b16 %v65
  %v211 = vunpack.c.l.b16 %v66
  %v212 = vunpack.c.l.b16 %v67
  %v213 = vunpack.c.l.b16 %v68
  %v214 = vunpack.c.l.b16 %v69
  %v215 = vunpack.c.l.b16 %v70
  %v216 = vunpack.c.l.b16 %v71
  %v217 = vunpack.c.l.b16 %v72
  %v218 = vunpack.c.l.b16 %v73
  %v219 = vunpack.c.l.b16 %v74
  %v220 = vunpack.c.l.b16 %v75
  %v221 = vunpack.c.l.b16 %v76
  %v222 = vunpack.c.l.b16 %v77
  %v223 = vunpack.c.l.b16 %v78
  %v224 = vunpack.c.l.b16 %v79
  %v225 = vunpack.c.l.b16 %v80
  %v226 = vunpack.c.l.b16 %v81
  %v227 = vunpack.c.l.b16 %v82
  %v228 = vunpack.c.l.b16 %v83
  %v229 = vunpack.c.l.b16 %v84
  %v230 = vunpack.c.l.b16 %v85
  %v231 = vunpack.c.l.b16 %v86
  %v232 = vunpack.c.l.b16 %v87
  %v233 = vunpack.c.l.b16 %v88
  %v234 = vunpack.c.l.b16 %v89
  %v235 = vunpack.c.l.b16 %v90
  %v236 = vunpack.c.l.b16 %v91
  %v237 = vunpack.c.l.b16 %v92
  %v238 = vunpack.c.l.b16 %v93
  %v239 = vunpack.c.l.b16 %v94
  %v240 = vunpack.c.l.b16 %v95
  %v241 = vunpack.c.l.b16 %v96
  %v242 = vpack.c.b16 %v179, %v178
  %v243 = vpack.c.b16 %v181, %v180
  %v244 = vpack.c.b16 %v183, %v182
  %v245 = vpack.c.b16 %v185, %v184
  %v246 = vpack.c.b16 %v187, %v186
  %v247 = vpack.c.b16 %v189, %v188
  %v248 = vpack.c.b16 %v191, %v190
  %v249 = vpack.c.b16 %v193, %v192
  %v250 = vpack.c.b16 %v195, %v194
  %v251 = vpack.c.b16 %v197, %v196
  %v252 = vpack.c.b16 %v199, %v198
  %v253 = vpack.c.b16 %v201, %v200
  %v254 = vpack.c.b16 %v203, %v202
  %v255 = vpack.c.b16 %v205, %v204
  %v256 = vpack.c.b16 %v207, %v206
  %v257 = vpack.c.b16 %v209, %v208
  %v258 = vpack.c.b16 %v211, %v210
  %v259 = vpack.c.b16 %v213, %v212
  %v260 = vpack.c.b16 %v215, %v214
  %v261 = vpack.c.b16 %v217, %v216
  %v262 = vpack.c.b16 %v219, %v218
  %v263 = vpack.c.b16 %v221, %v220
  %v264 = vpack.c.b16 %v223, %v222
  %v265 = vpack.c.b16 %v225, %v224
  %v266 = vpack.c.b16 %v227, %v226
  %v267 = vpack.c.b16 %v229, %v228
  %v268 = vpack.c.b16 %v231, %v230
  %v269 = vpack.c.b16 %v233, %v232
  %v270 = vpack.c.b16 %v235, %v234
  %v271 = vpack.c.b16 %v237, %v236
  %v272 = vpack.c.b16 %v239, %v238
  %v273 = vpack.c.b16 %v241, %v240
  %v279 = vunpack.c.l.b16 %v97
  %v280 = vunpack.c.h.b16 %v97
  %v281 = vunpack.c.l.b16 %v98
  %v282 = vunpack.c.h.b16 %v98
  %v283 = vunpack.c.l.b16 %v99
  %v284 = vunpack.c.h.b16 %v99
  %v285 = vunpack.c.l.b16 %v100
  %v286 = vunpack.c.h.b16 %v100
  %v287 = vunpack.c.l.b16 %v101
  %v288 = vunpack.c.h.b16 %v101
  %v289 = vpack.c.b16 %v281, %v279
  %v290 = vpack.c.b16 %v282, %v280
  %v291 = vpack.c.b16 %v285, %v283
  %v292 = vpack.c.b16 %v286, %v284
  %v293 = vpack.c.b16 %v287, %v287
  %v294 = vpack.c.b16 %v288, %v288
  %vm299 = vcmask 293888
  %v301 = vsel %vm299, %v242, 0
  %v304 = vsel %vm299, %v243, 0
  %v307 = vsel %vm299, %v244, 0
  %v310 = vsel %vm299, %v245, 0
  %v313 = vsel %vm299, %v246, 0
  %v316 = vsel %vm299, %v247, 0
  %v319 = vsel %vm299, %v248, 0
  %v322 = vsel %vm299, %v249, 0
  %v325 = vsel %vm299, %v250, 0
  %v328 = vsel %vm299, %v251, 0
  %v331 = vsel %vm299, %v252, 0
  %v334 = vsel %vm299, %v253, 0
  %v337 = vsel %vm299, %v254, 0
  %v340 = vsel %vm299, %v255, 0
  %v343 = vsel %vm299, %v256, 0
  %v346 = vsel %vm299, %v257, 0
  %v349 = vsel %vm299, %v258, 0
  %v352 = vsel %vm299, %v259, 0
  %v355 = vsel %vm299, %v260, 0
  %v358 = vsel %vm299, %v261, 0
  %v361 = vsel %vm299, %v262, 0
  %v364 = vsel %vm299, %v263, 0
  %v367 = vsel %vm299, %v264, 0
  %v370 = vsel %vm299, %v265, 0
  %v373 = vsel %vm299, %v266, 0
  %v376 = vsel %vm299, %v267, 0
  %v379 = vsel %vm299, %v268, 0
  %v382 = vsel %vm299, %v269, 0
  %v385 = vsel %vm299, %v270, 0
  %v388 = vsel %vm299, %v271, 0
  %v391 = vsel %vm299, %v272, 0
  %v394 = vsel %vm299, %v273, 0
  %vm396 = vcmask 1041408
  %v398 = vsel %vm396, %v293, 0
  %v401 = vsel %vm396, %v294, 0
  %403 = vmatprep.subr.bf16.mxu0 0
  %404 = vmatpush1.bf16.msra.mxu0 0
  %405 = vmatprep.subr.bf16.mxu0 0
  %406 = vmatpush1.bf16.msra.mxu0 0
  %407 = vmatprep.subr.bf16.mxu0 0
  %408 = vmatpush1.bf16.msra.mxu0 0
  %409 = vmatprep.subr.bf16.mxu0 0
  %410 = vmatpush1.bf16.msra.mxu0 0
  %411 = vmatprep.subr.bf16.mxu0 0
  %412 = vmatpush1.bf16.msra.mxu0 0
  %413 = vmatprep.subr.bf16.mxu0 %v401
  %414 = vmatpush1.bf16.msra.mxu0 %v398
  %415 = vmatprep.subr.bf16.mxu0 %v292
  %416 = vmatpush1.bf16.msra.mxu0 %v291
  %417 = vmatprep.subr.bf16.mxu0 %v290
  %418 = vmatpush1.bf16.msra.mxu0 %v289
  %419 = vmatprep.subr.bf16.mxu0 0
  %420 = vmatpush2.bf16.msra.mxu0 0
  %421 = vmatprep.subr.bf16.mxu0 0
  %422 = vmatpush2.bf16.msra.mxu0 0
  %423 = vmatprep.subr.bf16.mxu0 0
  %424 = vmatpush2.bf16.msra.mxu0 0
  %425 = vmatprep.subr.bf16.mxu0 0
  %426 = vmatpush2.bf16.msra.mxu0 0
  %427 = vmatprep.subr.bf16.mxu0 0
  %428 = vmatpush2.bf16.msra.mxu0 0
  %429 = vmatprep.subr.bf16.mxu0 0
  %430 = vmatpush2.bf16.msra.mxu0 0
  %431 = vmatprep.subr.bf16.mxu0 0
  %432 = vmatpush2.bf16.msra.mxu0 0
  %433 = vmatprep.subr.bf16.mxu0 0
  %434 = vmatpush2.bf16.msra.mxu0 0
  %435 = vmatprep.mubr.bf16.mxu0 0
  %436 = vmatmul.mubr.bf16.gmra.mxu0 %v301
  %v437 = vpop.f32.mrf.mxu0
  %v438 = vadd.f32 %v107, %v437
  %v439 = vpop.f32.mrf.mxu0
  %v440 = vadd.f32 %v111, %v439
  %v441 = vpop.f32.mrf.mxu0
  %v442 = vadd.f32 %v107, %v441
  %v443 = vpop.f32.mrf.mxu0
  %v444 = vadd.f32 %v111, %v443
  %445 = vmatprep.mubr.bf16.mxu0 0
  %446 = vmatmul.mubr.bf16.gmra.mxu0 %v304
  %v447 = vpop.f32.mrf.mxu0
  %v448 = vadd.f32 %v107, %v447
  %v449 = vpop.f32.mrf.mxu0
  %v450 = vadd.f32 %v111, %v449
  %v451 = vpop.f32.mrf.mxu0
  %v452 = vadd.f32 %v107, %v451
  %v453 = vpop.f32.mrf.mxu0
  %v454 = vadd.f32 %v111, %v453
  %455 = vmatprep.mubr.bf16.mxu0 0
  %456 = vmatmul.mubr.bf16.gmra.mxu0 %v307
  %v457 = vpop.f32.mrf.mxu0
  %v458 = vadd.f32 %v107, %v457
  %v459 = vpop.f32.mrf.mxu0
  %v460 = vadd.f32 %v111, %v459
  %v461 = vpop.f32.mrf.mxu0
  %v462 = vadd.f32 %v107, %v461
  %v463 = vpop.f32.mrf.mxu0
  %v464 = vadd.f32 %v111, %v463
  %465 = vmatprep.mubr.bf16.mxu0 0
  %466 = vmatmul.mubr.bf16.gmra.mxu0 %v310
  %v467 = vpop.f32.mrf.mxu0
  %v468 = vadd.f32 %v107, %v467
  %v469 = vpop.f32.mrf.mxu0
  %v470 = vadd.f32 %v111, %v469
  %v471 = vpop.f32.mrf.mxu0
  %v472 = vadd.f32 %v107, %v471
  %v473 = vpop.f32.mrf.mxu0
  %v474 = vadd.f32 %v111, %v473
  %475 = vmatprep.mubr.bf16.mxu0 0
  %476 = vmatmul.mubr.bf16.gmra.mxu0 %v313
  %v477 = vpop.f32.mrf.mxu0
  %v478 = vadd.f32 %v107, %v477
  %v479 = vpop.f32.mrf.mxu0
  %v480 = vadd.f32 %v111, %v479
  %v481 = vpop.f32.mrf.mxu0
  %v482 = vadd.f32 %v107, %v481
  %v483 = vpop.f32.mrf.mxu0
  %v484 = vadd.f32 %v111, %v483
  %485 = vmatprep.mubr.bf16.mxu0 0
  %486 = vmatmul.mubr.bf16.gmra.mxu0 %v316
  %v487 = vpop.f32.mrf.mxu0
  %v488 = vadd.f32 %v107, %v487
  %v489 = vpop.f32.mrf.mxu0
  %v490 = vadd.f32 %v111, %v489
  %v491 = vpop.f32.mrf.mxu0
  %v492 = vadd.f32 %v107, %v491
  %v493 = vpop.f32.mrf.mxu0
  %v494 = vadd.f32 %v111, %v493
  %495 = vmatprep.mubr.bf16.mxu0 0
  %496 = vmatmul.mubr.bf16.gmra.mxu0 %v319
  %v497 = vpop.f32.mrf.mxu0
  %v498 = vadd.f32 %v107, %v497
  %v499 = vpop.f32.mrf.mxu0
  %v500 = vadd.f32 %v111, %v499
  %v501 = vpop.f32.mrf.mxu0
  %v502 = vadd.f32 %v107, %v501
  %v503 = vpop.f32.mrf.mxu0
  %v504 = vadd.f32 %v111, %v503
  %505 = vmatprep.mubr.bf16.mxu0 0
  %506 = vmatmul.mubr.bf16.gmra.mxu0 %v322
  %v507 = vpop.f32.mrf.mxu0
  %v508 = vadd.f32 %v107, %v507
  %v509 = vpop.f32.mrf.mxu0
  %v510 = vadd.f32 %v111, %v509
  %v511 = vpop.f32.mrf.mxu0
  %v512 = vadd.f32 %v107, %v511
  %v513 = vpop.f32.mrf.mxu0
  %v514 = vadd.f32 %v111, %v513
  %515 = vmatprep.mubr.bf16.mxu0 0
  %516 = vmatmul.mubr.bf16.gmra.mxu0 %v325
  %v517 = vpop.f32.mrf.mxu0
  %v518 = vadd.f32 %v107, %v517
  %v519 = vpop.f32.mrf.mxu0
  %v520 = vadd.f32 %v111, %v519
  %v521 = vpop.f32.mrf.mxu0
  %v522 = vadd.f32 %v107, %v521
  %v523 = vpop.f32.mrf.mxu0
  %v524 = vadd.f32 %v111, %v523
  %525 = vmatprep.mubr.bf16.mxu0 0
  %526 = vmatmul.mubr.bf16.gmra.mxu0 %v328
  %v527 = vpop.f32.mrf.mxu0
  %v528 = vadd.f32 %v107, %v527
  %v529 = vpop.f32.mrf.mxu0
  %v530 = vadd.f32 %v111, %v529
  %v531 = vpop.f32.mrf.mxu0
  %v532 = vadd.f32 %v107, %v531
  %v533 = vpop.f32.mrf.mxu0
  %v534 = vadd.f32 %v111, %v533
  %535 = vmatprep.mubr.bf16.mxu0 0
  %536 = vmatmul.mubr.bf16.gmra.mxu0 %v331
  %v537 = vpop.f32.mrf.mxu0
  %v538 = vadd.f32 %v107, %v537
  %v539 = vpop.f32.mrf.mxu0
  %v540 = vadd.f32 %v111, %v539
  %v541 = vpop.f32.mrf.mxu0
  %v542 = vadd.f32 %v107, %v541
  %v543 = vpop.f32.mrf.mxu0
  %v544 = vadd.f32 %v111, %v543
  %545 = vmatprep.mubr.bf16.mxu0 0
  %546 = vmatmul.mubr.bf16.gmra.mxu0 %v334
  %v547 = vpop.f32.mrf.mxu0
  %v548 = vadd.f32 %v107, %v547
  %v549 = vpop.f32.mrf.mxu0
  %v550 = vadd.f32 %v111, %v549
  %v551 = vpop.f32.mrf.mxu0
  %v552 = vadd.f32 %v107, %v551
  %v553 = vpop.f32.mrf.mxu0
  %v554 = vadd.f32 %v111, %v553
  %555 = vmatprep.mubr.bf16.mxu0 0
  %556 = vmatmul.mubr.bf16.gmra.mxu0 %v337
  %v557 = vpop.f32.mrf.mxu0
  %v558 = vadd.f32 %v107, %v557
  %v559 = vpop.f32.mrf.mxu0
  %v560 = vadd.f32 %v111, %v559
  %v561 = vpop.f32.mrf.mxu0
  %v562 = vadd.f32 %v107, %v561
  %v563 = vpop.f32.mrf.mxu0
  %v564 = vadd.f32 %v111, %v563
  %565 = vmatprep.mubr.bf16.mxu0 0
  %566 = vmatmul.mubr.bf16.gmra.mxu0 %v340
  %v567 = vpop.f32.mrf.mxu0
  %v568 = vadd.f32 %v107, %v567
  %v569 = vpop.f32.mrf.mxu0
  %v570 = vadd.f32 %v111, %v569
  %v571 = vpop.f32.mrf.mxu0
  %v572 = vadd.f32 %v107, %v571
  %v573 = vpop.f32.mrf.mxu0
  %v574 = vadd.f32 %v111, %v573
  %575 = vmatprep.mubr.bf16.mxu0 0
  %576 = vmatmul.mubr.bf16.gmra.mxu0 %v343
  %v577 = vpop.f32.mrf.mxu0
  %v578 = vadd.f32 %v107, %v577
  %v579 = vpop.f32.mrf.mxu0
  %v580 = vadd.f32 %v111, %v579
  %v581 = vpop.f32.mrf.mxu0
  %v582 = vadd.f32 %v107, %v581
  %v583 = vpop.f32.mrf.mxu0
  %v584 = vadd.f32 %v111, %v583
  %585 = vmatprep.mubr.bf16.mxu0 0
  %586 = vmatmul.mubr.bf16.gmra.mxu0 %v346
  %v587 = vpop.f32.mrf.mxu0
  %v588 = vadd.f32 %v107, %v587
  %v589 = vpop.f32.mrf.mxu0
  %v590 = vadd.f32 %v111, %v589
  %v591 = vpop.f32.mrf.mxu0
  %v592 = vadd.f32 %v107, %v591
  %v593 = vpop.f32.mrf.mxu0
  %v594 = vadd.f32 %v111, %v593
  %595 = vmatprep.mubr.bf16.mxu0 0
  %596 = vmatmul.mubr.bf16.gmra.mxu0 %v349
  %v597 = vpop.f32.mrf.mxu0
  %v598 = vadd.f32 %v107, %v597
  %v599 = vpop.f32.mrf.mxu0
  %v600 = vadd.f32 %v111, %v599
  %v601 = vpop.f32.mrf.mxu0
  %v602 = vadd.f32 %v107, %v601
  %v603 = vpop.f32.mrf.mxu0
  %v604 = vadd.f32 %v111, %v603
  %605 = vmatprep.mubr.bf16.mxu0 0
  %606 = vmatmul.mubr.bf16.gmra.mxu0 %v352
  %v607 = vpop.f32.mrf.mxu0
  %v608 = vadd.f32 %v107, %v607
  %v609 = vpop.f32.mrf.mxu0
  %v610 = vadd.f32 %v111, %v609
  %v611 = vpop.f32.mrf.mxu0
  %v612 = vadd.f32 %v107, %v611
  %v613 = vpop.f32.mrf.mxu0
  %v614 = vadd.f32 %v111, %v613
  %615 = vmatprep.mubr.bf16.mxu0 0
  %616 = vmatmul.mubr.bf16.gmra.mxu0 %v355
  %v617 = vpop.f32.mrf.mxu0
  %v618 = vadd.f32 %v107, %v617
  %v619 = vpop.f32.mrf.mxu0
  %v620 = vadd.f32 %v111, %v619
  %v621 = vpop.f32.mrf.mxu0
  %v622 = vadd.f32 %v107, %v621
  %v623 = vpop.f32.mrf.mxu0
  %v624 = vadd.f32 %v111, %v623
  %625 = vmatprep.mubr.bf16.mxu0 0
  %626 = vmatmul.mubr.bf16.gmra.mxu0 %v358
  %v627 = vpop.f32.mrf.mxu0
  %v628 = vadd.f32 %v107, %v627
  %v629 = vpop.f32.mrf.mxu0
  %v630 = vadd.f32 %v111, %v629
  %v631 = vpop.f32.mrf.mxu0
  %v632 = vadd.f32 %v107, %v631
  %v633 = vpop.f32.mrf.mxu0
  %v634 = vadd.f32 %v111, %v633
  %635 = vmatprep.mubr.bf16.mxu0 0
  %636 = vmatmul.mubr.bf16.gmra.mxu0 %v361
  %v637 = vpop.f32.mrf.mxu0
  %v638 = vadd.f32 %v107, %v637
  %v639 = vpop.f32.mrf.mxu0
  %v640 = vadd.f32 %v111, %v639
  %v641 = vpop.f32.mrf.mxu0
  %v642 = vadd.f32 %v107, %v641
  %v643 = vpop.f32.mrf.mxu0
  %v644 = vadd.f32 %v111, %v643
  %645 = vmatprep.mubr.bf16.mxu0 0
  %646 = vmatmul.mubr.bf16.gmra.mxu0 %v364
  %v647 = vpop.f32.mrf.mxu0
  %v648 = vadd.f32 %v107, %v647
  %v649 = vpop.f32.mrf.mxu0
  %v650 = vadd.f32 %v111, %v649
  %v651 = vpop.f32.mrf.mxu0
  %v652 = vadd.f32 %v107, %v651
  %v653 = vpop.f32.mrf.mxu0
  %v654 = vadd.f32 %v111, %v653
  %655 = vmatprep.mubr.bf16.mxu0 0
  %656 = vmatmul.mubr.bf16.gmra.mxu0 %v367
  %v657 = vpop.f32.mrf.mxu0
  %v658 = vadd.f32 %v107, %v657
  %v659 = vpop.f32.mrf.mxu0
  %v660 = vadd.f32 %v111, %v659
  %v661 = vpop.f32.mrf.mxu0
  %v662 = vadd.f32 %v107, %v661
  %v663 = vpop.f32.mrf.mxu0
  %v664 = vadd.f32 %v111, %v663
  %665 = vmatprep.mubr.bf16.mxu0 0
  %666 = vmatmul.mubr.bf16.gmra.mxu0 %v370
  %v667 = vpop.f32.mrf.mxu0
  %v668 = vadd.f32 %v107, %v667
  %v669 = vpop.f32.mrf.mxu0
  %v670 = vadd.f32 %v111, %v669
  %v671 = vpop.f32.mrf.mxu0
  %v672 = vadd.f32 %v107, %v671
  %v673 = vpop.f32.mrf.mxu0
  %v674 = vadd.f32 %v111, %v673
  %675 = vmatprep.mubr.bf16.mxu0 0
  %676 = vmatmul.mubr.bf16.gmra.mxu0 %v373
  %v677 = vpop.f32.mrf.mxu0
  %v678 = vadd.f32 %v107, %v677
  %v679 = vpop.f32.mrf.mxu0
  %v680 = vadd.f32 %v111, %v679
  %v681 = vpop.f32.mrf.mxu0
  %v682 = vadd.f32 %v107, %v681
  %v683 = vpop.f32.mrf.mxu0
  %v684 = vadd.f32 %v111, %v683
  %685 = vmatprep.mubr.bf16.mxu0 0
  %686 = vmatmul.mubr.bf16.gmra.mxu0 %v376
  %v687 = vpop.f32.mrf.mxu0
  %v688 = vadd.f32 %v107, %v687
  %v689 = vpop.f32.mrf.mxu0
  %v690 = vadd.f32 %v111, %v689
  %v691 = vpop.f32.mrf.mxu0
  %v692 = vadd.f32 %v107, %v691
  %v693 = vpop.f32.mrf.mxu0
  %v694 = vadd.f32 %v111, %v693
  %695 = vmatprep.mubr.bf16.mxu0 0
  %696 = vmatmul.mubr.bf16.gmra.mxu0 %v379
  %v697 = vpop.f32.mrf.mxu0
  %v698 = vadd.f32 %v107, %v697
  %v699 = vpop.f32.mrf.mxu0
  %v700 = vadd.f32 %v111, %v699
  %v701 = vpop.f32.mrf.mxu0
  %v702 = vadd.f32 %v107, %v701
  %v703 = vpop.f32.mrf.mxu0
  %v704 = vadd.f32 %v111, %v703
  %705 = vmatprep.mubr.bf16.mxu0 0
  %706 = vmatmul.mubr.bf16.gmra.mxu0 %v382
  %v707 = vpop.f32.mrf.mxu0
  %v708 = vadd.f32 %v107, %v707
  %v709 = vpop.f32.mrf.mxu0
  %v710 = vadd.f32 %v111, %v709
  %v711 = vpop.f32.mrf.mxu0
  %v712 = vadd.f32 %v107, %v711
  %v713 = vpop.f32.mrf.mxu0
  %v714 = vadd.f32 %v111, %v713
  %715 = vmatprep.mubr.bf16.mxu0 0
  %716 = vmatmul.mubr.bf16.gmra.mxu0 %v385
  %v717 = vpop.f32.mrf.mxu0
  %v718 = vadd.f32 %v107, %v717
  %v719 = vpop.f32.mrf.mxu0
  %v720 = vadd.f32 %v111, %v719
  %v721 = vpop.f32.mrf.mxu0
  %v722 = vadd.f32 %v107, %v721
  %v723 = vpop.f32.mrf.mxu0
  %v724 = vadd.f32 %v111, %v723
  %725 = vmatprep.mubr.bf16.mxu0 0
  %726 = vmatmul.mubr.bf16.gmra.mxu0 %v388
  %v727 = vpop.f32.mrf.mxu0
  %v728 = vadd.f32 %v107, %v727
  %v729 = vpop.f32.mrf.mxu0
  %v730 = vadd.f32 %v111, %v729
  %v731 = vpop.f32.mrf.mxu0
  %v732 = vadd.f32 %v107, %v731
  %v733 = vpop.f32.mrf.mxu0
  %v734 = vadd.f32 %v111, %v733
  %735 = vmatprep.mubr.bf16.mxu0 0
  %736 = vmatmul.mubr.bf16.gmra.mxu0 %v391
  %v737 = vpop.f32.mrf.mxu0
  %v738 = vadd.f32 %v107, %v737
  %v739 = vpop.f32.mrf.mxu0
  %v740 = vadd.f32 %v111, %v739
  %v741 = vpop.f32.mrf.mxu0
  %v742 = vadd.f32 %v107, %v741
  %v743 = vpop.f32.mrf.mxu0
  %v744 = vadd.f32 %v111, %v743
  %745 = vmatprep.mubr.bf16.mxu0 0
  %746 = vmatmul.mubr.bf16.gmra.mxu0 %v394
  %v747 = vpop.f32.mrf.mxu0
  %v748 = vadd.f32 %v107, %v747
  %v749 = vpop.f32.mrf.mxu0
  %v750 = vadd.f32 %v111, %v749
  %v751 = vpop.f32.mrf.mxu0
  %v752 = vadd.f32 %v107, %v751
  %v753 = vpop.f32.mrf.mxu0
  %v754 = vadd.f32 %v111, %v753
  %755 = vdwg.mxu0
  %v756 = vmax.f32 %v438, 0.0
  %v757 = vmax.f32 %v440, 0.0
  %v758 = vmax.f32 %v442, 0.0
  %v759 = vmax.f32 %v444, 0.0
  %v760 = vmax.f32 %v448, 0.0
  %v761 = vmax.f32 %v450, 0.0
  %v762 = vmax.f32 %v452, 0.0
  %v763 = vmax.f32 %v454, 0.0
  %v764 = vmax.f32 %v458, 0.0
  %v765 = vmax.f32 %v460, 0.0
  %v766 = vmax.f32 %v462, 0.0
  %v767 = vmax.f32 %v464, 0.0
  %v768 = vmax.f32 %v468, 0.0
  %v769 = vmax.f32 %v470, 0.0
  %v770 = vmax.f32 %v472, 0.0
  %v771 = vmax.f32 %v474, 0.0
  %v772 = vmax.f32 %v478, 0.0
  %v773 = vmax.f32 %v480, 0.0
  %v774 = vmax.f32 %v482, 0.0
  %v775 = vmax.f32 %v484, 0.0
  %v776 = vmax.f32 %v488, 0.0
  %v777 = vmax.f32 %v490, 0.0
  %v778 = vmax.f32 %v492, 0.0
  %v779 = vmax.f32 %v494, 0.0
  %v780 = vmax.f32 %v498, 0.0
  %v781 = vmax.f32 %v500, 0.0
  %v782 = vmax.f32 %v502, 0.0
  %v783 = vmax.f32 %v504, 0.0
  %v784 = vmax.f32 %v508, 0.0
  %v785 = vmax.f32 %v510, 0.0
  %v786 = vmax.f32 %v512, 0.0
  %v787 = vmax.f32 %v514, 0.0
  %v788 = vmax.f32 %v518, 0.0
  %v789 = vmax.f32 %v520, 0.0
  %v790 = vmax.f32 %v522, 0.0
  %v791 = vmax.f32 %v524, 0.0
  %v792 = vmax.f32 %v528, 0.0
  %v793 = vmax.f32 %v530, 0.0
  %v794 = vmax.f32 %v532, 0.0
  %v795 = vmax.f32 %v534, 0.0
  %v796 = vmax.f32 %v538, 0.0
  %v797 = vmax.f32 %v540, 0.0
  %v798 = vmax.f32 %v542, 0.0
  %v799 = vmax.f32 %v544, 0.0
  %v800 = vmax.f32 %v548, 0.0
  %v801 = vmax.f32 %v550, 0.0
  %v802 = vmax.f32 %v552, 0.0
  %v803 = vmax.f32 %v554, 0.0
  %v804 = vmax.f32 %v558, 0.0
  %v805 = vmax.f32 %v560, 0.0
  %v806 = vmax.f32 %v562, 0.0
  %v807 = vmax.f32 %v564, 0.0
  %v808 = vmax.f32 %v568, 0.0
  %v809 = vmax.f32 %v570, 0.0
  %v810 = vmax.f32 %v572, 0.0
  %v811 = vmax.f32 %v574, 0.0
  %v812 = vmax.f32 %v578, 0.0
  %v813 = vmax.f32 %v580, 0.0
  %v814 = vmax.f32 %v582, 0.0
  %v815 = vmax.f32 %v584, 0.0
  %v816 = vmax.f32 %v588, 0.0
  %v817 = vmax.f32 %v590, 0.0
  %v818 = vmax.f32 %v592, 0.0
  %v819 = vmax.f32 %v594, 0.0
  %v820 = vmax.f32 %v598, 0.0
  %v821 = vmax.f32 %v600, 0.0
  %v822 = vmax.f32 %v602, 0.0
  %v823 = vmax.f32 %v604, 0.0
  %v824 = vmax.f32 %v608, 0.0
  %v825 = vmax.f32 %v610, 0.0
  %v826 = vmax.f32 %v612, 0.0
  %v827 = vmax.f32 %v614, 0.0
  %v828 = vmax.f32 %v618, 0.0
  %v829 = vmax.f32 %v620, 0.0
  %v830 = vmax.f32 %v622, 0.0
  %v831 = vmax.f32 %v624, 0.0
  %v832 = vmax.f32 %v628, 0.0
  %v833 = vmax.f32 %v630, 0.0
  %v834 = vmax.f32 %v632, 0.0
  %v835 = vmax.f32 %v634, 0.0
  %v836 = vmax.f32 %v638, 0.0
  %v837 = vmax.f32 %v640, 0.0
  %v838 = vmax.f32 %v642, 0.0
  %v839 = vmax.f32 %v644, 0.0
  %v840 = vmax.f32 %v648, 0.0
  %v841 = vmax.f32 %v650, 0.0
  %v842 = vmax.f32 %v652, 0.0
  %v843 = vmax.f32 %v654, 0.0
  %v844 = vmax.f32 %v658, 0.0
  %v845 = vmax.f32 %v660, 0.0
  %v846 = vmax.f32 %v662, 0.0
  %v847 = vmax.f32 %v664, 0.0
  %v848 = vmax.f32 %v668, 0.0
  %v849 = vmax.f32 %v670, 0.0
  %v850 = vmax.f32 %v672, 0.0
  %v851 = vmax.f32 %v674, 0.0
  %v852 = vmax.f32 %v678, 0.0
  %v853 = vmax.f32 %v680, 0.0
  %v854 = vmax.f32 %v682, 0.0
  %v855 = vmax.f32 %v684, 0.0
  %v856 = vmax.f32 %v688, 0.0
  %v857 = vmax.f32 %v690, 0.0
  %v858 = vmax.f32 %v692, 0.0
  %v859 = vmax.f32 %v694, 0.0
  %v860 = vmax.f32 %v698, 0.0
  %v861 = vmax.f32 %v700, 0.0
  %v862 = vmax.f32 %v702, 0.0
  %v863 = vmax.f32 %v704, 0.0
  %v864 = vmax.f32 %v708, 0.0
  %v865 = vmax.f32 %v710, 0.0
  %v866 = vmax.f32 %v712, 0.0
  %v867 = vmax.f32 %v714, 0.0
  %v868 = vmax.f32 %v718, 0.0
  %v869 = vmax.f32 %v720, 0.0
  %v870 = vmax.f32 %v722, 0.0
  %v871 = vmax.f32 %v724, 0.0
  %v872 = vmax.f32 %v728, 0.0
  %v873 = vmax.f32 %v730, 0.0
  %v874 = vmax.f32 %v732, 0.0
  %v875 = vmax.f32 %v734, 0.0
  %v876 = vmax.f32 %v738, 0.0
  %v877 = vmax.f32 %v740, 0.0
  %v878 = vmax.f32 %v742, 0.0
  %v879 = vmax.f32 %v744, 0.0
  %v880 = vmax.f32 %v748, 0.0
  %v881 = vmax.f32 %v750, 0.0
  %v882 = vmax.f32 %v752, 0.0
  %v883 = vmax.f32 %v754, 0.0
  %v884 = vadd.f32 %v756, %v758
  %v885 = vadd.f32 %v884, %v760
  %v886 = vadd.f32 %v885, %v762
  %v887 = vadd.f32 %v886, %v764
  %v888 = vadd.f32 %v887, %v766
  %v889 = vadd.f32 %v888, %v768
  %v890 = vadd.f32 %v889, %v770
  %v891 = vadd.f32 %v890, %v772
  %v892 = vadd.f32 %v891, %v774
  %v893 = vadd.f32 %v892, %v776
  %v894 = vadd.f32 %v893, %v778
  %v895 = vadd.f32 %v894, %v780
  %v896 = vadd.f32 %v895, %v782
  %v897 = vadd.f32 %v896, %v784
  %v898 = vadd.f32 %v897, %v786
  %v899 = vadd.f32 %v898, %v788
  %v900 = vadd.f32 %v899, %v790
  %v901 = vadd.f32 %v900, %v792
  %v902 = vadd.f32 %v901, %v794
  %v903 = vadd.f32 %v902, %v796
  %v904 = vadd.f32 %v903, %v798
  %v905 = vadd.f32 %v904, %v800
  %v906 = vadd.f32 %v905, %v802
  %v907 = vadd.f32 %v906, %v804
  %v908 = vadd.f32 %v907, %v806
  %v909 = vadd.f32 %v908, %v808
  %v910 = vadd.f32 %v909, %v810
  %v911 = vadd.f32 %v910, %v812
  %v912 = vadd.f32 %v911, %v814
  %v913 = vadd.f32 %v912, %v816
  %v914 = vadd.f32 %v913, %v818
  %v915 = vrot.slane %v914, 4
  %v916 = vadd.f32 %v914, %v915
  %v917 = vrot.slane %v916, 2
  %v918 = vadd.f32 %v916, %v917
  %v919 = vrot.slane %v918, 1
  %v920 = vadd.f32 %v918, %v919
  %v921 = vadd.f32 %v757, %v759
  %v922 = vadd.f32 %v921, %v761
  %v923 = vadd.f32 %v922, %v763
  %v924 = vadd.f32 %v923, %v765
  %v925 = vadd.f32 %v924, %v767
  %v926 = vadd.f32 %v925, %v769
  %v927 = vadd.f32 %v926, %v771
  %v928 = vadd.f32 %v927, %v773
  %v929 = vadd.f32 %v928, %v775
  %v930 = vadd.f32 %v929, %v777
  %v931 = vadd.f32 %v930, %v779
  %v932 = vadd.f32 %v931, %v781
  %v933 = vadd.f32 %v932, %v783
  %v934 = vadd.f32 %v933, %v785
  %v935 = vadd.f32 %v934, %v787
  %v936 = vadd.f32 %v935, %v789
  %v937 = vadd.f32 %v936, %v791
  %v938 = vadd.f32 %v937, %v793
  %v939 = vadd.f32 %v938, %v795
  %v940 = vadd.f32 %v939, %v797
  %v941 = vadd.f32 %v940, %v799
  %v942 = vadd.f32 %v941, %v801
  %v943 = vadd.f32 %v942, %v803
  %v944 = vadd.f32 %v943, %v805
  %v945 = vadd.f32 %v944, %v807
  %v946 = vadd.f32 %v945, %v809
  %v947 = vadd.f32 %v946, %v811
  %v948 = vadd.f32 %v947, %v813
  %v949 = vadd.f32 %v948, %v815
  %v950 = vadd.f32 %v949, %v817
  %v951 = vadd.f32 %v950, %v819
  %v952 = vrot.slane %v951, 4
  %v953 = vadd.f32 %v951, %v952
  %v954 = vrot.slane %v953, 2
  %v955 = vadd.f32 %v953, %v954
  %v956 = vrot.slane %v955, 1
  %v957 = vadd.f32 %v955, %v956
  %v958 = vadd.f32 %v820, %v822
  %v959 = vadd.f32 %v958, %v824
  %v960 = vadd.f32 %v959, %v826
  %v961 = vadd.f32 %v960, %v828
  %v962 = vadd.f32 %v961, %v830
  %v963 = vadd.f32 %v962, %v832
  %v964 = vadd.f32 %v963, %v834
  %v965 = vadd.f32 %v964, %v836
  %v966 = vadd.f32 %v965, %v838
  %v967 = vadd.f32 %v966, %v840
  %v968 = vadd.f32 %v967, %v842
  %v969 = vadd.f32 %v968, %v844
  %v970 = vadd.f32 %v969, %v846
  %v971 = vadd.f32 %v970, %v848
  %v972 = vadd.f32 %v971, %v850
  %v973 = vadd.f32 %v972, %v852
  %v974 = vadd.f32 %v973, %v854
  %v975 = vadd.f32 %v974, %v856
  %v976 = vadd.f32 %v975, %v858
  %v977 = vadd.f32 %v976, %v860
  %v978 = vadd.f32 %v977, %v862
  %v979 = vadd.f32 %v978, %v864
  %v980 = vadd.f32 %v979, %v866
  %v981 = vadd.f32 %v980, %v868
  %v982 = vadd.f32 %v981, %v870
  %v983 = vadd.f32 %v982, %v872
  %v984 = vadd.f32 %v983, %v874
  %v985 = vadd.f32 %v984, %v876
  %v986 = vadd.f32 %v985, %v878
  %v987 = vadd.f32 %v986, %v880
  %v988 = vadd.f32 %v987, %v882
  %v989 = vrot.slane %v988, 4
  %v990 = vadd.f32 %v988, %v989
  %v991 = vrot.slane %v990, 2
  %v992 = vadd.f32 %v990, %v991
  %v993 = vrot.slane %v992, 1
  %v994 = vadd.f32 %v992, %v993
  %v995 = vadd.f32 %v821, %v823
  %v996 = vadd.f32 %v995, %v825
  %v997 = vadd.f32 %v996, %v827
  %v998 = vadd.f32 %v997, %v829
  %v999 = vadd.f32 %v998, %v831
  %v1000 = vadd.f32 %v999, %v833
  %v1001 = vadd.f32 %v1000, %v835
  %v1002 = vadd.f32 %v1001, %v837
  %v1003 = vadd.f32 %v1002, %v839
  %v1004 = vadd.f32 %v1003, %v841
  %v1005 = vadd.f32 %v1004, %v843
  %v1006 = vadd.f32 %v1005, %v845
  %v1007 = vadd.f32 %v1006, %v847
  %v1008 = vadd.f32 %v1007, %v849
  %v1009 = vadd.f32 %v1008, %v851
  %v1010 = vadd.f32 %v1009, %v853
  %v1011 = vadd.f32 %v1010, %v855
  %v1012 = vadd.f32 %v1011, %v857
  %v1013 = vadd.f32 %v1012, %v859
  %v1014 = vadd.f32 %v1013, %v861
  %v1015 = vadd.f32 %v1014, %v863
  %v1016 = vadd.f32 %v1015, %v865
  %v1017 = vadd.f32 %v1016, %v867
  %v1018 = vadd.f32 %v1017, %v869
  %v1019 = vadd.f32 %v1018, %v871
  %v1020 = vadd.f32 %v1019, %v873
  %v1021 = vadd.f32 %v1020, %v875
  %v1022 = vadd.f32 %v1021, %v877
  %v1023 = vadd.f32 %v1022, %v879
  %v1024 = vadd.f32 %v1023, %v881
  %v1025 = vadd.f32 %v1024, %v883
  %v1026 = vrot.slane %v1025, 4
  %v1027 = vadd.f32 %v1025, %v1026
  %v1028 = vrot.slane %v1027, 2
  %v1029 = vadd.f32 %v1027, %v1028
  %v1030 = vrot.slane %v1029, 1
  %v1031 = vadd.f32 %v1029, %v1030
  %v1032 = vld [vmem:[%s1 + $0x8] sm:$0xff]
  %v1033 = vld [vmem:[%s1 + $0x28] sm:$0xff]
  %v1034 = vld [vmem:[%s1 + $0x48] sm:$0xff]
  %v1035 = vld [vmem:[%s1 + $0x68] sm:$0xff]
  %v1036 = vld [vmem:[%s1 + $0x88] sm:$0x33]
  %v1037 = vld [vmem:[%s2 + $0x2] sm:$0x3]
  %v1039 = vlaneseq
  %v1040 = vshrl.u32 %v1039, 7
  %v1041 = vsub.s32 0, %v1040
  %v1042 = vrot.slane %v1037, %v1041
  %v1043 = vlaneseq
  %v1044 = vshrl.u32 %v1043, 7
  %v1045 = vsub.s32 1, %v1044
  %v1046 = vrot.slane %v1037, %v1045
  %v1054 = vunpack.c.l.b16 %v1032
  %v1055 = vunpack.c.h.b16 %v1032
  %v1056 = vunpack.c.l.b16 %v1033
  %v1057 = vunpack.c.h.b16 %v1033
  %v1058 = vunpack.c.l.b16 %v1034
  %v1059 = vunpack.c.h.b16 %v1034
  %v1060 = vunpack.c.l.b16 %v1035
  %v1061 = vunpack.c.h.b16 %v1035
  %v1062 = vunpack.c.l.b16 %v1036
  %v1063 = vunpack.c.h.b16 %v1036
  %v1064 = vpack.c.b16 %v1056, %v1054
  %v1065 = vpack.c.b16 %v1057, %v1055
  %v1066 = vpack.c.b16 %v1060, %v1058
  %v1067 = vpack.c.b16 %v1061, %v1059
  %v1068 = vpack.c.b16 %v1062, %v1062
  %v1069 = vpack.c.b16 %v1063, %v1063
  %v1075 = vsel %vm396, %v1068, 0
  %v1078 = vsel %vm396, %v1069, 0
  %1080 = vmatprep.subr.bf16.mxu0 0
  %1081 = vmatpush1.bf16.msra.mxu0 0
  %1082 = vmatprep.subr.bf16.mxu0 0
  %1083 = vmatpush1.bf16.msra.mxu0 0
  %1084 = vmatprep.subr.bf16.mxu0 0
  %1085 = vmatpush1.bf16.msra.mxu0 0
  %1086 = vmatprep.subr.bf16.mxu0 0
  %1087 = vmatpush1.bf16.msra.mxu0 0
  %1088 = vmatprep.subr.bf16.mxu0 0
  %1089 = vmatpush1.bf16.msra.mxu0 0
  %1090 = vmatprep.subr.bf16.mxu0 %v1078
  %1091 = vmatpush1.bf16.msra.mxu0 %v1075
  %1092 = vmatprep.subr.bf16.mxu0 %v1067
  %1093 = vmatpush1.bf16.msra.mxu0 %v1066
  %1094 = vmatprep.subr.bf16.mxu0 %v1065
  %1095 = vmatpush1.bf16.msra.mxu0 %v1064
  %1096 = vmatprep.subr.bf16.mxu0 0
  %1097 = vmatpush2.bf16.msra.mxu0 0
  %1098 = vmatprep.subr.bf16.mxu0 0
  %1099 = vmatpush2.bf16.msra.mxu0 0
  %1100 = vmatprep.subr.bf16.mxu0 0
  %1101 = vmatpush2.bf16.msra.mxu0 0
  %1102 = vmatprep.subr.bf16.mxu0 0
  %1103 = vmatpush2.bf16.msra.mxu0 0
  %1104 = vmatprep.subr.bf16.mxu0 0
  %1105 = vmatpush2.bf16.msra.mxu0 0
  %1106 = vmatprep.subr.bf16.mxu0 0
  %1107 = vmatpush2.bf16.msra.mxu0 0
  %1108 = vmatprep.subr.bf16.mxu0 0
  %1109 = vmatpush2.bf16.msra.mxu0 0
  %1110 = vmatprep.subr.bf16.mxu0 0
  %1111 = vmatpush2.bf16.msra.mxu0 0
  %1112 = vmatprep.mubr.bf16.mxu0 0
  %1113 = vmatmul.mubr.bf16.gmra.mxu0 %v301
  %v1114 = vpop.f32.mrf.mxu0
  %v1115 = vadd.f32 %v1042, %v1114
  %v1116 = vpop.f32.mrf.mxu0
  %v1117 = vadd.f32 %v1046, %v1116
  %v1118 = vpop.f32.mrf.mxu0
  %v1119 = vadd.f32 %v1042, %v1118
  %v1120 = vpop.f32.mrf.mxu0
  %v1121 = vadd.f32 %v1046, %v1120
  %1122 = vmatprep.mubr.bf16.mxu0 0
  %1123 = vmatmul.mubr.bf16.gmra.mxu0 %v304
  %v1124 = vpop.f32.mrf.mxu0
  %v1125 = vadd.f32 %v1042, %v1124
  %v1126 = vpop.f32.mrf.mxu0
  %v1127 = vadd.f32 %v1046, %v1126
  %v1128 = vpop.f32.mrf.mxu0
  %v1129 = vadd.f32 %v1042, %v1128
  %v1130 = vpop.f32.mrf.mxu0
  %v1131 = vadd.f32 %v1046, %v1130
  %1132 = vmatprep.mubr.bf16.mxu0 0
  %1133 = vmatmul.mubr.bf16.gmra.mxu0 %v307
  %v1134 = vpop.f32.mrf.mxu0
  %v1135 = vadd.f32 %v1042, %v1134
  %v1136 = vpop.f32.mrf.mxu0
  %v1137 = vadd.f32 %v1046, %v1136
  %v1138 = vpop.f32.mrf.mxu0
  %v1139 = vadd.f32 %v1042, %v1138
  %v1140 = vpop.f32.mrf.mxu0
  %v1141 = vadd.f32 %v1046, %v1140
  %1142 = vmatprep.mubr.bf16.mxu0 0
  %1143 = vmatmul.mubr.bf16.gmra.mxu0 %v310
  %v1144 = vpop.f32.mrf.mxu0
  %v1145 = vadd.f32 %v1042, %v1144
  %v1146 = vpop.f32.mrf.mxu0
  %v1147 = vadd.f32 %v1046, %v1146
  %v1148 = vpop.f32.mrf.mxu0
  %v1149 = vadd.f32 %v1042, %v1148
  %v1150 = vpop.f32.mrf.mxu0
  %v1151 = vadd.f32 %v1046, %v1150
  %1152 = vmatprep.mubr.bf16.mxu0 0
  %1153 = vmatmul.mubr.bf16.gmra.mxu0 %v313
  %v1154 = vpop.f32.mrf.mxu0
  %v1155 = vadd.f32 %v1042, %v1154
  %v1156 = vpop.f32.mrf.mxu0
  %v1157 = vadd.f32 %v1046, %v1156
  %v1158 = vpop.f32.mrf.mxu0
  %v1159 = vadd.f32 %v1042, %v1158
  %v1160 = vpop.f32.mrf.mxu0
  %v1161 = vadd.f32 %v1046, %v1160
  %1162 = vmatprep.mubr.bf16.mxu0 0
  %1163 = vmatmul.mubr.bf16.gmra.mxu0 %v316
  %v1164 = vpop.f32.mrf.mxu0
  %v1165 = vadd.f32 %v1042, %v1164
  %v1166 = vpop.f32.mrf.mxu0
  %v1167 = vadd.f32 %v1046, %v1166
  %v1168 = vpop.f32.mrf.mxu0
  %v1169 = vadd.f32 %v1042, %v1168
  %v1170 = vpop.f32.mrf.mxu0
  %v1171 = vadd.f32 %v1046, %v1170
  %1172 = vmatprep.mubr.bf16.mxu0 0
  %1173 = vmatmul.mubr.bf16.gmra.mxu0 %v319
  %v1174 = vpop.f32.mrf.mxu0
  %v1175 = vadd.f32 %v1042, %v1174
  %v1176 = vpop.f32.mrf.mxu0
  %v1177 = vadd.f32 %v1046, %v1176
  %v1178 = vpop.f32.mrf.mxu0
  %v1179 = vadd.f32 %v1042, %v1178
  %v1180 = vpop.f32.mrf.mxu0
  %v1181 = vadd.f32 %v1046, %v1180
  %1182 = vmatprep.mubr.bf16.mxu0 0
  %1183 = vmatmul.mubr.bf16.gmra.mxu0 %v322
  %v1184 = vpop.f32.mrf.mxu0
  %v1185 = vadd.f32 %v1042, %v1184
  %v1186 = vpop.f32.mrf.mxu0
  %v1187 = vadd.f32 %v1046, %v1186
  %v1188 = vpop.f32.mrf.mxu0
  %v1189 = vadd.f32 %v1042, %v1188
  %v1190 = vpop.f32.mrf.mxu0
  %v1191 = vadd.f32 %v1046, %v1190
  %1192 = vmatprep.mubr.bf16.mxu0 0
  %1193 = vmatmul.mubr.bf16.gmra.mxu0 %v325
  %v1194 = vpop.f32.mrf.mxu0
  %v1195 = vadd.f32 %v1042, %v1194
  %v1196 = vpop.f32.mrf.mxu0
  %v1197 = vadd.f32 %v1046, %v1196
  %v1198 = vpop.f32.mrf.mxu0
  %v1199 = vadd.f32 %v1042, %v1198
  %v1200 = vpop.f32.mrf.mxu0
  %v1201 = vadd.f32 %v1046, %v1200
  %1202 = vmatprep.mubr.bf16.mxu0 0
  %1203 = vmatmul.mubr.bf16.gmra.mxu0 %v328
  %v1204 = vpop.f32.mrf.mxu0
  %v1205 = vadd.f32 %v1042, %v1204
  %v1206 = vpop.f32.mrf.mxu0
  %v1207 = vadd.f32 %v1046, %v1206
  %v1208 = vpop.f32.mrf.mxu0
  %v1209 = vadd.f32 %v1042, %v1208
  %v1210 = vpop.f32.mrf.mxu0
  %v1211 = vadd.f32 %v1046, %v1210
  %1212 = vmatprep.mubr.bf16.mxu0 0
  %1213 = vmatmul.mubr.bf16.gmra.mxu0 %v331
  %v1214 = vpop.f32.mrf.mxu0
  %v1215 = vadd.f32 %v1042, %v1214
  %v1216 = vpop.f32.mrf.mxu0
  %v1217 = vadd.f32 %v1046, %v1216
  %v1218 = vpop.f32.mrf.mxu0
  %v1219 = vadd.f32 %v1042, %v1218
  %v1220 = vpop.f32.mrf.mxu0
  %v1221 = vadd.f32 %v1046, %v1220
  %1222 = vmatprep.mubr.bf16.mxu0 0
  %1223 = vmatmul.mubr.bf16.gmra.mxu0 %v334
  %v1224 = vpop.f32.mrf.mxu0
  %v1225 = vadd.f32 %v1042, %v1224
  %v1226 = vpop.f32.mrf.mxu0
  %v1227 = vadd.f32 %v1046, %v1226
  %v1228 = vpop.f32.mrf.mxu0
  %v1229 = vadd.f32 %v1042, %v1228
  %v1230 = vpop.f32.mrf.mxu0
  %v1231 = vadd.f32 %v1046, %v1230
  %1232 = vmatprep.mubr.bf16.mxu0 0
  %1233 = vmatmul.mubr.bf16.gmra.mxu0 %v337
  %v1234 = vpop.f32.mrf.mxu0
  %v1235 = vadd.f32 %v1042, %v1234
  %v1236 = vpop.f32.mrf.mxu0
  %v1237 = vadd.f32 %v1046, %v1236
  %v1238 = vpop.f32.mrf.mxu0
  %v1239 = vadd.f32 %v1042, %v1238
  %v1240 = vpop.f32.mrf.mxu0
  %v1241 = vadd.f32 %v1046, %v1240
  %1242 = vmatprep.mubr.bf16.mxu0 0
  %1243 = vmatmul.mubr.bf16.gmra.mxu0 %v340
  %v1244 = vpop.f32.mrf.mxu0
  %v1245 = vadd.f32 %v1042, %v1244
  %v1246 = vpop.f32.mrf.mxu0
  %v1247 = vadd.f32 %v1046, %v1246
  %v1248 = vpop.f32.mrf.mxu0
  %v1249 = vadd.f32 %v1042, %v1248
  %v1250 = vpop.f32.mrf.mxu0
  %v1251 = vadd.f32 %v1046, %v1250
  %1252 = vmatprep.mubr.bf16.mxu0 0
  %1253 = vmatmul.mubr.bf16.gmra.mxu0 %v343
  %v1254 = vpop.f32.mrf.mxu0
  %v1255 = vadd.f32 %v1042, %v1254
  %v1256 = vpop.f32.mrf.mxu0
  %v1257 = vadd.f32 %v1046, %v1256
  %v1258 = vpop.f32.mrf.mxu0
  %v1259 = vadd.f32 %v1042, %v1258
  %v1260 = vpop.f32.mrf.mxu0
  %v1261 = vadd.f32 %v1046, %v1260
  %1262 = vmatprep.mubr.bf16.mxu0 0
  %1263 = vmatmul.mubr.bf16.gmra.mxu0 %v346
  %v1264 = vpop.f32.mrf.mxu0
  %v1265 = vadd.f32 %v1042, %v1264
  %v1266 = vpop.f32.mrf.mxu0
  %v1267 = vadd.f32 %v1046, %v1266
  %v1268 = vpop.f32.mrf.mxu0
  %v1269 = vadd.f32 %v1042, %v1268
  %v1270 = vpop.f32.mrf.mxu0
  %v1271 = vadd.f32 %v1046, %v1270
  %1272 = vmatprep.mubr.bf16.mxu0 0
  %1273 = vmatmul.mubr.bf16.gmra.mxu0 %v349
  %v1274 = vpop.f32.mrf.mxu0
  %v1275 = vadd.f32 %v1042, %v1274
  %v1276 = vpop.f32.mrf.mxu0
  %v1277 = vadd.f32 %v1046, %v1276
  %v1278 = vpop.f32.mrf.mxu0
  %v1279 = vadd.f32 %v1042, %v1278
  %v1280 = vpop.f32.mrf.mxu0
  %v1281 = vadd.f32 %v1046, %v1280
  %1282 = vmatprep.mubr.bf16.mxu0 0
  %1283 = vmatmul.mubr.bf16.gmra.mxu0 %v352
  %v1284 = vpop.f32.mrf.mxu0
  %v1285 = vadd.f32 %v1042, %v1284
  %v1286 = vpop.f32.mrf.mxu0
  %v1287 = vadd.f32 %v1046, %v1286
  %v1288 = vpop.f32.mrf.mxu0
  %v1289 = vadd.f32 %v1042, %v1288
  %v1290 = vpop.f32.mrf.mxu0
  %v1291 = vadd.f32 %v1046, %v1290
  %1292 = vmatprep.mubr.bf16.mxu0 0
  %1293 = vmatmul.mubr.bf16.gmra.mxu0 %v355
  %v1294 = vpop.f32.mrf.mxu0
  %v1295 = vadd.f32 %v1042, %v1294
  %v1296 = vpop.f32.mrf.mxu0
  %v1297 = vadd.f32 %v1046, %v1296
  %v1298 = vpop.f32.mrf.mxu0
  %v1299 = vadd.f32 %v1042, %v1298
  %v1300 = vpop.f32.mrf.mxu0
  %v1301 = vadd.f32 %v1046, %v1300
  %1302 = vmatprep.mubr.bf16.mxu0 0
  %1303 = vmatmul.mubr.bf16.gmra.mxu0 %v358
  %v1304 = vpop.f32.mrf.mxu0
  %v1305 = vadd.f32 %v1042, %v1304
  %v1306 = vpop.f32.mrf.mxu0
  %v1307 = vadd.f32 %v1046, %v1306
  %v1308 = vpop.f32.mrf.mxu0
  %v1309 = vadd.f32 %v1042, %v1308
  %v1310 = vpop.f32.mrf.mxu0
  %v1311 = vadd.f32 %v1046, %v1310
  %1312 = vmatprep.mubr.bf16.mxu0 0
  %1313 = vmatmul.mubr.bf16.gmra.mxu0 %v361
  %v1314 = vpop.f32.mrf.mxu0
  %v1315 = vadd.f32 %v1042, %v1314
  %v1316 = vpop.f32.mrf.mxu0
  %v1317 = vadd.f32 %v1046, %v1316
  %v1318 = vpop.f32.mrf.mxu0
  %v1319 = vadd.f32 %v1042, %v1318
  %v1320 = vpop.f32.mrf.mxu0
  %v1321 = vadd.f32 %v1046, %v1320
  %1322 = vmatprep.mubr.bf16.mxu0 0
  %1323 = vmatmul.mubr.bf16.gmra.mxu0 %v364
  %v1324 = vpop.f32.mrf.mxu0
  %v1325 = vadd.f32 %v1042, %v1324
  %v1326 = vpop.f32.mrf.mxu0
  %v1327 = vadd.f32 %v1046, %v1326
  %v1328 = vpop.f32.mrf.mxu0
  %v1329 = vadd.f32 %v1042, %v1328
  %v1330 = vpop.f32.mrf.mxu0
  %v1331 = vadd.f32 %v1046, %v1330
  %1332 = vmatprep.mubr.bf16.mxu0 0
  %1333 = vmatmul.mubr.bf16.gmra.mxu0 %v367
  %v1334 = vpop.f32.mrf.mxu0
  %v1335 = vadd.f32 %v1042, %v1334
  %v1336 = vpop.f32.mrf.mxu0
  %v1337 = vadd.f32 %v1046, %v1336
  %v1338 = vpop.f32.mrf.mxu0
  %v1339 = vadd.f32 %v1042, %v1338
  %v1340 = vpop.f32.mrf.mxu0
  %v1341 = vadd.f32 %v1046, %v1340
  %1342 = vmatprep.mubr.bf16.mxu0 0
  %1343 = vmatmul.mubr.bf16.gmra.mxu0 %v370
  %v1344 = vpop.f32.mrf.mxu0
  %v1345 = vadd.f32 %v1042, %v1344
  %v1346 = vpop.f32.mrf.mxu0
  %v1347 = vadd.f32 %v1046, %v1346
  %v1348 = vpop.f32.mrf.mxu0
  %v1349 = vadd.f32 %v1042, %v1348
  %v1350 = vpop.f32.mrf.mxu0
  %v1351 = vadd.f32 %v1046, %v1350
  %1352 = vmatprep.mubr.bf16.mxu0 0
  %1353 = vmatmul.mubr.bf16.gmra.mxu0 %v373
  %v1354 = vpop.f32.mrf.mxu0
  %v1355 = vadd.f32 %v1042, %v1354
  %v1356 = vpop.f32.mrf.mxu0
  %v1357 = vadd.f32 %v1046, %v1356
  %v1358 = vpop.f32.mrf.mxu0
  %v1359 = vadd.f32 %v1042, %v1358
  %v1360 = vpop.f32.mrf.mxu0
  %v1361 = vadd.f32 %v1046, %v1360
  %1362 = vmatprep.mubr.bf16.mxu0 0
  %1363 = vmatmul.mubr.bf16.gmra.mxu0 %v376
  %v1364 = vpop.f32.mrf.mxu0
  %v1365 = vadd.f32 %v1042, %v1364
  %v1366 = vpop.f32.mrf.mxu0
  %v1367 = vadd.f32 %v1046, %v1366
  %v1368 = vpop.f32.mrf.mxu0
  %v1369 = vadd.f32 %v1042, %v1368
  %v1370 = vpop.f32.mrf.mxu0
  %v1371 = vadd.f32 %v1046, %v1370
  %1372 = vmatprep.mubr.bf16.mxu0 0
  %1373 = vmatmul.mubr.bf16.gmra.mxu0 %v379
  %v1374 = vpop.f32.mrf.mxu0
  %v1375 = vadd.f32 %v1042, %v1374
  %v1376 = vpop.f32.mrf.mxu0
  %v1377 = vadd.f32 %v1046, %v1376
  %v1378 = vpop.f32.mrf.mxu0
  %v1379 = vadd.f32 %v1042, %v1378
  %v1380 = vpop.f32.mrf.mxu0
  %v1381 = vadd.f32 %v1046, %v1380
  %1382 = vmatprep.mubr.bf16.mxu0 0
  %1383 = vmatmul.mubr.bf16.gmra.mxu0 %v382
  %v1384 = vpop.f32.mrf.mxu0
  %v1385 = vadd.f32 %v1042, %v1384
  %v1386 = vpop.f32.mrf.mxu0
  %v1387 = vadd.f32 %v1046, %v1386
  %v1388 = vpop.f32.mrf.mxu0
  %v1389 = vadd.f32 %v1042, %v1388
  %v1390 = vpop.f32.mrf.mxu0
  %v1391 = vadd.f32 %v1046, %v1390
  %1392 = vmatprep.mubr.bf16.mxu0 0
  %1393 = vmatmul.mubr.bf16.gmra.mxu0 %v385
  %v1394 = vpop.f32.mrf.mxu0
  %v1395 = vadd.f32 %v1042, %v1394
  %v1396 = vpop.f32.mrf.mxu0
  %v1397 = vadd.f32 %v1046, %v1396
  %v1398 = vpop.f32.mrf.mxu0
  %v1399 = vadd.f32 %v1042, %v1398
  %v1400 = vpop.f32.mrf.mxu0
  %v1401 = vadd.f32 %v1046, %v1400
  %1402 = vmatprep.mubr.bf16.mxu0 0
  %1403 = vmatmul.mubr.bf16.gmra.mxu0 %v388
  %v1404 = vpop.f32.mrf.mxu0
  %v1405 = vadd.f32 %v1042, %v1404
  %v1406 = vpop.f32.mrf.mxu0
  %v1407 = vadd.f32 %v1046, %v1406
  %v1408 = vpop.f32.mrf.mxu0
  %v1409 = vadd.f32 %v1042, %v1408
  %v1410 = vpop.f32.mrf.mxu0
  %v1411 = vadd.f32 %v1046, %v1410
  %1412 = vmatprep.mubr.bf16.mxu0 0
  %1413 = vmatmul.mubr.bf16.gmra.mxu0 %v391
  %v1414 = vpop.f32.mrf.mxu0
  %v1415 = vadd.f32 %v1042, %v1414
  %v1416 = vpop.f32.mrf.mxu0
  %v1417 = vadd.f32 %v1046, %v1416
  %v1418 = vpop.f32.mrf.mxu0
  %v1419 = vadd.f32 %v1042, %v1418
  %v1420 = vpop.f32.mrf.mxu0
  %v1421 = vadd.f32 %v1046, %v1420
  %1422 = vmatprep.mubr.bf16.mxu0 0
  %1423 = vmatmul.mubr.bf16.gmra.mxu0 %v394
  %v1424 = vpop.f32.mrf.mxu0
  %v1425 = vadd.f32 %v1042, %v1424
  %v1426 = vpop.f32.mrf.mxu0
  %v1427 = vadd.f32 %v1046, %v1426
  %v1428 = vpop.f32.mrf.mxu0
  %v1429 = vadd.f32 %v1042, %v1428
  %v1430 = vpop.f32.mrf.mxu0
  %v1431 = vadd.f32 %v1046, %v1430
  %1432 = vdwg.mxu0
  %v1433 = vmax.f32 %v1115, 0.0
  %v1434 = vmax.f32 %v1117, 0.0
  %v1435 = vmax.f32 %v1119, 0.0
  %v1436 = vmax.f32 %v1121, 0.0
  %v1437 = vmax.f32 %v1125, 0.0
  %v1438 = vmax.f32 %v1127, 0.0
  %v1439 = vmax.f32 %v1129, 0.0
  %v1440 = vmax.f32 %v1131, 0.0
  %v1441 = vmax.f32 %v1135, 0.0
  %v1442 = vmax.f32 %v1137, 0.0
  %v1443 = vmax.f32 %v1139, 0.0
  %v1444 = vmax.f32 %v1141, 0.0
  %v1445 = vmax.f32 %v1145, 0.0
  %v1446 = vmax.f32 %v1147, 0.0
  %v1447 = vmax.f32 %v1149, 0.0
  %v1448 = vmax.f32 %v1151, 0.0
  %v1449 = vmax.f32 %v1155, 0.0
  %v1450 = vmax.f32 %v1157, 0.0
  %v1451 = vmax.f32 %v1159, 0.0
  %v1452 = vmax.f32 %v1161, 0.0
  %v1453 = vmax.f32 %v1165, 0.0
  %v1454 = vmax.f32 %v1167, 0.0
  %v1455 = vmax.f32 %v1169, 0.0
  %v1456 = vmax.f32 %v1171, 0.0
  %v1457 = vmax.f32 %v1175, 0.0
  %v1458 = vmax.f32 %v1177, 0.0
  %v1459 = vmax.f32 %v1179, 0.0
  %v1460 = vmax.f32 %v1181, 0.0
  %v1461 = vmax.f32 %v1185, 0.0
  %v1462 = vmax.f32 %v1187, 0.0
  %v1463 = vmax.f32 %v1189, 0.0
  %v1464 = vmax.f32 %v1191, 0.0
  %v1465 = vmax.f32 %v1195, 0.0
  %v1466 = vmax.f32 %v1197, 0.0
  %v1467 = vmax.f32 %v1199, 0.0
  %v1468 = vmax.f32 %v1201, 0.0
  %v1469 = vmax.f32 %v1205, 0.0
  %v1470 = vmax.f32 %v1207, 0.0
  %v1471 = vmax.f32 %v1209, 0.0
  %v1472 = vmax.f32 %v1211, 0.0
  %v1473 = vmax.f32 %v1215, 0.0
  %v1474 = vmax.f32 %v1217, 0.0
  %v1475 = vmax.f32 %v1219, 0.0
  %v1476 = vmax.f32 %v1221, 0.0
  %v1477 = vmax.f32 %v1225, 0.0
  %v1478 = vmax.f32 %v1227, 0.0
  %v1479 = vmax.f32 %v1229, 0.0
  %v1480 = vmax.f32 %v1231, 0.0
  %v1481 = vmax.f32 %v1235, 0.0
  %v1482 = vmax.f32 %v1237, 0.0
  %v1483 = vmax.f32 %v1239, 0.0
  %v1484 = vmax.f32 %v1241, 0.0
  %v1485 = vmax.f32 %v1245, 0.0
  %v1486 = vmax.f32 %v1247, 0.0
  %v1487 = vmax.f32 %v1249, 0.0
  %v1488 = vmax.f32 %v1251, 0.0
  %v1489 = vmax.f32 %v1255, 0.0
  %v1490 = vmax.f32 %v1257, 0.0
  %v1491 = vmax.f32 %v1259, 0.0
  %v1492 = vmax.f32 %v1261, 0.0
  %v1493 = vmax.f32 %v1265, 0.0
  %v1494 = vmax.f32 %v1267, 0.0
  %v1495 = vmax.f32 %v1269, 0.0
  %v1496 = vmax.f32 %v1271, 0.0
  %v1497 = vmax.f32 %v1275, 0.0
  %v1498 = vmax.f32 %v1277, 0.0
  %v1499 = vmax.f32 %v1279, 0.0
  %v1500 = vmax.f32 %v1281, 0.0
  %v1501 = vmax.f32 %v1285, 0.0
  %v1502 = vmax.f32 %v1287, 0.0
  %v1503 = vmax.f32 %v1289, 0.0
  %v1504 = vmax.f32 %v1291, 0.0
  %v1505 = vmax.f32 %v1295, 0.0
  %v1506 = vmax.f32 %v1297, 0.0
  %v1507 = vmax.f32 %v1299, 0.0
  %v1508 = vmax.f32 %v1301, 0.0
  %v1509 = vmax.f32 %v1305, 0.0
  %v1510 = vmax.f32 %v1307, 0.0
  %v1511 = vmax.f32 %v1309, 0.0
  %v1512 = vmax.f32 %v1311, 0.0
  %v1513 = vmax.f32 %v1315, 0.0
  %v1514 = vmax.f32 %v1317, 0.0
  %v1515 = vmax.f32 %v1319, 0.0
  %v1516 = vmax.f32 %v1321, 0.0
  %v1517 = vmax.f32 %v1325, 0.0
  %v1518 = vmax.f32 %v1327, 0.0
  %v1519 = vmax.f32 %v1329, 0.0
  %v1520 = vmax.f32 %v1331, 0.0
  %v1521 = vmax.f32 %v1335, 0.0
  %v1522 = vmax.f32 %v1337, 0.0
  %v1523 = vmax.f32 %v1339, 0.0
  %v1524 = vmax.f32 %v1341, 0.0
  %v1525 = vmax.f32 %v1345, 0.0
  %v1526 = vmax.f32 %v1347, 0.0
  %v1527 = vmax.f32 %v1349, 0.0
  %v1528 = vmax.f32 %v1351, 0.0
  %v1529 = vmax.f32 %v1355, 0.0
  %v1530 = vmax.f32 %v1357, 0.0
  %v1531 = vmax.f32 %v1359, 0.0
  %v1532 = vmax.f32 %v1361, 0.0
  %v1533 = vmax.f32 %v1365, 0.0
  %v1534 = vmax.f32 %v1367, 0.0
  %v1535 = vmax.f32 %v1369, 0.0
  %v1536 = vmax.f32 %v1371, 0.0
  %v1537 = vmax.f32 %v1375, 0.0
  %v1538 = vmax.f32 %v1377, 0.0
  %v1539 = vmax.f32 %v1379, 0.0
  %v1540 = vmax.f32 %v1381, 0.0
  %v1541 = vmax.f32 %v1385, 0.0
  %v1542 = vmax.f32 %v1387, 0.0
  %v1543 = vmax.f32 %v1389, 0.0
  %v1544 = vmax.f32 %v1391, 0.0
  %v1545 = vmax.f32 %v1395, 0.0
  %v1546 = vmax.f32 %v1397, 0.0
  %v1547 = vmax.f32 %v1399, 0.0
  %v1548 = vmax.f32 %v1401, 0.0
  %v1549 = vmax.f32 %v1405, 0.0
  %v1550 = vmax.f32 %v1407, 0.0
  %v1551 = vmax.f32 %v1409, 0.0
  %v1552 = vmax.f32 %v1411, 0.0
  %v1553 = vmax.f32 %v1415, 0.0
  %v1554 = vmax.f32 %v1417, 0.0
  %v1555 = vmax.f32 %v1419, 0.0
  %v1556 = vmax.f32 %v1421, 0.0
  %v1557 = vmax.f32 %v1425, 0.0
  %v1558 = vmax.f32 %v1427, 0.0
  %v1559 = vmax.f32 %v1429, 0.0
  %v1560 = vmax.f32 %v1431, 0.0
  %v1561 = vadd.f32 %v1433, %v1435
  %v1562 = vadd.f32 %v1561, %v1437
  %v1563 = vadd.f32 %v1562, %v1439
  %v1564 = vadd.f32 %v1563, %v1441
  %v1565 = vadd.f32 %v1564, %v1443
  %v1566 = vadd.f32 %v1565, %v1445
  %v1567 = vadd.f32 %v1566, %v1447
  %v1568 = vadd.f32 %v1567, %v1449
  %v1569 = vadd.f32 %v1568, %v1451
  %v1570 = vadd.f32 %v1569, %v1453
  %v1571 = vadd.f32 %v1570, %v1455
  %v1572 = vadd.f32 %v1571, %v1457
  %v1573 = vadd.f32 %v1572, %v1459
  %v1574 = vadd.f32 %v1573, %v1461
  %v1575 = vadd.f32 %v1574, %v1463
  %v1576 = vadd.f32 %v1575, %v1465
  %v1577 = vadd.f32 %v1576, %v1467
  %v1578 = vadd.f32 %v1577, %v1469
  %v1579 = vadd.f32 %v1578, %v1471
  %v1580 = vadd.f32 %v1579, %v1473
  %v1581 = vadd.f32 %v1580, %v1475
  %v1582 = vadd.f32 %v1581, %v1477
  %v1583 = vadd.f32 %v1582, %v1479
  %v1584 = vadd.f32 %v1583, %v1481
  %v1585 = vadd.f32 %v1584, %v1483
  %v1586 = vadd.f32 %v1585, %v1485
  %v1587 = vadd.f32 %v1586, %v1487
  %v1588 = vadd.f32 %v1587, %v1489
  %v1589 = vadd.f32 %v1588, %v1491
  %v1590 = vadd.f32 %v1589, %v1493
  %v1591 = vadd.f32 %v1590, %v1495
  %v1592 = vrot.slane %v1591, 4
  %v1593 = vadd.f32 %v1591, %v1592
  %v1594 = vrot.slane %v1593, 2
  %v1595 = vadd.f32 %v1593, %v1594
  %v1596 = vrot.slane %v1595, 1
  %v1597 = vadd.f32 %v1595, %v1596
  %v1598 = vadd.f32 %v1434, %v1436
  %v1599 = vadd.f32 %v1598, %v1438
  %v1600 = vadd.f32 %v1599, %v1440
  %v1601 = vadd.f32 %v1600, %v1442
  %v1602 = vadd.f32 %v1601, %v1444
  %v1603 = vadd.f32 %v1602, %v1446
  %v1604 = vadd.f32 %v1603, %v1448
  %v1605 = vadd.f32 %v1604, %v1450
  %v1606 = vadd.f32 %v1605, %v1452
  %v1607 = vadd.f32 %v1606, %v1454
  %v1608 = vadd.f32 %v1607, %v1456
  %v1609 = vadd.f32 %v1608, %v1458
  %v1610 = vadd.f32 %v1609, %v1460
  %v1611 = vadd.f32 %v1610, %v1462
  %v1612 = vadd.f32 %v1611, %v1464
  %v1613 = vadd.f32 %v1612, %v1466
  %v1614 = vadd.f32 %v1613, %v1468
  %v1615 = vadd.f32 %v1614, %v1470
  %v1616 = vadd.f32 %v1615, %v1472
  %v1617 = vadd.f32 %v1616, %v1474
  %v1618 = vadd.f32 %v1617, %v1476
  %v1619 = vadd.f32 %v1618, %v1478
  %v1620 = vadd.f32 %v1619, %v1480
  %v1621 = vadd.f32 %v1620, %v1482
  %v1622 = vadd.f32 %v1621, %v1484
  %v1623 = vadd.f32 %v1622, %v1486
  %v1624 = vadd.f32 %v1623, %v1488
  %v1625 = vadd.f32 %v1624, %v1490
  %v1626 = vadd.f32 %v1625, %v1492
  %v1627 = vadd.f32 %v1626, %v1494
  %v1628 = vadd.f32 %v1627, %v1496
  %v1629 = vrot.slane %v1628, 4
  %v1630 = vadd.f32 %v1628, %v1629
  %v1631 = vrot.slane %v1630, 2
  %v1632 = vadd.f32 %v1630, %v1631
  %v1633 = vrot.slane %v1632, 1
  %v1634 = vadd.f32 %v1632, %v1633
  %v1635 = vadd.f32 %v1497, %v1499
  %v1636 = vadd.f32 %v1635, %v1501
  %v1637 = vadd.f32 %v1636, %v1503
  %v1638 = vadd.f32 %v1637, %v1505
  %v1639 = vadd.f32 %v1638, %v1507
  %v1640 = vadd.f32 %v1639, %v1509
  %v1641 = vadd.f32 %v1640, %v1511
  %v1642 = vadd.f32 %v1641, %v1513
  %v1643 = vadd.f32 %v1642, %v1515
  %v1644 = vadd.f32 %v1643, %v1517
  %v1645 = vadd.f32 %v1644, %v1519
  %v1646 = vadd.f32 %v1645, %v1521
  %v1647 = vadd.f32 %v1646, %v1523
  %v1648 = vadd.f32 %v1647, %v1525
  %v1649 = vadd.f32 %v1648, %v1527
  %v1650 = vadd.f32 %v1649, %v1529
  %v1651 = vadd.f32 %v1650, %v1531
  %v1652 = vadd.f32 %v1651, %v1533
  %v1653 = vadd.f32 %v1652, %v1535
  %v1654 = vadd.f32 %v1653, %v1537
  %v1655 = vadd.f32 %v1654, %v1539
  %v1656 = vadd.f32 %v1655, %v1541
  %v1657 = vadd.f32 %v1656, %v1543
  %v1658 = vadd.f32 %v1657, %v1545
  %v1659 = vadd.f32 %v1658, %v1547
  %v1660 = vadd.f32 %v1659, %v1549
  %v1661 = vadd.f32 %v1660, %v1551
  %v1662 = vadd.f32 %v1661, %v1553
  %v1663 = vadd.f32 %v1662, %v1555
  %v1664 = vadd.f32 %v1663, %v1557
  %v1665 = vadd.f32 %v1664, %v1559
  %v1666 = vrot.slane %v1665, 4
  %v1667 = vadd.f32 %v1665, %v1666
  %v1668 = vrot.slane %v1667, 2
  %v1669 = vadd.f32 %v1667, %v1668
  %v1670 = vrot.slane %v1669, 1
  %v1671 = vadd.f32 %v1669, %v1670
  %v1672 = vadd.f32 %v1498, %v1500
  %v1673 = vadd.f32 %v1672, %v1502
  %v1674 = vadd.f32 %v1673, %v1504
  %v1675 = vadd.f32 %v1674, %v1506
  %v1676 = vadd.f32 %v1675, %v1508
  %v1677 = vadd.f32 %v1676, %v1510
  %v1678 = vadd.f32 %v1677, %v1512
  %v1679 = vadd.f32 %v1678, %v1514
  %v1680 = vadd.f32 %v1679, %v1516
  %v1681 = vadd.f32 %v1680, %v1518
  %v1682 = vadd.f32 %v1681, %v1520
  %v1683 = vadd.f32 %v1682, %v1522
  %v1684 = vadd.f32 %v1683, %v1524
  %v1685 = vadd.f32 %v1684, %v1526
  %v1686 = vadd.f32 %v1685, %v1528
  %v1687 = vadd.f32 %v1686, %v1530
  %v1688 = vadd.f32 %v1687, %v1532
  %v1689 = vadd.f32 %v1688, %v1534
  %v1690 = vadd.f32 %v1689, %v1536
  %v1691 = vadd.f32 %v1690, %v1538
  %v1692 = vadd.f32 %v1691, %v1540
  %v1693 = vadd.f32 %v1692, %v1542
  %v1694 = vadd.f32 %v1693, %v1544
  %v1695 = vadd.f32 %v1694, %v1546
  %v1696 = vadd.f32 %v1695, %v1548
  %v1697 = vadd.f32 %v1696, %v1550
  %v1698 = vadd.f32 %v1697, %v1552
  %v1699 = vadd.f32 %v1698, %v1554
  %v1700 = vadd.f32 %v1699, %v1556
  %v1701 = vadd.f32 %v1700, %v1558
  %v1702 = vadd.f32 %v1701, %v1560
  %v1703 = vrot.slane %v1702, 4
  %v1704 = vadd.f32 %v1702, %v1703
  %v1705 = vrot.slane %v1704, 2
  %v1706 = vadd.f32 %v1704, %v1705
  %v1707 = vrot.slane %v1706, 1
  %v1708 = vadd.f32 %v1706, %v1707
  %v1709 = vld [vmem:[%s1 + $0x10] sm:$0xff]
  %v1710 = vld [vmem:[%s1 + $0x30] sm:$0xff]
  %v1711 = vld [vmem:[%s1 + $0x50] sm:$0xff]
  %v1712 = vld [vmem:[%s1 + $0x70] sm:$0xff]
  %v1713 = vld [vmem:[%s1 + $0x90] sm:$0x33]
  %v1714 = vld [vmem:[%s2 + $0x4] sm:$0x3]
  %v1716 = vlaneseq
  %v1717 = vshrl.u32 %v1716, 7
  %v1718 = vsub.s32 0, %v1717
  %v1719 = vrot.slane %v1714, %v1718
  %v1720 = vlaneseq
  %v1721 = vshrl.u32 %v1720, 7
  %v1722 = vsub.s32 1, %v1721
  %v1723 = vrot.slane %v1714, %v1722
  %v1731 = vunpack.c.l.b16 %v1709
  %v1732 = vunpack.c.h.b16 %v1709
  %v1733 = vunpack.c.l.b16 %v1710
  %v1734 = vunpack.c.h.b16 %v1710
  %v1735 = vunpack.c.l.b16 %v1711
  %v1736 = vunpack.c.h.b16 %v1711
  %v1737 = vunpack.c.l.b16 %v1712
  %v1738 = vunpack.c.h.b16 %v1712
  %v1739 = vunpack.c.l.b16 %v1713
  %v1740 = vunpack.c.h.b16 %v1713
  %v1741 = vpack.c.b16 %v1733, %v1731
  %v1742 = vpack.c.b16 %v1734, %v1732
  %v1743 = vpack.c.b16 %v1737, %v1735
  %v1744 = vpack.c.b16 %v1738, %v1736
  %v1745 = vpack.c.b16 %v1739, %v1739
  %v1746 = vpack.c.b16 %v1740, %v1740
  %v1752 = vsel %vm396, %v1745, 0
  %v1755 = vsel %vm396, %v1746, 0
  %1757 = vmatprep.subr.bf16.mxu0 0
  %1758 = vmatpush1.bf16.msra.mxu0 0
  %1759 = vmatprep.subr.bf16.mxu0 0
  %1760 = vmatpush1.bf16.msra.mxu0 0
  %1761 = vmatprep.subr.bf16.mxu0 0
  %1762 = vmatpush1.bf16.msra.mxu0 0
  %1763 = vmatprep.subr.bf16.mxu0 0
  %1764 = vmatpush1.bf16.msra.mxu0 0
  %1765 = vmatprep.subr.bf16.mxu0 0
  %1766 = vmatpush1.bf16.msra.mxu0 0
  %1767 = vmatprep.subr.bf16.mxu0 %v1755
  %1768 = vmatpush1.bf16.msra.mxu0 %v1752
  %1769 = vmatprep.subr.bf16.mxu0 %v1744
  %1770 = vmatpush1.bf16.msra.mxu0 %v1743
  %1771 = vmatprep.subr.bf16.mxu0 %v1742
  %1772 = vmatpush1.bf16.msra.mxu0 %v1741
  %1773 = vmatprep.subr.bf16.mxu0 0
  %1774 = vmatpush2.bf16.msra.mxu0 0
  %1775 = vmatprep.subr.bf16.mxu0 0
  %1776 = vmatpush2.bf16.msra.mxu0 0
  %1777 = vmatprep.subr.bf16.mxu0 0
  %1778 = vmatpush2.bf16.msra.mxu0 0
  %1779 = vmatprep.subr.bf16.mxu0 0
  %1780 = vmatpush2.bf16.msra.mxu0 0
  %1781 = vmatprep.subr.bf16.mxu0 0
  %1782 = vmatpush2.bf16.msra.mxu0 0
  %1783 = vmatprep.subr.bf16.mxu0 0
  %1784 = vmatpush2.bf16.msra.mxu0 0
  %1785 = vmatprep.subr.bf16.mxu0 0
  %1786 = vmatpush2.bf16.msra.mxu0 0
  %1787 = vmatprep.subr.bf16.mxu0 0
  %1788 = vmatpush2.bf16.msra.mxu0 0
  %1789 = vmatprep.mubr.bf16.mxu0 0
  %1790 = vmatmul.mubr.bf16.gmra.mxu0 %v301
  %v1791 = vpop.f32.mrf.mxu0
  %v1792 = vadd.f32 %v1719, %v1791
  %v1793 = vpop.f32.mrf.mxu0
  %v1794 = vadd.f32 %v1723, %v1793
  %v1795 = vpop.f32.mrf.mxu0
  %v1796 = vadd.f32 %v1719, %v1795
  %v1797 = vpop.f32.mrf.mxu0
  %v1798 = vadd.f32 %v1723, %v1797
  %1799 = vmatprep.mubr.bf16.mxu0 0
  %1800 = vmatmul.mubr.bf16.gmra.mxu0 %v304
  %v1801 = vpop.f32.mrf.mxu0
  %v1802 = vadd.f32 %v1719, %v1801
  %v1803 = vpop.f32.mrf.mxu0
  %v1804 = vadd.f32 %v1723, %v1803
  %v1805 = vpop.f32.mrf.mxu0
  %v1806 = vadd.f32 %v1719, %v1805
  %v1807 = vpop.f32.mrf.mxu0
  %v1808 = vadd.f32 %v1723, %v1807
  %1809 = vmatprep.mubr.bf16.mxu0 0
  %1810 = vmatmul.mubr.bf16.gmra.mxu0 %v307
  %v1811 = vpop.f32.mrf.mxu0
  %v1812 = vadd.f32 %v1719, %v1811
  %v1813 = vpop.f32.mrf.mxu0
  %v1814 = vadd.f32 %v1723, %v1813
  %v1815 = vpop.f32.mrf.mxu0
  %v1816 = vadd.f32 %v1719, %v1815
  %v1817 = vpop.f32.mrf.mxu0
  %v1818 = vadd.f32 %v1723, %v1817
  %1819 = vmatprep.mubr.bf16.mxu0 0
  %1820 = vmatmul.mubr.bf16.gmra.mxu0 %v310
  %v1821 = vpop.f32.mrf.mxu0
  %v1822 = vadd.f32 %v1719, %v1821
  %v1823 = vpop.f32.mrf.mxu0
  %v1824 = vadd.f32 %v1723, %v1823
  %v1825 = vpop.f32.mrf.mxu0
  %v1826 = vadd.f32 %v1719, %v1825
  %v1827 = vpop.f32.mrf.mxu0
  %v1828 = vadd.f32 %v1723, %v1827
  %1829 = vmatprep.mubr.bf16.mxu0 0
  %1830 = vmatmul.mubr.bf16.gmra.mxu0 %v313
  %v1831 = vpop.f32.mrf.mxu0
  %v1832 = vadd.f32 %v1719, %v1831
  %v1833 = vpop.f32.mrf.mxu0
  %v1834 = vadd.f32 %v1723, %v1833
  %v1835 = vpop.f32.mrf.mxu0
  %v1836 = vadd.f32 %v1719, %v1835
  %v1837 = vpop.f32.mrf.mxu0
  %v1838 = vadd.f32 %v1723, %v1837
  %1839 = vmatprep.mubr.bf16.mxu0 0
  %1840 = vmatmul.mubr.bf16.gmra.mxu0 %v316
  %v1841 = vpop.f32.mrf.mxu0
  %v1842 = vadd.f32 %v1719, %v1841
  %v1843 = vpop.f32.mrf.mxu0
  %v1844 = vadd.f32 %v1723, %v1843
  %v1845 = vpop.f32.mrf.mxu0
  %v1846 = vadd.f32 %v1719, %v1845
  %v1847 = vpop.f32.mrf.mxu0
  %v1848 = vadd.f32 %v1723, %v1847
  %1849 = vmatprep.mubr.bf16.mxu0 0
  %1850 = vmatmul.mubr.bf16.gmra.mxu0 %v319
  %v1851 = vpop.f32.mrf.mxu0
  %v1852 = vadd.f32 %v1719, %v1851
  %v1853 = vpop.f32.mrf.mxu0
  %v1854 = vadd.f32 %v1723, %v1853
  %v1855 = vpop.f32.mrf.mxu0
  %v1856 = vadd.f32 %v1719, %v1855
  %v1857 = vpop.f32.mrf.mxu0
  %v1858 = vadd.f32 %v1723, %v1857
  %1859 = vmatprep.mubr.bf16.mxu0 0
  %1860 = vmatmul.mubr.bf16.gmra.mxu0 %v322
  %v1861 = vpop.f32.mrf.mxu0
  %v1862 = vadd.f32 %v1719, %v1861
  %v1863 = vpop.f32.mrf.mxu0
  %v1864 = vadd.f32 %v1723, %v1863
  %v1865 = vpop.f32.mrf.mxu0
  %v1866 = vadd.f32 %v1719, %v1865
  %v1867 = vpop.f32.mrf.mxu0
  %v1868 = vadd.f32 %v1723, %v1867
  %1869 = vmatprep.mubr.bf16.mxu0 0
  %1870 = vmatmul.mubr.bf16.gmra.mxu0 %v325
  %v1871 = vpop.f32.mrf.mxu0
  %v1872 = vadd.f32 %v1719, %v1871
  %v1873 = vpop.f32.mrf.mxu0
  %v1874 = vadd.f32 %v1723, %v1873
  %v1875 = vpop.f32.mrf.mxu0
  %v1876 = vadd.f32 %v1719, %v1875
  %v1877 = vpop.f32.mrf.mxu0
  %v1878 = vadd.f32 %v1723, %v1877
  %1879 = vmatprep.mubr.bf16.mxu0 0
  %1880 = vmatmul.mubr.bf16.gmra.mxu0 %v328
  %v1881 = vpop.f32.mrf.mxu0
  %v1882 = vadd.f32 %v1719, %v1881
  %v1883 = vpop.f32.mrf.mxu0
  %v1884 = vadd.f32 %v1723, %v1883
  %v1885 = vpop.f32.mrf.mxu0
  %v1886 = vadd.f32 %v1719, %v1885
  %v1887 = vpop.f32.mrf.mxu0
  %v1888 = vadd.f32 %v1723, %v1887
  %1889 = vmatprep.mubr.bf16.mxu0 0
  %1890 = vmatmul.mubr.bf16.gmra.mxu0 %v331
  %v1891 = vpop.f32.mrf.mxu0
  %v1892 = vadd.f32 %v1719, %v1891
  %v1893 = vpop.f32.mrf.mxu0
  %v1894 = vadd.f32 %v1723, %v1893
  %v1895 = vpop.f32.mrf.mxu0
  %v1896 = vadd.f32 %v1719, %v1895
  %v1897 = vpop.f32.mrf.mxu0
  %v1898 = vadd.f32 %v1723, %v1897
  %1899 = vmatprep.mubr.bf16.mxu0 0
  %1900 = vmatmul.mubr.bf16.gmra.mxu0 %v334
  %v1901 = vpop.f32.mrf.mxu0
  %v1902 = vadd.f32 %v1719, %v1901
  %v1903 = vpop.f32.mrf.mxu0
  %v1904 = vadd.f32 %v1723, %v1903
  %v1905 = vpop.f32.mrf.mxu0
  %v1906 = vadd.f32 %v1719, %v1905
  %v1907 = vpop.f32.mrf.mxu0
  %v1908 = vadd.f32 %v1723, %v1907
  %1909 = vmatprep.mubr.bf16.mxu0 0
  %1910 = vmatmul.mubr.bf16.gmra.mxu0 %v337
  %v1911 = vpop.f32.mrf.mxu0
  %v1912 = vadd.f32 %v1719, %v1911
  %v1913 = vpop.f32.mrf.mxu0
  %v1914 = vadd.f32 %v1723, %v1913
  %v1915 = vpop.f32.mrf.mxu0
  %v1916 = vadd.f32 %v1719, %v1915
  %v1917 = vpop.f32.mrf.mxu0
  %v1918 = vadd.f32 %v1723, %v1917
  %1919 = vmatprep.mubr.bf16.mxu0 0
  %1920 = vmatmul.mubr.bf16.gmra.mxu0 %v340
  %v1921 = vpop.f32.mrf.mxu0
  %v1922 = vadd.f32 %v1719, %v1921
  %v1923 = vpop.f32.mrf.mxu0
  %v1924 = vadd.f32 %v1723, %v1923
  %v1925 = vpop.f32.mrf.mxu0
  %v1926 = vadd.f32 %v1719, %v1925
  %v1927 = vpop.f32.mrf.mxu0
  %v1928 = vadd.f32 %v1723, %v1927
  %1929 = vmatprep.mubr.bf16.mxu0 0
  %1930 = vmatmul.mubr.bf16.gmra.mxu0 %v343
  %v1931 = vpop.f32.mrf.mxu0
  %v1932 = vadd.f32 %v1719, %v1931
  %v1933 = vpop.f32.mrf.mxu0
  %v1934 = vadd.f32 %v1723, %v1933
  %v1935 = vpop.f32.mrf.mxu0
  %v1936 = vadd.f32 %v1719, %v1935
  %v1937 = vpop.f32.mrf.mxu0
  %v1938 = vadd.f32 %v1723, %v1937
  %1939 = vmatprep.mubr.bf16.mxu0 0
  %1940 = vmatmul.mubr.bf16.gmra.mxu0 %v346
  %v1941 = vpop.f32.mrf.mxu0
  %v1942 = vadd.f32 %v1719, %v1941
  %v1943 = vpop.f32.mrf.mxu0
  %v1944 = vadd.f32 %v1723, %v1943
  %v1945 = vpop.f32.mrf.mxu0
  %v1946 = vadd.f32 %v1719, %v1945
  %v1947 = vpop.f32.mrf.mxu0
  %v1948 = vadd.f32 %v1723, %v1947
  %1949 = vmatprep.mubr.bf16.mxu0 0
  %1950 = vmatmul.mubr.bf16.gmra.mxu0 %v349
  %v1951 = vpop.f32.mrf.mxu0
  %v1952 = vadd.f32 %v1719, %v1951
  %v1953 = vpop.f32.mrf.mxu0
  %v1954 = vadd.f32 %v1723, %v1953
  %v1955 = vpop.f32.mrf.mxu0
  %v1956 = vadd.f32 %v1719, %v1955
  %v1957 = vpop.f32.mrf.mxu0
  %v1958 = vadd.f32 %v1723, %v1957
  %1959 = vmatprep.mubr.bf16.mxu0 0
  %1960 = vmatmul.mubr.bf16.gmra.mxu0 %v352
  %v1961 = vpop.f32.mrf.mxu0
  %v1962 = vadd.f32 %v1719, %v1961
  %v1963 = vpop.f32.mrf.mxu0
  %v1964 = vadd.f32 %v1723, %v1963
  %v1965 = vpop.f32.mrf.mxu0
  %v1966 = vadd.f32 %v1719, %v1965
  %v1967 = vpop.f32.mrf.mxu0
  %v1968 = vadd.f32 %v1723, %v1967
  %1969 = vmatprep.mubr.bf16.mxu0 0
  %1970 = vmatmul.mubr.bf16.gmra.mxu0 %v355
  %v1971 = vpop.f32.mrf.mxu0
  %v1972 = vadd.f32 %v1719, %v1971
  %v1973 = vpop.f32.mrf.mxu0
  %v1974 = vadd.f32 %v1723, %v1973
  %v1975 = vpop.f32.mrf.mxu0
  %v1976 = vadd.f32 %v1719, %v1975
  %v1977 = vpop.f32.mrf.mxu0
  %v1978 = vadd.f32 %v1723, %v1977
  %1979 = vmatprep.mubr.bf16.mxu0 0
  %1980 = vmatmul.mubr.bf16.gmra.mxu0 %v358
  %v1981 = vpop.f32.mrf.mxu0
  %v1982 = vadd.f32 %v1719, %v1981
  %v1983 = vpop.f32.mrf.mxu0
  %v1984 = vadd.f32 %v1723, %v1983
  %v1985 = vpop.f32.mrf.mxu0
  %v1986 = vadd.f32 %v1719, %v1985
  %v1987 = vpop.f32.mrf.mxu0
  %v1988 = vadd.f32 %v1723, %v1987
  %1989 = vmatprep.mubr.bf16.mxu0 0
  %1990 = vmatmul.mubr.bf16.gmra.mxu0 %v361
  %v1991 = vpop.f32.mrf.mxu0
  %v1992 = vadd.f32 %v1719, %v1991
  %v1993 = vpop.f32.mrf.mxu0
  %v1994 = vadd.f32 %v1723, %v1993
  %v1995 = vpop.f32.mrf.mxu0
  %v1996 = vadd.f32 %v1719, %v1995
  %v1997 = vpop.f32.mrf.mxu0
  %v1998 = vadd.f32 %v1723, %v1997
  %1999 = vmatprep.mubr.bf16.mxu0 0
  %2000 = vmatmul.mubr.bf16.gmra.mxu0 %v364
  %v2001 = vpop.f32.mrf.mxu0
  %v2002 = vadd.f32 %v1719, %v2001
  %v2003 = vpop.f32.mrf.mxu0
  %v2004 = vadd.f32 %v1723, %v2003
  %v2005 = vpop.f32.mrf.mxu0
  %v2006 = vadd.f32 %v1719, %v2005
  %v2007 = vpop.f32.mrf.mxu0
  %v2008 = vadd.f32 %v1723, %v2007
  %2009 = vmatprep.mubr.bf16.mxu0 0
  %2010 = vmatmul.mubr.bf16.gmra.mxu0 %v367
  %v2011 = vpop.f32.mrf.mxu0
  %v2012 = vadd.f32 %v1719, %v2011
  %v2013 = vpop.f32.mrf.mxu0
  %v2014 = vadd.f32 %v1723, %v2013
  %v2015 = vpop.f32.mrf.mxu0
  %v2016 = vadd.f32 %v1719, %v2015
  %v2017 = vpop.f32.mrf.mxu0
  %v2018 = vadd.f32 %v1723, %v2017
  %2019 = vmatprep.mubr.bf16.mxu0 0
  %2020 = vmatmul.mubr.bf16.gmra.mxu0 %v370
  %v2021 = vpop.f32.mrf.mxu0
  %v2022 = vadd.f32 %v1719, %v2021
  %v2023 = vpop.f32.mrf.mxu0
  %v2024 = vadd.f32 %v1723, %v2023
  %v2025 = vpop.f32.mrf.mxu0
  %v2026 = vadd.f32 %v1719, %v2025
  %v2027 = vpop.f32.mrf.mxu0
  %v2028 = vadd.f32 %v1723, %v2027
  %2029 = vmatprep.mubr.bf16.mxu0 0
  %2030 = vmatmul.mubr.bf16.gmra.mxu0 %v373
  %v2031 = vpop.f32.mrf.mxu0
  %v2032 = vadd.f32 %v1719, %v2031
  %v2033 = vpop.f32.mrf.mxu0
  %v2034 = vadd.f32 %v1723, %v2033
  %v2035 = vpop.f32.mrf.mxu0
  %v2036 = vadd.f32 %v1719, %v2035
  %v2037 = vpop.f32.mrf.mxu0
  %v2038 = vadd.f32 %v1723, %v2037
  %2039 = vmatprep.mubr.bf16.mxu0 0
  %2040 = vmatmul.mubr.bf16.gmra.mxu0 %v376
  %v2041 = vpop.f32.mrf.mxu0
  %v2042 = vadd.f32 %v1719, %v2041
  %v2043 = vpop.f32.mrf.mxu0
  %v2044 = vadd.f32 %v1723, %v2043
  %v2045 = vpop.f32.mrf.mxu0
  %v2046 = vadd.f32 %v1719, %v2045
  %v2047 = vpop.f32.mrf.mxu0
  %v2048 = vadd.f32 %v1723, %v2047
  %2049 = vmatprep.mubr.bf16.mxu0 0
  %2050 = vmatmul.mubr.bf16.gmra.mxu0 %v379
  %v2051 = vpop.f32.mrf.mxu0
  %v2052 = vadd.f32 %v1719, %v2051
  %v2053 = vpop.f32.mrf.mxu0
  %v2054 = vadd.f32 %v1723, %v2053
  %v2055 = vpop.f32.mrf.mxu0
  %v2056 = vadd.f32 %v1719, %v2055
  %v2057 = vpop.f32.mrf.mxu0
  %v2058 = vadd.f32 %v1723, %v2057
  %2059 = vmatprep.mubr.bf16.mxu0 0
  %2060 = vmatmul.mubr.bf16.gmra.mxu0 %v382
  %v2061 = vpop.f32.mrf.mxu0
  %v2062 = vadd.f32 %v1719, %v2061
  %v2063 = vpop.f32.mrf.mxu0
  %v2064 = vadd.f32 %v1723, %v2063
  %v2065 = vpop.f32.mrf.mxu0
  %v2066 = vadd.f32 %v1719, %v2065
  %v2067 = vpop.f32.mrf.mxu0
  %v2068 = vadd.f32 %v1723, %v2067
  %2069 = vmatprep.mubr.bf16.mxu0 0
  %2070 = vmatmul.mubr.bf16.gmra.mxu0 %v385
  %v2071 = vpop.f32.mrf.mxu0
  %v2072 = vadd.f32 %v1719, %v2071
  %v2073 = vpop.f32.mrf.mxu0
  %v2074 = vadd.f32 %v1723, %v2073
  %v2075 = vpop.f32.mrf.mxu0
  %v2076 = vadd.f32 %v1719, %v2075
  %v2077 = vpop.f32.mrf.mxu0
  %v2078 = vadd.f32 %v1723, %v2077
  %2079 = vmatprep.mubr.bf16.mxu0 0
  %2080 = vmatmul.mubr.bf16.gmra.mxu0 %v388
  %v2081 = vpop.f32.mrf.mxu0
  %v2082 = vadd.f32 %v1719, %v2081
  %v2083 = vpop.f32.mrf.mxu0
  %v2084 = vadd.f32 %v1723, %v2083
  %v2085 = vpop.f32.mrf.mxu0
  %v2086 = vadd.f32 %v1719, %v2085
  %v2087 = vpop.f32.mrf.mxu0
  %v2088 = vadd.f32 %v1723, %v2087
  %2089 = vmatprep.mubr.bf16.mxu0 0
  %2090 = vmatmul.mubr.bf16.gmra.mxu0 %v391
  %v2091 = vpop.f32.mrf.mxu0
  %v2092 = vadd.f32 %v1719, %v2091
  %v2093 = vpop.f32.mrf.mxu0
  %v2094 = vadd.f32 %v1723, %v2093
  %v2095 = vpop.f32.mrf.mxu0
  %v2096 = vadd.f32 %v1719, %v2095
  %v2097 = vpop.f32.mrf.mxu0
  %v2098 = vadd.f32 %v1723, %v2097
  %2099 = vmatprep.mubr.bf16.mxu0 0
  %2100 = vmatmul.mubr.bf16.gmra.mxu0 %v394
  %v2101 = vpop.f32.mrf.mxu0
  %v2102 = vadd.f32 %v1719, %v2101
  %v2103 = vpop.f32.mrf.mxu0
  %v2104 = vadd.f32 %v1723, %v2103
  %v2105 = vpop.f32.mrf.mxu0
  %v2106 = vadd.f32 %v1719, %v2105
  %v2107 = vpop.f32.mrf.mxu0
  %v2108 = vadd.f32 %v1723, %v2107
  %2109 = vdwg.mxu0
  %v2110 = vmax.f32 %v1792, 0.0
  %v2111 = vmax.f32 %v1794, 0.0
  %v2112 = vmax.f32 %v1796, 0.0
  %v2113 = vmax.f32 %v1798, 0.0
  %v2114 = vmax.f32 %v1802, 0.0
  %v2115 = vmax.f32 %v1804, 0.0
  %v2116 = vmax.f32 %v1806, 0.0
  %v2117 = vmax.f32 %v1808, 0.0
  %v2118 = vmax.f32 %v1812, 0.0
  %v2119 = vmax.f32 %v1814, 0.0
  %v2120 = vmax.f32 %v1816, 0.0
  %v2121 = vmax.f32 %v1818, 0.0
  %v2122 = vmax.f32 %v1822, 0.0
  %v2123 = vmax.f32 %v1824, 0.0
  %v2124 = vmax.f32 %v1826, 0.0
  %v2125 = vmax.f32 %v1828, 0.0
  %v2126 = vmax.f32 %v1832, 0.0
  %v2127 = vmax.f32 %v1834, 0.0
  %v2128 = vmax.f32 %v1836, 0.0
  %v2129 = vmax.f32 %v1838, 0.0
  %v2130 = vmax.f32 %v1842, 0.0
  %v2131 = vmax.f32 %v1844, 0.0
  %v2132 = vmax.f32 %v1846, 0.0
  %v2133 = vmax.f32 %v1848, 0.0
  %v2134 = vmax.f32 %v1852, 0.0
  %v2135 = vmax.f32 %v1854, 0.0
  %v2136 = vmax.f32 %v1856, 0.0
  %v2137 = vmax.f32 %v1858, 0.0
  %v2138 = vmax.f32 %v1862, 0.0
  %v2139 = vmax.f32 %v1864, 0.0
  %v2140 = vmax.f32 %v1866, 0.0
  %v2141 = vmax.f32 %v1868, 0.0
  %v2142 = vmax.f32 %v1872, 0.0
  %v2143 = vmax.f32 %v1874, 0.0
  %v2144 = vmax.f32 %v1876, 0.0
  %v2145 = vmax.f32 %v1878, 0.0
  %v2146 = vmax.f32 %v1882, 0.0
  %v2147 = vmax.f32 %v1884, 0.0
  %v2148 = vmax.f32 %v1886, 0.0
  %v2149 = vmax.f32 %v1888, 0.0
  %v2150 = vmax.f32 %v1892, 0.0
  %v2151 = vmax.f32 %v1894, 0.0
  %v2152 = vmax.f32 %v1896, 0.0
  %v2153 = vmax.f32 %v1898, 0.0
  %v2154 = vmax.f32 %v1902, 0.0
  %v2155 = vmax.f32 %v1904, 0.0
  %v2156 = vmax.f32 %v1906, 0.0
  %v2157 = vmax.f32 %v1908, 0.0
  %v2158 = vmax.f32 %v1912, 0.0
  %v2159 = vmax.f32 %v1914, 0.0
  %v2160 = vmax.f32 %v1916, 0.0
  %v2161 = vmax.f32 %v1918, 0.0
  %v2162 = vmax.f32 %v1922, 0.0
  %v2163 = vmax.f32 %v1924, 0.0
  %v2164 = vmax.f32 %v1926, 0.0
  %v2165 = vmax.f32 %v1928, 0.0
  %v2166 = vmax.f32 %v1932, 0.0
  %v2167 = vmax.f32 %v1934, 0.0
  %v2168 = vmax.f32 %v1936, 0.0
  %v2169 = vmax.f32 %v1938, 0.0
  %v2170 = vmax.f32 %v1942, 0.0
  %v2171 = vmax.f32 %v1944, 0.0
  %v2172 = vmax.f32 %v1946, 0.0
  %v2173 = vmax.f32 %v1948, 0.0
  %v2174 = vmax.f32 %v1952, 0.0
  %v2175 = vmax.f32 %v1954, 0.0
  %v2176 = vmax.f32 %v1956, 0.0
  %v2177 = vmax.f32 %v1958, 0.0
  %v2178 = vmax.f32 %v1962, 0.0
  %v2179 = vmax.f32 %v1964, 0.0
  %v2180 = vmax.f32 %v1966, 0.0
  %v2181 = vmax.f32 %v1968, 0.0
  %v2182 = vmax.f32 %v1972, 0.0
  %v2183 = vmax.f32 %v1974, 0.0
  %v2184 = vmax.f32 %v1976, 0.0
  %v2185 = vmax.f32 %v1978, 0.0
  %v2186 = vmax.f32 %v1982, 0.0
  %v2187 = vmax.f32 %v1984, 0.0
  %v2188 = vmax.f32 %v1986, 0.0
  %v2189 = vmax.f32 %v1988, 0.0
  %v2190 = vmax.f32 %v1992, 0.0
  %v2191 = vmax.f32 %v1994, 0.0
  %v2192 = vmax.f32 %v1996, 0.0
  %v2193 = vmax.f32 %v1998, 0.0
  %v2194 = vmax.f32 %v2002, 0.0
  %v2195 = vmax.f32 %v2004, 0.0
  %v2196 = vmax.f32 %v2006, 0.0
  %v2197 = vmax.f32 %v2008, 0.0
  %v2198 = vmax.f32 %v2012, 0.0
  %v2199 = vmax.f32 %v2014, 0.0
  %v2200 = vmax.f32 %v2016, 0.0
  %v2201 = vmax.f32 %v2018, 0.0
  %v2202 = vmax.f32 %v2022, 0.0
  %v2203 = vmax.f32 %v2024, 0.0
  %v2204 = vmax.f32 %v2026, 0.0
  %v2205 = vmax.f32 %v2028, 0.0
  %v2206 = vmax.f32 %v2032, 0.0
  %v2207 = vmax.f32 %v2034, 0.0
  %v2208 = vmax.f32 %v2036, 0.0
  %v2209 = vmax.f32 %v2038, 0.0
  %v2210 = vmax.f32 %v2042, 0.0
  %v2211 = vmax.f32 %v2044, 0.0
  %v2212 = vmax.f32 %v2046, 0.0
  %v2213 = vmax.f32 %v2048, 0.0
  %v2214 = vmax.f32 %v2052, 0.0
  %v2215 = vmax.f32 %v2054, 0.0
  %v2216 = vmax.f32 %v2056, 0.0
  %v2217 = vmax.f32 %v2058, 0.0
  %v2218 = vmax.f32 %v2062, 0.0
  %v2219 = vmax.f32 %v2064, 0.0
  %v2220 = vmax.f32 %v2066, 0.0
  %v2221 = vmax.f32 %v2068, 0.0
  %v2222 = vmax.f32 %v2072, 0.0
  %v2223 = vmax.f32 %v2074, 0.0
  %v2224 = vmax.f32 %v2076, 0.0
  %v2225 = vmax.f32 %v2078, 0.0
  %v2226 = vmax.f32 %v2082, 0.0
  %v2227 = vmax.f32 %v2084, 0.0
  %v2228 = vmax.f32 %v2086, 0.0
  %v2229 = vmax.f32 %v2088, 0.0
  %v2230 = vmax.f32 %v2092, 0.0
  %v2231 = vmax.f32 %v2094, 0.0
  %v2232 = vmax.f32 %v2096, 0.0
  %v2233 = vmax.f32 %v2098, 0.0
  %v2234 = vmax.f32 %v2102, 0.0
  %v2235 = vmax.f32 %v2104, 0.0
  %v2236 = vmax.f32 %v2106, 0.0
  %v2237 = vmax.f32 %v2108, 0.0
  %v2238 = vadd.f32 %v2110, %v2112
  %v2239 = vadd.f32 %v2238, %v2114
  %v2240 = vadd.f32 %v2239, %v2116
  %v2241 = vadd.f32 %v2240, %v2118
  %v2242 = vadd.f32 %v2241, %v2120
  %v2243 = vadd.f32 %v2242, %v2122
  %v2244 = vadd.f32 %v2243, %v2124
  %v2245 = vadd.f32 %v2244, %v2126
  %v2246 = vadd.f32 %v2245, %v2128
  %v2247 = vadd.f32 %v2246, %v2130
  %v2248 = vadd.f32 %v2247, %v2132
  %v2249 = vadd.f32 %v2248, %v2134
  %v2250 = vadd.f32 %v2249, %v2136
  %v2251 = vadd.f32 %v2250, %v2138
  %v2252 = vadd.f32 %v2251, %v2140
  %v2253 = vadd.f32 %v2252, %v2142
  %v2254 = vadd.f32 %v2253, %v2144
  %v2255 = vadd.f32 %v2254, %v2146
  %v2256 = vadd.f32 %v2255, %v2148
  %v2257 = vadd.f32 %v2256, %v2150
  %v2258 = vadd.f32 %v2257, %v2152
  %v2259 = vadd.f32 %v2258, %v2154
  %v2260 = vadd.f32 %v2259, %v2156
  %v2261 = vadd.f32 %v2260, %v2158
  %v2262 = vadd.f32 %v2261, %v2160
  %v2263 = vadd.f32 %v2262, %v2162
  %v2264 = vadd.f32 %v2263, %v2164
  %v2265 = vadd.f32 %v2264, %v2166
  %v2266 = vadd.f32 %v2265, %v2168
  %v2267 = vadd.f32 %v2266, %v2170
  %v2268 = vadd.f32 %v2267, %v2172
  %v2269 = vrot.slane %v2268, 4
  %v2270 = vadd.f32 %v2268, %v2269
  %v2271 = vrot.slane %v2270, 2
  %v2272 = vadd.f32 %v2270, %v2271
  %v2273 = vrot.slane %v2272, 1
  %v2274 = vadd.f32 %v2272, %v2273
  %v2275 = vadd.f32 %v2111, %v2113
  %v2276 = vadd.f32 %v2275, %v2115
  %v2277 = vadd.f32 %v2276, %v2117
  %v2278 = vadd.f32 %v2277, %v2119
  %v2279 = vadd.f32 %v2278, %v2121
  %v2280 = vadd.f32 %v2279, %v2123
  %v2281 = vadd.f32 %v2280, %v2125
  %v2282 = vadd.f32 %v2281, %v2127
  %v2283 = vadd.f32 %v2282, %v2129
  %v2284 = vadd.f32 %v2283, %v2131
  %v2285 = vadd.f32 %v2284, %v2133
  %v2286 = vadd.f32 %v2285, %v2135
  %v2287 = vadd.f32 %v2286, %v2137
  %v2288 = vadd.f32 %v2287, %v2139
  %v2289 = vadd.f32 %v2288, %v2141
  %v2290 = vadd.f32 %v2289, %v2143
  %v2291 = vadd.f32 %v2290, %v2145
  %v2292 = vadd.f32 %v2291, %v2147
  %v2293 = vadd.f32 %v2292, %v2149
  %v2294 = vadd.f32 %v2293, %v2151
  %v2295 = vadd.f32 %v2294, %v2153
  %v2296 = vadd.f32 %v2295, %v2155
  %v2297 = vadd.f32 %v2296, %v2157
  %v2298 = vadd.f32 %v2297, %v2159
  %v2299 = vadd.f32 %v2298, %v2161
  %v2300 = vadd.f32 %v2299, %v2163
  %v2301 = vadd.f32 %v2300, %v2165
  %v2302 = vadd.f32 %v2301, %v2167
  %v2303 = vadd.f32 %v2302, %v2169
  %v2304 = vadd.f32 %v2303, %v2171
  %v2305 = vadd.f32 %v2304, %v2173
  %v2306 = vrot.slane %v2305, 4
  %v2307 = vadd.f32 %v2305, %v2306
  %v2308 = vrot.slane %v2307, 2
  %v2309 = vadd.f32 %v2307, %v2308
  %v2310 = vrot.slane %v2309, 1
  %v2311 = vadd.f32 %v2309, %v2310
  %v2312 = vadd.f32 %v2174, %v2176
  %v2313 = vadd.f32 %v2312, %v2178
  %v2314 = vadd.f32 %v2313, %v2180
  %v2315 = vadd.f32 %v2314, %v2182
  %v2316 = vadd.f32 %v2315, %v2184
  %v2317 = vadd.f32 %v2316, %v2186
  %v2318 = vadd.f32 %v2317, %v2188
  %v2319 = vadd.f32 %v2318, %v2190
  %v2320 = vadd.f32 %v2319, %v2192
  %v2321 = vadd.f32 %v2320, %v2194
  %v2322 = vadd.f32 %v2321, %v2196
  %v2323 = vadd.f32 %v2322, %v2198
  %v2324 = vadd.f32 %v2323, %v2200
  %v2325 = vadd.f32 %v2324, %v2202
  %v2326 = vadd.f32 %v2325, %v2204
  %v2327 = vadd.f32 %v2326, %v2206
  %v2328 = vadd.f32 %v2327, %v2208
  %v2329 = vadd.f32 %v2328, %v2210
  %v2330 = vadd.f32 %v2329, %v2212
  %v2331 = vadd.f32 %v2330, %v2214
  %v2332 = vadd.f32 %v2331, %v2216
  %v2333 = vadd.f32 %v2332, %v2218
  %v2334 = vadd.f32 %v2333, %v2220
  %v2335 = vadd.f32 %v2334, %v2222
  %v2336 = vadd.f32 %v2335, %v2224
  %v2337 = vadd.f32 %v2336, %v2226
  %v2338 = vadd.f32 %v2337, %v2228
  %v2339 = vadd.f32 %v2338, %v2230
  %v2340 = vadd.f32 %v2339, %v2232
  %v2341 = vadd.f32 %v2340, %v2234
  %v2342 = vadd.f32 %v2341, %v2236
  %v2343 = vrot.slane %v2342, 4
  %v2344 = vadd.f32 %v2342, %v2343
  %v2345 = vrot.slane %v2344, 2
  %v2346 = vadd.f32 %v2344, %v2345
  %v2347 = vrot.slane %v2346, 1
  %v2348 = vadd.f32 %v2346, %v2347
  %v2349 = vadd.f32 %v2175, %v2177
  %v2350 = vadd.f32 %v2349, %v2179
  %v2351 = vadd.f32 %v2350, %v2181
  %v2352 = vadd.f32 %v2351, %v2183
  %v2353 = vadd.f32 %v2352, %v2185
  %v2354 = vadd.f32 %v2353, %v2187
  %v2355 = vadd.f32 %v2354, %v2189
  %v2356 = vadd.f32 %v2355, %v2191
  %v2357 = vadd.f32 %v2356, %v2193
  %v2358 = vadd.f32 %v2357, %v2195
  %v2359 = vadd.f32 %v2358, %v2197
  %v2360 = vadd.f32 %v2359, %v2199
  %v2361 = vadd.f32 %v2360, %v2201
  %v2362 = vadd.f32 %v2361, %v2203
  %v2363 = vadd.f32 %v2362, %v2205
  %v2364 = vadd.f32 %v2363, %v2207
  %v2365 = vadd.f32 %v2364, %v2209
  %v2366 = vadd.f32 %v2365, %v2211
  %v2367 = vadd.f32 %v2366, %v2213
  %v2368 = vadd.f32 %v2367, %v2215
  %v2369 = vadd.f32 %v2368, %v2217
  %v2370 = vadd.f32 %v2369, %v2219
  %v2371 = vadd.f32 %v2370, %v2221
  %v2372 = vadd.f32 %v2371, %v2223
  %v2373 = vadd.f32 %v2372, %v2225
  %v2374 = vadd.f32 %v2373, %v2227
  %v2375 = vadd.f32 %v2374, %v2229
  %v2376 = vadd.f32 %v2375, %v2231
  %v2377 = vadd.f32 %v2376, %v2233
  %v2378 = vadd.f32 %v2377, %v2235
  %v2379 = vadd.f32 %v2378, %v2237
  %v2380 = vrot.slane %v2379, 4
  %v2381 = vadd.f32 %v2379, %v2380
  %v2382 = vrot.slane %v2381, 2
  %v2383 = vadd.f32 %v2381, %v2382
  %v2384 = vrot.slane %v2383, 1
  %v2385 = vadd.f32 %v2383, %v2384
  %v2386 = vld [vmem:[%s1 + $0x18] sm:$0xff]
  %v2387 = vld [vmem:[%s1 + $0x38] sm:$0xff]
  %v2388 = vld [vmem:[%s1 + $0x58] sm:$0xff]
  %v2389 = vld [vmem:[%s1 + $0x78] sm:$0xff]
  %v2390 = vld [vmem:[%s1 + $0x98] sm:$0x33]
  %v2391 = vld [vmem:[%s2 + $0x6] sm:$0x3]
  %v2393 = vlaneseq
  %v2394 = vshrl.u32 %v2393, 7
  %v2395 = vsub.s32 0, %v2394
  %v2396 = vrot.slane %v2391, %v2395
  %v2397 = vlaneseq
  %v2398 = vshrl.u32 %v2397, 7
  %v2399 = vsub.s32 1, %v2398
  %v2400 = vrot.slane %v2391, %v2399
  %v2408 = vunpack.c.l.b16 %v2386
  %v2409 = vunpack.c.h.b16 %v2386
  %v2410 = vunpack.c.l.b16 %v2387
  %v2411 = vunpack.c.h.b16 %v2387
  %v2412 = vunpack.c.l.b16 %v2388
  %v2413 = vunpack.c.h.b16 %v2388
  %v2414 = vunpack.c.l.b16 %v2389
  %v2415 = vunpack.c.h.b16 %v2389
  %v2416 = vunpack.c.l.b16 %v2390
  %v2417 = vunpack.c.h.b16 %v2390
  %v2418 = vpack.c.b16 %v2410, %v2408
  %v2419 = vpack.c.b16 %v2411, %v2409
  %v2420 = vpack.c.b16 %v2414, %v2412
  %v2421 = vpack.c.b16 %v2415, %v2413
  %v2422 = vpack.c.b16 %v2416, %v2416
  %v2423 = vpack.c.b16 %v2417, %v2417
  %v2429 = vsel %vm396, %v2422, 0
  %v2432 = vsel %vm396, %v2423, 0
  %2434 = vmatprep.subr.bf16.mxu0 0
  %2435 = vmatpush1.bf16.msra.mxu0 0
  %2436 = vmatprep.subr.bf16.mxu0 0
  %2437 = vmatpush1.bf16.msra.mxu0 0
  %2438 = vmatprep.subr.bf16.mxu0 0
  %2439 = vmatpush1.bf16.msra.mxu0 0
  %2440 = vmatprep.subr.bf16.mxu0 0
  %2441 = vmatpush1.bf16.msra.mxu0 0
  %2442 = vmatprep.subr.bf16.mxu0 0
  %2443 = vmatpush1.bf16.msra.mxu0 0
  %2444 = vmatprep.subr.bf16.mxu0 %v2432
  %2445 = vmatpush1.bf16.msra.mxu0 %v2429
  %2446 = vmatprep.subr.bf16.mxu0 %v2421
  %2447 = vmatpush1.bf16.msra.mxu0 %v2420
  %2448 = vmatprep.subr.bf16.mxu0 %v2419
  %2449 = vmatpush1.bf16.msra.mxu0 %v2418
  %2450 = vmatprep.subr.bf16.mxu0 0
  %2451 = vmatpush2.bf16.msra.mxu0 0
  %2452 = vmatprep.subr.bf16.mxu0 0
  %2453 = vmatpush2.bf16.msra.mxu0 0
  %2454 = vmatprep.subr.bf16.mxu0 0
  %2455 = vmatpush2.bf16.msra.mxu0 0
  %2456 = vmatprep.subr.bf16.mxu0 0
  %2457 = vmatpush2.bf16.msra.mxu0 0
  %2458 = vmatprep.subr.bf16.mxu0 0
  %2459 = vmatpush2.bf16.msra.mxu0 0
  %2460 = vmatprep.subr.bf16.mxu0 0
  %2461 = vmatpush2.bf16.msra.mxu0 0
  %2462 = vmatprep.subr.bf16.mxu0 0
  %2463 = vmatpush2.bf16.msra.mxu0 0
  %2464 = vmatprep.subr.bf16.mxu0 0
  %2465 = vmatpush2.bf16.msra.mxu0 0
  %2466 = vmatprep.mubr.bf16.mxu0 0
  %2467 = vmatmul.mubr.bf16.gmra.mxu0 %v301
  %v2468 = vpop.f32.mrf.mxu0
  %v2469 = vadd.f32 %v2396, %v2468
  %v2470 = vpop.f32.mrf.mxu0
  %v2471 = vadd.f32 %v2400, %v2470
  %v2472 = vpop.f32.mrf.mxu0
  %v2473 = vadd.f32 %v2396, %v2472
  %v2474 = vpop.f32.mrf.mxu0
  %v2475 = vadd.f32 %v2400, %v2474
  %2476 = vmatprep.mubr.bf16.mxu0 0
  %2477 = vmatmul.mubr.bf16.gmra.mxu0 %v304
  %v2478 = vpop.f32.mrf.mxu0
  %v2479 = vadd.f32 %v2396, %v2478
  %v2480 = vpop.f32.mrf.mxu0
  %v2481 = vadd.f32 %v2400, %v2480
  %v2482 = vpop.f32.mrf.mxu0
  %v2483 = vadd.f32 %v2396, %v2482
  %v2484 = vpop.f32.mrf.mxu0
  %v2485 = vadd.f32 %v2400, %v2484
  %2486 = vmatprep.mubr.bf16.mxu0 0
  %2487 = vmatmul.mubr.bf16.gmra.mxu0 %v307
  %v2488 = vpop.f32.mrf.mxu0
  %v2489 = vadd.f32 %v2396, %v2488
  %v2490 = vpop.f32.mrf.mxu0
  %v2491 = vadd.f32 %v2400, %v2490
  %v2492 = vpop.f32.mrf.mxu0
  %v2493 = vadd.f32 %v2396, %v2492
  %v2494 = vpop.f32.mrf.mxu0
  %v2495 = vadd.f32 %v2400, %v2494
  %2496 = vmatprep.mubr.bf16.mxu0 0
  %2497 = vmatmul.mubr.bf16.gmra.mxu0 %v310
  %v2498 = vpop.f32.mrf.mxu0
  %v2499 = vadd.f32 %v2396, %v2498
  %v2500 = vpop.f32.mrf.mxu0
  %v2501 = vadd.f32 %v2400, %v2500
  %v2502 = vpop.f32.mrf.mxu0
  %v2503 = vadd.f32 %v2396, %v2502
  %v2504 = vpop.f32.mrf.mxu0
  %v2505 = vadd.f32 %v2400, %v2504
  %2506 = vmatprep.mubr.bf16.mxu0 0
  %2507 = vmatmul.mubr.bf16.gmra.mxu0 %v313
  %v2508 = vpop.f32.mrf.mxu0
  %v2509 = vadd.f32 %v2396, %v2508
  %v2510 = vpop.f32.mrf.mxu0
  %v2511 = vadd.f32 %v2400, %v2510
  %v2512 = vpop.f32.mrf.mxu0
  %v2513 = vadd.f32 %v2396, %v2512
  %v2514 = vpop.f32.mrf.mxu0
  %v2515 = vadd.f32 %v2400, %v2514
  %2516 = vmatprep.mubr.bf16.mxu0 0
  %2517 = vmatmul.mubr.bf16.gmra.mxu0 %v316
  %v2518 = vpop.f32.mrf.mxu0
  %v2519 = vadd.f32 %v2396, %v2518
  %v2520 = vpop.f32.mrf.mxu0
  %v2521 = vadd.f32 %v2400, %v2520
  %v2522 = vpop.f32.mrf.mxu0
  %v2523 = vadd.f32 %v2396, %v2522
  %v2524 = vpop.f32.mrf.mxu0
  %v2525 = vadd.f32 %v2400, %v2524
  %2526 = vmatprep.mubr.bf16.mxu0 0
  %2527 = vmatmul.mubr.bf16.gmra.mxu0 %v319
  %v2528 = vpop.f32.mrf.mxu0
  %v2529 = vadd.f32 %v2396, %v2528
  %v2530 = vpop.f32.mrf.mxu0
  %v2531 = vadd.f32 %v2400, %v2530
  %v2532 = vpop.f32.mrf.mxu0
  %v2533 = vadd.f32 %v2396, %v2532
  %v2534 = vpop.f32.mrf.mxu0
  %v2535 = vadd.f32 %v2400, %v2534
  %2536 = vmatprep.mubr.bf16.mxu0 0
  %2537 = vmatmul.mubr.bf16.gmra.mxu0 %v322
  %v2538 = vpop.f32.mrf.mxu0
  %v2539 = vadd.f32 %v2396, %v2538
  %v2540 = vpop.f32.mrf.mxu0
  %v2541 = vadd.f32 %v2400, %v2540
  %v2542 = vpop.f32.mrf.mxu0
  %v2543 = vadd.f32 %v2396, %v2542
  %v2544 = vpop.f32.mrf.mxu0
  %v2545 = vadd.f32 %v2400, %v2544
  %2546 = vmatprep.mubr.bf16.mxu0 0
  %2547 = vmatmul.mubr.bf16.gmra.mxu0 %v325
  %v2548 = vpop.f32.mrf.mxu0
  %v2549 = vadd.f32 %v2396, %v2548
  %v2550 = vpop.f32.mrf.mxu0
  %v2551 = vadd.f32 %v2400, %v2550
  %v2552 = vpop.f32.mrf.mxu0
  %v2553 = vadd.f32 %v2396, %v2552
  %v2554 = vpop.f32.mrf.mxu0
  %v2555 = vadd.f32 %v2400, %v2554
  %2556 = vmatprep.mubr.bf16.mxu0 0
  %2557 = vmatmul.mubr.bf16.gmra.mxu0 %v328
  %v2558 = vpop.f32.mrf.mxu0
  %v2559 = vadd.f32 %v2396, %v2558
  %v2560 = vpop.f32.mrf.mxu0
  %v2561 = vadd.f32 %v2400, %v2560
  %v2562 = vpop.f32.mrf.mxu0
  %v2563 = vadd.f32 %v2396, %v2562
  %v2564 = vpop.f32.mrf.mxu0
  %v2565 = vadd.f32 %v2400, %v2564
  %2566 = vmatprep.mubr.bf16.mxu0 0
  %2567 = vmatmul.mubr.bf16.gmra.mxu0 %v331
  %v2568 = vpop.f32.mrf.mxu0
  %v2569 = vadd.f32 %v2396, %v2568
  %v2570 = vpop.f32.mrf.mxu0
  %v2571 = vadd.f32 %v2400, %v2570
  %v2572 = vpop.f32.mrf.mxu0
  %v2573 = vadd.f32 %v2396, %v2572
  %v2574 = vpop.f32.mrf.mxu0
  %v2575 = vadd.f32 %v2400, %v2574
  %2576 = vmatprep.mubr.bf16.mxu0 0
  %2577 = vmatmul.mubr.bf16.gmra.mxu0 %v334
  %v2578 = vpop.f32.mrf.mxu0
  %v2579 = vadd.f32 %v2396, %v2578
  %v2580 = vpop.f32.mrf.mxu0
  %v2581 = vadd.f32 %v2400, %v2580
  %v2582 = vpop.f32.mrf.mxu0
  %v2583 = vadd.f32 %v2396, %v2582
  %v2584 = vpop.f32.mrf.mxu0
  %v2585 = vadd.f32 %v2400, %v2584
  %2586 = vmatprep.mubr.bf16.mxu0 0
  %2587 = vmatmul.mubr.bf16.gmra.mxu0 %v337
  %v2588 = vpop.f32.mrf.mxu0
  %v2589 = vadd.f32 %v2396, %v2588
  %v2590 = vpop.f32.mrf.mxu0
  %v2591 = vadd.f32 %v2400, %v2590
  %v2592 = vpop.f32.mrf.mxu0
  %v2593 = vadd.f32 %v2396, %v2592
  %v2594 = vpop.f32.mrf.mxu0
  %v2595 = vadd.f32 %v2400, %v2594
  %2596 = vmatprep.mubr.bf16.mxu0 0
  %2597 = vmatmul.mubr.bf16.gmra.mxu0 %v340
  %v2598 = vpop.f32.mrf.mxu0
  %v2599 = vadd.f32 %v2396, %v2598
  %v2600 = vpop.f32.mrf.mxu0
  %v2601 = vadd.f32 %v2400, %v2600
  %v2602 = vpop.f32.mrf.mxu0
  %v2603 = vadd.f32 %v2396, %v2602
  %v2604 = vpop.f32.mrf.mxu0
  %v2605 = vadd.f32 %v2400, %v2604
  %2606 = vmatprep.mubr.bf16.mxu0 0
  %2607 = vmatmul.mubr.bf16.gmra.mxu0 %v343
  %v2608 = vpop.f32.mrf.mxu0
  %v2609 = vadd.f32 %v2396, %v2608
  %v2610 = vpop.f32.mrf.mxu0
  %v2611 = vadd.f32 %v2400, %v2610
  %v2612 = vpop.f32.mrf.mxu0
  %v2613 = vadd.f32 %v2396, %v2612
  %v2614 = vpop.f32.mrf.mxu0
  %v2615 = vadd.f32 %v2400, %v2614
  %2616 = vmatprep.mubr.bf16.mxu0 0
  %2617 = vmatmul.mubr.bf16.gmra.mxu0 %v346
  %v2618 = vpop.f32.mrf.mxu0
  %v2619 = vadd.f32 %v2396, %v2618
  %v2620 = vpop.f32.mrf.mxu0
  %v2621 = vadd.f32 %v2400, %v2620
  %v2622 = vpop.f32.mrf.mxu0
  %v2623 = vadd.f32 %v2396, %v2622
  %v2624 = vpop.f32.mrf.mxu0
  %v2625 = vadd.f32 %v2400, %v2624
  %2626 = vmatprep.mubr.bf16.mxu0 0
  %2627 = vmatmul.mubr.bf16.gmra.mxu0 %v349
  %v2628 = vpop.f32.mrf.mxu0
  %v2629 = vadd.f32 %v2396, %v2628
  %v2630 = vpop.f32.mrf.mxu0
  %v2631 = vadd.f32 %v2400, %v2630
  %v2632 = vpop.f32.mrf.mxu0
  %v2633 = vadd.f32 %v2396, %v2632
  %v2634 = vpop.f32.mrf.mxu0
  %v2635 = vadd.f32 %v2400, %v2634
  %2636 = vmatprep.mubr.bf16.mxu0 0
  %2637 = vmatmul.mubr.bf16.gmra.mxu0 %v352
  %v2638 = vpop.f32.mrf.mxu0
  %v2639 = vadd.f32 %v2396, %v2638
  %v2640 = vpop.f32.mrf.mxu0
  %v2641 = vadd.f32 %v2400, %v2640
  %v2642 = vpop.f32.mrf.mxu0
  %v2643 = vadd.f32 %v2396, %v2642
  %v2644 = vpop.f32.mrf.mxu0
  %v2645 = vadd.f32 %v2400, %v2644
  %2646 = vmatprep.mubr.bf16.mxu0 0
  %2647 = vmatmul.mubr.bf16.gmra.mxu0 %v355
  %v2648 = vpop.f32.mrf.mxu0
  %v2649 = vadd.f32 %v2396, %v2648
  %v2650 = vpop.f32.mrf.mxu0
  %v2651 = vadd.f32 %v2400, %v2650
  %v2652 = vpop.f32.mrf.mxu0
  %v2653 = vadd.f32 %v2396, %v2652
  %v2654 = vpop.f32.mrf.mxu0
  %v2655 = vadd.f32 %v2400, %v2654
  %2656 = vmatprep.mubr.bf16.mxu0 0
  %2657 = vmatmul.mubr.bf16.gmra.mxu0 %v358
  %v2658 = vpop.f32.mrf.mxu0
  %v2659 = vadd.f32 %v2396, %v2658
  %v2660 = vpop.f32.mrf.mxu0
  %v2661 = vadd.f32 %v2400, %v2660
  %v2662 = vpop.f32.mrf.mxu0
  %v2663 = vadd.f32 %v2396, %v2662
  %v2664 = vpop.f32.mrf.mxu0
  %v2665 = vadd.f32 %v2400, %v2664
  %2666 = vmatprep.mubr.bf16.mxu0 0
  %2667 = vmatmul.mubr.bf16.gmra.mxu0 %v361
  %v2668 = vpop.f32.mrf.mxu0
  %v2669 = vadd.f32 %v2396, %v2668
  %v2670 = vpop.f32.mrf.mxu0
  %v2671 = vadd.f32 %v2400, %v2670
  %v2672 = vpop.f32.mrf.mxu0
  %v2673 = vadd.f32 %v2396, %v2672
  %v2674 = vpop.f32.mrf.mxu0
  %v2675 = vadd.f32 %v2400, %v2674
  %2676 = vmatprep.mubr.bf16.mxu0 0
  %2677 = vmatmul.mubr.bf16.gmra.mxu0 %v364
  %v2678 = vpop.f32.mrf.mxu0
  %v2679 = vadd.f32 %v2396, %v2678
  %v2680 = vpop.f32.mrf.mxu0
  %v2681 = vadd.f32 %v2400, %v2680
  %v2682 = vpop.f32.mrf.mxu0
  %v2683 = vadd.f32 %v2396, %v2682
  %v2684 = vpop.f32.mrf.mxu0
  %v2685 = vadd.f32 %v2400, %v2684
  %2686 = vmatprep.mubr.bf16.mxu0 0
  %2687 = vmatmul.mubr.bf16.gmra.mxu0 %v367
  %v2688 = vpop.f32.mrf.mxu0
  %v2689 = vadd.f32 %v2396, %v2688
  %v2690 = vpop.f32.mrf.mxu0
  %v2691 = vadd.f32 %v2400, %v2690
  %v2692 = vpop.f32.mrf.mxu0
  %v2693 = vadd.f32 %v2396, %v2692
  %v2694 = vpop.f32.mrf.mxu0
  %v2695 = vadd.f32 %v2400, %v2694
  %2696 = vmatprep.mubr.bf16.mxu0 0
  %2697 = vmatmul.mubr.bf16.gmra.mxu0 %v370
  %v2698 = vpop.f32.mrf.mxu0
  %v2699 = vadd.f32 %v2396, %v2698
  %v2700 = vpop.f32.mrf.mxu0
  %v2701 = vadd.f32 %v2400, %v2700
  %v2702 = vpop.f32.mrf.mxu0
  %v2703 = vadd.f32 %v2396, %v2702
  %v2704 = vpop.f32.mrf.mxu0
  %v2705 = vadd.f32 %v2400, %v2704
  %2706 = vmatprep.mubr.bf16.mxu0 0
  %2707 = vmatmul.mubr.bf16.gmra.mxu0 %v373
  %v2708 = vpop.f32.mrf.mxu0
  %v2709 = vadd.f32 %v2396, %v2708
  %v2710 = vpop.f32.mrf.mxu0
  %v2711 = vadd.f32 %v2400, %v2710
  %v2712 = vpop.f32.mrf.mxu0
  %v2713 = vadd.f32 %v2396, %v2712
  %v2714 = vpop.f32.mrf.mxu0
  %v2715 = vadd.f32 %v2400, %v2714
  %2716 = vmatprep.mubr.bf16.mxu0 0
  %2717 = vmatmul.mubr.bf16.gmra.mxu0 %v376
  %v2718 = vpop.f32.mrf.mxu0
  %v2719 = vadd.f32 %v2396, %v2718
  %v2720 = vpop.f32.mrf.mxu0
  %v2721 = vadd.f32 %v2400, %v2720
  %v2722 = vpop.f32.mrf.mxu0
  %v2723 = vadd.f32 %v2396, %v2722
  %v2724 = vpop.f32.mrf.mxu0
  %v2725 = vadd.f32 %v2400, %v2724
  %2726 = vmatprep.mubr.bf16.mxu0 0
  %2727 = vmatmul.mubr.bf16.gmra.mxu0 %v379
  %v2728 = vpop.f32.mrf.mxu0
  %v2729 = vadd.f32 %v2396, %v2728
  %v2730 = vpop.f32.mrf.mxu0
  %v2731 = vadd.f32 %v2400, %v2730
  %v2732 = vpop.f32.mrf.mxu0
  %v2733 = vadd.f32 %v2396, %v2732
  %v2734 = vpop.f32.mrf.mxu0
  %v2735 = vadd.f32 %v2400, %v2734
  %2736 = vmatprep.mubr.bf16.mxu0 0
  %2737 = vmatmul.mubr.bf16.gmra.mxu0 %v382
  %v2738 = vpop.f32.mrf.mxu0
  %v2739 = vadd.f32 %v2396, %v2738
  %v2740 = vpop.f32.mrf.mxu0
  %v2741 = vadd.f32 %v2400, %v2740
  %v2742 = vpop.f32.mrf.mxu0
  %v2743 = vadd.f32 %v2396, %v2742
  %v2744 = vpop.f32.mrf.mxu0
  %v2745 = vadd.f32 %v2400, %v2744
  %2746 = vmatprep.mubr.bf16.mxu0 0
  %2747 = vmatmul.mubr.bf16.gmra.mxu0 %v385
  %v2748 = vpop.f32.mrf.mxu0
  %v2749 = vadd.f32 %v2396, %v2748
  %v2750 = vpop.f32.mrf.mxu0
  %v2751 = vadd.f32 %v2400, %v2750
  %v2752 = vpop.f32.mrf.mxu0
  %v2753 = vadd.f32 %v2396, %v2752
  %v2754 = vpop.f32.mrf.mxu0
  %v2755 = vadd.f32 %v2400, %v2754
  %2756 = vmatprep.mubr.bf16.mxu0 0
  %2757 = vmatmul.mubr.bf16.gmra.mxu0 %v388
  %v2758 = vpop.f32.mrf.mxu0
  %v2759 = vadd.f32 %v2396, %v2758
  %v2760 = vpop.f32.mrf.mxu0
  %v2761 = vadd.f32 %v2400, %v2760
  %v2762 = vpop.f32.mrf.mxu0
  %v2763 = vadd.f32 %v2396, %v2762
  %v2764 = vpop.f32.mrf.mxu0
  %v2765 = vadd.f32 %v2400, %v2764
  %2766 = vmatprep.mubr.bf16.mxu0 0
  %2767 = vmatmul.mubr.bf16.gmra.mxu0 %v391
  %v2768 = vpop.f32.mrf.mxu0
  %v2769 = vadd.f32 %v2396, %v2768
  %v2770 = vpop.f32.mrf.mxu0
  %v2771 = vadd.f32 %v2400, %v2770
  %v2772 = vpop.f32.mrf.mxu0
  %v2773 = vadd.f32 %v2396, %v2772
  %v2774 = vpop.f32.mrf.mxu0
  %v2775 = vadd.f32 %v2400, %v2774
  %2776 = vmatprep.mubr.bf16.mxu0 0
  %2777 = vmatmul.mubr.bf16.gmra.mxu0 %v394
  %v2778 = vpop.f32.mrf.mxu0
  %v2779 = vadd.f32 %v2396, %v2778
  %v2780 = vpop.f32.mrf.mxu0
  %v2781 = vadd.f32 %v2400, %v2780
  %v2782 = vpop.f32.mrf.mxu0
  %v2783 = vadd.f32 %v2396, %v2782
  %v2784 = vpop.f32.mrf.mxu0
  %v2785 = vadd.f32 %v2400, %v2784
  %2786 = vdwg.mxu0
  %v2787 = vmax.f32 %v2469, 0.0
  %v2788 = vmax.f32 %v2471, 0.0
  %v2789 = vmax.f32 %v2473, 0.0
  %v2790 = vmax.f32 %v2475, 0.0
  %v2791 = vmax.f32 %v2479, 0.0
  %v2792 = vmax.f32 %v2481, 0.0
  %v2793 = vmax.f32 %v2483, 0.0
  %v2794 = vmax.f32 %v2485, 0.0
  %v2795 = vmax.f32 %v2489, 0.0
  %v2796 = vmax.f32 %v2491, 0.0
  %v2797 = vmax.f32 %v2493, 0.0
  %v2798 = vmax.f32 %v2495, 0.0
  %v2799 = vmax.f32 %v2499, 0.0
  %v2800 = vmax.f32 %v2501, 0.0
  %v2801 = vmax.f32 %v2503, 0.0
  %v2802 = vmax.f32 %v2505, 0.0
  %v2803 = vmax.f32 %v2509, 0.0
  %v2804 = vmax.f32 %v2511, 0.0
  %v2805 = vmax.f32 %v2513, 0.0
  %v2806 = vmax.f32 %v2515, 0.0
  %v2807 = vmax.f32 %v2519, 0.0
  %v2808 = vmax.f32 %v2521, 0.0
  %v2809 = vmax.f32 %v2523, 0.0
  %v2810 = vmax.f32 %v2525, 0.0
  %v2811 = vmax.f32 %v2529, 0.0
  %v2812 = vmax.f32 %v2531, 0.0
  %v2813 = vmax.f32 %v2533, 0.0
  %v2814 = vmax.f32 %v2535, 0.0
  %v2815 = vmax.f32 %v2539, 0.0
  %v2816 = vmax.f32 %v2541, 0.0
  %v2817 = vmax.f32 %v2543, 0.0
  %v2818 = vmax.f32 %v2545, 0.0
  %v2819 = vmax.f32 %v2549, 0.0
  %v2820 = vmax.f32 %v2551, 0.0
  %v2821 = vmax.f32 %v2553, 0.0
  %v2822 = vmax.f32 %v2555, 0.0
  %v2823 = vmax.f32 %v2559, 0.0
  %v2824 = vmax.f32 %v2561, 0.0
  %v2825 = vmax.f32 %v2563, 0.0
  %v2826 = vmax.f32 %v2565, 0.0
  %v2827 = vmax.f32 %v2569, 0.0
  %v2828 = vmax.f32 %v2571, 0.0
  %v2829 = vmax.f32 %v2573, 0.0
  %v2830 = vmax.f32 %v2575, 0.0
  %v2831 = vmax.f32 %v2579, 0.0
  %v2832 = vmax.f32 %v2581, 0.0
  %v2833 = vmax.f32 %v2583, 0.0
  %v2834 = vmax.f32 %v2585, 0.0
  %v2835 = vmax.f32 %v2589, 0.0
  %v2836 = vmax.f32 %v2591, 0.0
  %v2837 = vmax.f32 %v2593, 0.0
  %v2838 = vmax.f32 %v2595, 0.0
  %v2839 = vmax.f32 %v2599, 0.0
  %v2840 = vmax.f32 %v2601, 0.0
  %v2841 = vmax.f32 %v2603, 0.0
  %v2842 = vmax.f32 %v2605, 0.0
  %v2843 = vmax.f32 %v2609, 0.0
  %v2844 = vmax.f32 %v2611, 0.0
  %v2845 = vmax.f32 %v2613, 0.0
  %v2846 = vmax.f32 %v2615, 0.0
  %v2847 = vmax.f32 %v2619, 0.0
  %v2848 = vmax.f32 %v2621, 0.0
  %v2849 = vmax.f32 %v2623, 0.0
  %v2850 = vmax.f32 %v2625, 0.0
  %v2851 = vmax.f32 %v2629, 0.0
  %v2852 = vmax.f32 %v2631, 0.0
  %v2853 = vmax.f32 %v2633, 0.0
  %v2854 = vmax.f32 %v2635, 0.0
  %v2855 = vmax.f32 %v2639, 0.0
  %v2856 = vmax.f32 %v2641, 0.0
  %v2857 = vmax.f32 %v2643, 0.0
  %v2858 = vmax.f32 %v2645, 0.0
  %v2859 = vmax.f32 %v2649, 0.0
  %v2860 = vmax.f32 %v2651, 0.0
  %v2861 = vmax.f32 %v2653, 0.0
  %v2862 = vmax.f32 %v2655, 0.0
  %v2863 = vmax.f32 %v2659, 0.0
  %v2864 = vmax.f32 %v2661, 0.0
  %v2865 = vmax.f32 %v2663, 0.0
  %v2866 = vmax.f32 %v2665, 0.0
  %v2867 = vmax.f32 %v2669, 0.0
  %v2868 = vmax.f32 %v2671, 0.0
  %v2869 = vmax.f32 %v2673, 0.0
  %v2870 = vmax.f32 %v2675, 0.0
  %v2871 = vmax.f32 %v2679, 0.0
  %v2872 = vmax.f32 %v2681, 0.0
  %v2873 = vmax.f32 %v2683, 0.0
  %v2874 = vmax.f32 %v2685, 0.0
  %v2875 = vmax.f32 %v2689, 0.0
  %v2876 = vmax.f32 %v2691, 0.0
  %v2877 = vmax.f32 %v2693, 0.0
  %v2878 = vmax.f32 %v2695, 0.0
  %v2879 = vmax.f32 %v2699, 0.0
  %v2880 = vmax.f32 %v2701, 0.0
  %v2881 = vmax.f32 %v2703, 0.0
  %v2882 = vmax.f32 %v2705, 0.0
  %v2883 = vmax.f32 %v2709, 0.0
  %v2884 = vmax.f32 %v2711, 0.0
  %v2885 = vmax.f32 %v2713, 0.0
  %v2886 = vmax.f32 %v2715, 0.0
  %v2887 = vmax.f32 %v2719, 0.0
  %v2888 = vmax.f32 %v2721, 0.0
  %v2889 = vmax.f32 %v2723, 0.0
  %v2890 = vmax.f32 %v2725, 0.0
  %v2891 = vmax.f32 %v2729, 0.0
  %v2892 = vmax.f32 %v2731, 0.0
  %v2893 = vmax.f32 %v2733, 0.0
  %v2894 = vmax.f32 %v2735, 0.0
  %v2895 = vmax.f32 %v2739, 0.0
  %v2896 = vmax.f32 %v2741, 0.0
  %v2897 = vmax.f32 %v2743, 0.0
  %v2898 = vmax.f32 %v2745, 0.0
  %v2899 = vmax.f32 %v2749, 0.0
  %v2900 = vmax.f32 %v2751, 0.0
  %v2901 = vmax.f32 %v2753, 0.0
  %v2902 = vmax.f32 %v2755, 0.0
  %v2903 = vmax.f32 %v2759, 0.0
  %v2904 = vmax.f32 %v2761, 0.0
  %v2905 = vmax.f32 %v2763, 0.0
  %v2906 = vmax.f32 %v2765, 0.0
  %v2907 = vmax.f32 %v2769, 0.0
  %v2908 = vmax.f32 %v2771, 0.0
  %v2909 = vmax.f32 %v2773, 0.0
  %v2910 = vmax.f32 %v2775, 0.0
  %v2911 = vmax.f32 %v2779, 0.0
  %v2912 = vmax.f32 %v2781, 0.0
  %v2913 = vmax.f32 %v2783, 0.0
  %v2914 = vmax.f32 %v2785, 0.0
  %v2915 = vadd.f32 %v2787, %v2789
  %v2916 = vadd.f32 %v2915, %v2791
  %v2917 = vadd.f32 %v2916, %v2793
  %v2918 = vadd.f32 %v2917, %v2795
  %v2919 = vadd.f32 %v2918, %v2797
  %v2920 = vadd.f32 %v2919, %v2799
  %v2921 = vadd.f32 %v2920, %v2801
  %v2922 = vadd.f32 %v2921, %v2803
  %v2923 = vadd.f32 %v2922, %v2805
  %v2924 = vadd.f32 %v2923, %v2807
  %v2925 = vadd.f32 %v2924, %v2809
  %v2926 = vadd.f32 %v2925, %v2811
  %v2927 = vadd.f32 %v2926, %v2813
  %v2928 = vadd.f32 %v2927, %v2815
  %v2929 = vadd.f32 %v2928, %v2817
  %v2930 = vadd.f32 %v2929, %v2819
  %v2931 = vadd.f32 %v2930, %v2821
  %v2932 = vadd.f32 %v2931, %v2823
  %v2933 = vadd.f32 %v2932, %v2825
  %v2934 = vadd.f32 %v2933, %v2827
  %v2935 = vadd.f32 %v2934, %v2829
  %v2936 = vadd.f32 %v2935, %v2831
  %v2937 = vadd.f32 %v2936, %v2833
  %v2938 = vadd.f32 %v2937, %v2835
  %v2939 = vadd.f32 %v2938, %v2837
  %v2940 = vadd.f32 %v2939, %v2839
  %v2941 = vadd.f32 %v2940, %v2841
  %v2942 = vadd.f32 %v2941, %v2843
  %v2943 = vadd.f32 %v2942, %v2845
  %v2944 = vadd.f32 %v2943, %v2847
  %v2945 = vadd.f32 %v2944, %v2849
  %v2946 = vrot.slane %v2945, 4
  %v2947 = vadd.f32 %v2945, %v2946
  %v2948 = vrot.slane %v2947, 2
  %v2949 = vadd.f32 %v2947, %v2948
  %v2950 = vrot.slane %v2949, 1
  %v2951 = vadd.f32 %v2949, %v2950
  %v2952 = vadd.f32 %v2788, %v2790
  %v2953 = vadd.f32 %v2952, %v2792
  %v2954 = vadd.f32 %v2953, %v2794
  %v2955 = vadd.f32 %v2954, %v2796
  %v2956 = vadd.f32 %v2955, %v2798
  %v2957 = vadd.f32 %v2956, %v2800
  %v2958 = vadd.f32 %v2957, %v2802
  %v2959 = vadd.f32 %v2958, %v2804
  %v2960 = vadd.f32 %v2959, %v2806
  %v2961 = vadd.f32 %v2960, %v2808
  %v2962 = vadd.f32 %v2961, %v2810
  %v2963 = vadd.f32 %v2962, %v2812
  %v2964 = vadd.f32 %v2963, %v2814
  %v2965 = vadd.f32 %v2964, %v2816
  %v2966 = vadd.f32 %v2965, %v2818
  %v2967 = vadd.f32 %v2966, %v2820
  %v2968 = vadd.f32 %v2967, %v2822
  %v2969 = vadd.f32 %v2968, %v2824
  %v2970 = vadd.f32 %v2969, %v2826
  %v2971 = vadd.f32 %v2970, %v2828
  %v2972 = vadd.f32 %v2971, %v2830
  %v2973 = vadd.f32 %v2972, %v2832
  %v2974 = vadd.f32 %v2973, %v2834
  %v2975 = vadd.f32 %v2974, %v2836
  %v2976 = vadd.f32 %v2975, %v2838
  %v2977 = vadd.f32 %v2976, %v2840
  %v2978 = vadd.f32 %v2977, %v2842
  %v2979 = vadd.f32 %v2978, %v2844
  %v2980 = vadd.f32 %v2979, %v2846
  %v2981 = vadd.f32 %v2980, %v2848
  %v2982 = vadd.f32 %v2981, %v2850
  %v2983 = vrot.slane %v2982, 4
  %v2984 = vadd.f32 %v2982, %v2983
  %v2985 = vrot.slane %v2984, 2
  %v2986 = vadd.f32 %v2984, %v2985
  %v2987 = vrot.slane %v2986, 1
  %v2988 = vadd.f32 %v2986, %v2987
  %v2989 = vadd.f32 %v2851, %v2853
  %v2990 = vadd.f32 %v2989, %v2855
  %v2991 = vadd.f32 %v2990, %v2857
  %v2992 = vadd.f32 %v2991, %v2859
  %v2993 = vadd.f32 %v2992, %v2861
  %v2994 = vadd.f32 %v2993, %v2863
  %v2995 = vadd.f32 %v2994, %v2865
  %v2996 = vadd.f32 %v2995, %v2867
  %v2997 = vadd.f32 %v2996, %v2869
  %v2998 = vadd.f32 %v2997, %v2871
  %v2999 = vadd.f32 %v2998, %v2873
  %v3000 = vadd.f32 %v2999, %v2875
  %v3001 = vadd.f32 %v3000, %v2877
  %v3002 = vadd.f32 %v3001, %v2879
  %v3003 = vadd.f32 %v3002, %v2881
  %v3004 = vadd.f32 %v3003, %v2883
  %v3005 = vadd.f32 %v3004, %v2885
  %v3006 = vadd.f32 %v3005, %v2887
  %v3007 = vadd.f32 %v3006, %v2889
  %v3008 = vadd.f32 %v3007, %v2891
  %v3009 = vadd.f32 %v3008, %v2893
  %v3010 = vadd.f32 %v3009, %v2895
  %v3011 = vadd.f32 %v3010, %v2897
  %v3012 = vadd.f32 %v3011, %v2899
  %v3013 = vadd.f32 %v3012, %v2901
  %v3014 = vadd.f32 %v3013, %v2903
  %v3015 = vadd.f32 %v3014, %v2905
  %v3016 = vadd.f32 %v3015, %v2907
  %v3017 = vadd.f32 %v3016, %v2909
  %v3018 = vadd.f32 %v3017, %v2911
  %v3019 = vadd.f32 %v3018, %v2913
  %v3020 = vrot.slane %v3019, 4
  %v3021 = vadd.f32 %v3019, %v3020
  %v3022 = vrot.slane %v3021, 2
  %v3023 = vadd.f32 %v3021, %v3022
  %v3024 = vrot.slane %v3023, 1
  %v3025 = vadd.f32 %v3023, %v3024
  %v3026 = vadd.f32 %v2852, %v2854
  %v3027 = vadd.f32 %v3026, %v2856
  %v3028 = vadd.f32 %v3027, %v2858
  %v3029 = vadd.f32 %v3028, %v2860
  %v3030 = vadd.f32 %v3029, %v2862
  %v3031 = vadd.f32 %v3030, %v2864
  %v3032 = vadd.f32 %v3031, %v2866
  %v3033 = vadd.f32 %v3032, %v2868
  %v3034 = vadd.f32 %v3033, %v2870
  %v3035 = vadd.f32 %v3034, %v2872
  %v3036 = vadd.f32 %v3035, %v2874
  %v3037 = vadd.f32 %v3036, %v2876
  %v3038 = vadd.f32 %v3037, %v2878
  %v3039 = vadd.f32 %v3038, %v2880
  %v3040 = vadd.f32 %v3039, %v2882
  %v3041 = vadd.f32 %v3040, %v2884
  %v3042 = vadd.f32 %v3041, %v2886
  %v3043 = vadd.f32 %v3042, %v2888
  %v3044 = vadd.f32 %v3043, %v2890
  %v3045 = vadd.f32 %v3044, %v2892
  %v3046 = vadd.f32 %v3045, %v2894
  %v3047 = vadd.f32 %v3046, %v2896
  %v3048 = vadd.f32 %v3047, %v2898
  %v3049 = vadd.f32 %v3048, %v2900
  %v3050 = vadd.f32 %v3049, %v2902
  %v3051 = vadd.f32 %v3050, %v2904
  %v3052 = vadd.f32 %v3051, %v2906
  %v3053 = vadd.f32 %v3052, %v2908
  %v3054 = vadd.f32 %v3053, %v2910
  %v3055 = vadd.f32 %v3054, %v2912
  %v3056 = vadd.f32 %v3055, %v2914
  %v3057 = vrot.slane %v3056, 4
  %v3058 = vadd.f32 %v3056, %v3057
  %v3059 = vrot.slane %v3058, 2
  %v3060 = vadd.f32 %v3058, %v3059
  %v3061 = vrot.slane %v3060, 1
  %v3062 = vadd.f32 %v3060, %v3061
  %vm3067 = vcmask 1041409
  %v3068 = vsel %vm3067, %v994, %v920
  %v3069 = vsel %vm3067, %v1031, %v957
  %v3076 = vsel %vm3067, %v1671, %v1597
  %v3077 = vsel %vm3067, %v1708, %v1634
  %v3084 = vsel %vm3067, %v2348, %v2274
  %v3085 = vsel %vm3067, %v2385, %v2311
  %v3092 = vsel %vm3067, %v3025, %v2951
  %v3093 = vsel %vm3067, %v3062, %v2988
  %v3096 = vpack.c.bf16 %v3068, %v3068
  %v3097 = vpack.c.bf16 %v3069, %v3069
  %v3098 = vpack.c.bf16 %v3076, %v3076
  %v3099 = vpack.c.bf16 %v3077, %v3077
  %v3100 = vpack.c.bf16 %v3084, %v3084
  %v3101 = vpack.c.bf16 %v3085, %v3085
  %v3102 = vpack.c.bf16 %v3092, %v3092
  %v3103 = vpack.c.bf16 %v3093, %v3093
  %v3104 = vld [vmem:[%s3] sm:$0xff]
  %v3105 = vld [vmem:[%s3 + $0x8] sm:$0xff]
  %v3106 = vld [vmem:[%s3 + $0x10] sm:$0xff]
  %v3107 = vld [vmem:[%s3 + $0x18] sm:$0xff]
  %v3108 = vld [vmem:[%s3 + $0x20] sm:$0xff]
  %v3109 = vld [vmem:[%s3 + $0x28] sm:$0xff]
  %v3110 = vld [vmem:[%s3 + $0x30] sm:$0xff]
  %v3111 = vld [vmem:[%s3 + $0x38] sm:$0xff]
  %v3112 = vld [vmem:[%s3 + $0x40] sm:$0xff]
  %v3113 = vld [vmem:[%s3 + $0x48] sm:$0xff]
  %v3114 = vld [vmem:[%s3 + $0x50] sm:$0xff]
  %v3115 = vld [vmem:[%s3 + $0x58] sm:$0xff]
  %v3116 = vld [vmem:[%s3 + $0x60] sm:$0xff]
  %v3117 = vld [vmem:[%s3 + $0x68] sm:$0xff]
  %v3118 = vld [vmem:[%s3 + $0x70] sm:$0xff]
  %v3119 = vld [vmem:[%s3 + $0x78] sm:$0xff]
  %v3120 = vld [vmem:[%s3 + $0x80] sm:$0xff]
  %v3121 = vld [vmem:[%s3 + $0x88] sm:$0xff]
  %v3122 = vld [vmem:[%s3 + $0x90] sm:$0xff]
  %v3123 = vld [vmem:[%s3 + $0x98] sm:$0xff]
  %v3124 = vld [vmem:[%s3 + $0xa0] sm:$0xff]
  %v3125 = vld [vmem:[%s3 + $0xa8] sm:$0xff]
  %v3126 = vld [vmem:[%s3 + $0xb0] sm:$0xff]
  %v3127 = vld [vmem:[%s3 + $0xb8] sm:$0xff]
  %v3128 = vld [vmem:[%s3 + $0xc0] sm:$0xff]
  %v3129 = vld [vmem:[%s3 + $0xc8] sm:$0xff]
  %v3130 = vld [vmem:[%s3 + $0xd0] sm:$0xff]
  %v3131 = vld [vmem:[%s3 + $0xd8] sm:$0xff]
  %v3132 = vld [vmem:[%s3 + $0xe0] sm:$0xff]
  %v3133 = vld [vmem:[%s3 + $0xe8] sm:$0xff]
  %v3134 = vld [vmem:[%s3 + $0xf0] sm:$0xff]
  %v3135 = vld [vmem:[%s3 + $0xf8] sm:$0xff]
  %v3136 = vld [vmem:[%s3 + $0x100] sm:$0xff]
  %v3137 = vld [vmem:[%s3 + $0x108] sm:$0xff]
  %v3138 = vld [vmem:[%s3 + $0x110] sm:$0xff]
  %v3139 = vld [vmem:[%s3 + $0x118] sm:$0xff]
  %v3140 = vld [vmem:[%s3 + $0x120] sm:$0xff]
  %v3141 = vld [vmem:[%s3 + $0x128] sm:$0xff]
  %v3142 = vld [vmem:[%s3 + $0x130] sm:$0xff]
  %v3143 = vld [vmem:[%s3 + $0x138] sm:$0xff]
  %v3144 = vld [vmem:[%s3 + $0x140] sm:$0xff]
  %v3145 = vld [vmem:[%s3 + $0x148] sm:$0xff]
  %v3146 = vld [vmem:[%s3 + $0x150] sm:$0xff]
  %v3147 = vld [vmem:[%s3 + $0x158] sm:$0xff]
  %v3148 = vld [vmem:[%s3 + $0x160] sm:$0xff]
  %v3149 = vld [vmem:[%s3 + $0x168] sm:$0xff]
  %v3150 = vld [vmem:[%s3 + $0x170] sm:$0xff]
  %v3151 = vld [vmem:[%s3 + $0x178] sm:$0xff]
  %v3152 = vld [vmem:[%s3 + $0x180] sm:$0xff]
  %v3153 = vld [vmem:[%s3 + $0x188] sm:$0xff]
  %v3154 = vld [vmem:[%s3 + $0x190] sm:$0xff]
  %v3155 = vld [vmem:[%s3 + $0x198] sm:$0xff]
  %v3156 = vld [vmem:[%s3 + $0x1a0] sm:$0xff]
  %v3157 = vld [vmem:[%s3 + $0x1a8] sm:$0xff]
  %v3158 = vld [vmem:[%s3 + $0x1b0] sm:$0xff]
  %v3159 = vld [vmem:[%s3 + $0x1b8] sm:$0xff]
  %v3160 = vld [vmem:[%s3 + $0x1c0] sm:$0xff]
  %v3161 = vld [vmem:[%s3 + $0x1c8] sm:$0xff]
  %v3162 = vld [vmem:[%s3 + $0x1d0] sm:$0xff]
  %v3163 = vld [vmem:[%s3 + $0x1d8] sm:$0xff]
  %v3164 = vld [vmem:[%s3 + $0x1e0] sm:$0xff]
  %v3165 = vld [vmem:[%s3 + $0x1e8] sm:$0xff]
  %v3166 = vld [vmem:[%s3 + $0x1f0] sm:$0xff]
  %v3167 = vld [vmem:[%s3 + $0x1f8] sm:$0xff]
  %v3168 = vld [vmem:[%s3 + $0x200] sm:$0xff]
  %v3169 = vld [vmem:[%s3 + $0x208] sm:$0xff]
  %v3170 = vld [vmem:[%s3 + $0x210] sm:$0xff]
  %v3171 = vld [vmem:[%s3 + $0x218] sm:$0xff]
  %v3172 = vld [vmem:[%s3 + $0x220] sm:$0xff]
  %v3173 = vld [vmem:[%s3 + $0x228] sm:$0xff]
  %v3174 = vld [vmem:[%s3 + $0x230] sm:$0xff]
  %v3175 = vld [vmem:[%s3 + $0x238] sm:$0xff]
  %v3176 = vld [vmem:[%s3 + $0x240] sm:$0xff]
  %v3177 = vld [vmem:[%s3 + $0x248] sm:$0xff]
  %v3178 = vld [vmem:[%s3 + $0x250] sm:$0xff]
  %v3179 = vld [vmem:[%s3 + $0x258] sm:$0xff]
  %v3180 = vld [vmem:[%s3 + $0x260] sm:$0xff]
  %v3181 = vld [vmem:[%s3 + $0x268] sm:$0xff]
  %v3182 = vld [vmem:[%s3 + $0x270] sm:$0xff]
  %v3183 = vld [vmem:[%s3 + $0x278] sm:$0xff]
  %v3184 = vld [vmem:[%s3 + $0x280] sm:$0xff]
  %v3185 = vld [vmem:[%s3 + $0x288] sm:$0xff]
  %v3186 = vld [vmem:[%s3 + $0x290] sm:$0xff]
  %v3187 = vld [vmem:[%s3 + $0x298] sm:$0xff]
  %v3188 = vld [vmem:[%s3 + $0x2a0] sm:$0xff]
  %v3189 = vld [vmem:[%s3 + $0x2a8] sm:$0xff]
  %v3190 = vld [vmem:[%s3 + $0x2b0] sm:$0xff]
  %v3191 = vld [vmem:[%s3 + $0x2b8] sm:$0xff]
  %v3192 = vld [vmem:[%s3 + $0x2c0] sm:$0xff]
  %v3193 = vld [vmem:[%s3 + $0x2c8] sm:$0xff]
  %v3194 = vld [vmem:[%s3 + $0x2d0] sm:$0xff]
  %v3195 = vld [vmem:[%s3 + $0x2d8] sm:$0xff]
  %v3196 = vld [vmem:[%s3 + $0x2e0] sm:$0xff]
  %v3197 = vld [vmem:[%s3 + $0x2e8] sm:$0xff]
  %v3198 = vld [vmem:[%s3 + $0x2f0] sm:$0xff]
  %v3199 = vld [vmem:[%s3 + $0x2f8] sm:$0xff]
  %v3200 = vld [vmem:[%s3 + $0x300] sm:$0xff]
  %v3201 = vld [vmem:[%s3 + $0x308] sm:$0xff]
  %v3202 = vld [vmem:[%s3 + $0x310] sm:$0xff]
  %v3203 = vld [vmem:[%s3 + $0x318] sm:$0xff]
  %v3204 = vld [vmem:[%s3 + $0x320] sm:$0xff]
  %v3205 = vld [vmem:[%s3 + $0x328] sm:$0xff]
  %v3206 = vld [vmem:[%s3 + $0x330] sm:$0xff]
  %v3207 = vld [vmem:[%s3 + $0x338] sm:$0xff]
  %v3208 = vld [vmem:[%s3 + $0x340] sm:$0xff]
  %v3209 = vld [vmem:[%s3 + $0x348] sm:$0xff]
  %v3210 = vld [vmem:[%s3 + $0x350] sm:$0xff]
  %v3211 = vld [vmem:[%s3 + $0x358] sm:$0xff]
  %v3212 = vld [vmem:[%s3 + $0x360] sm:$0xff]
  %v3213 = vld [vmem:[%s3 + $0x368] sm:$0xff]
  %v3214 = vld [vmem:[%s3 + $0x370] sm:$0xff]
  %v3215 = vld [vmem:[%s3 + $0x378] sm:$0xff]
  %v3216 = vld [vmem:[%s3 + $0x380] sm:$0xff]
  %v3217 = vld [vmem:[%s3 + $0x388] sm:$0xff]
  %v3218 = vld [vmem:[%s3 + $0x390] sm:$0xff]
  %v3219 = vld [vmem:[%s3 + $0x398] sm:$0xff]
  %v3220 = vld [vmem:[%s3 + $0x3a0] sm:$0xff]
  %v3221 = vld [vmem:[%s3 + $0x3a8] sm:$0xff]
  %v3222 = vld [vmem:[%s3 + $0x3b0] sm:$0xff]
  %v3223 = vld [vmem:[%s3 + $0x3b8] sm:$0xff]
  %v3224 = vld [vmem:[%s3 + $0x3c0] sm:$0xff]
  %v3225 = vld [vmem:[%s3 + $0x3c8] sm:$0xff]
  %v3226 = vld [vmem:[%s3 + $0x3d0] sm:$0xff]
  %v3227 = vld [vmem:[%s3 + $0x3d8] sm:$0xff]
  %v3228 = vld [vmem:[%s3 + $0x3e0] sm:$0xff]
  %v3229 = vld [vmem:[%s3 + $0x3e8] sm:$0xff]
  %v3230 = vld [vmem:[%s3 + $0x3f0] sm:$0xff]
  %v3231 = vld [vmem:[%s3 + $0x3f8] sm:$0xff]
  %v3232 = vld [vmem:[%s3 + $0x400] sm:$0xff]
  %v3233 = vld [vmem:[%s3 + $0x408] sm:$0xff]
  %v3234 = vld [vmem:[%s3 + $0x410] sm:$0xff]
  %v3235 = vld [vmem:[%s3 + $0x418] sm:$0xff]
  %v3236 = vld [vmem:[%s3 + $0x420] sm:$0xff]
  %v3237 = vld [vmem:[%s3 + $0x428] sm:$0xff]
  %v3238 = vld [vmem:[%s3 + $0x430] sm:$0xff]
  %v3239 = vld [vmem:[%s3 + $0x438] sm:$0xff]
  %v3240 = vld [vmem:[%s3 + $0x440] sm:$0xff]
  %v3241 = vld [vmem:[%s3 + $0x448] sm:$0xff]
  %v3242 = vld [vmem:[%s3 + $0x450] sm:$0xff]
  %v3243 = vld [vmem:[%s3 + $0x458] sm:$0xff]
  %v3244 = vld [vmem:[%s3 + $0x460] sm:$0xff]
  %v3245 = vld [vmem:[%s3 + $0x468] sm:$0xff]
  %v3246 = vld [vmem:[%s3 + $0x470] sm:$0xff]
  %v3247 = vld [vmem:[%s3 + $0x478] sm:$0xff]
  %v3248 = vld [vmem:[%s3 + $0x480] sm:$0xff]
  %v3249 = vld [vmem:[%s3 + $0x488] sm:$0xff]
  %v3250 = vld [vmem:[%s3 + $0x490] sm:$0xff]
  %v3251 = vld [vmem:[%s3 + $0x498] sm:$0xff]
  %v3252 = vld [vmem:[%s3 + $0x4a0] sm:$0xff]
  %v3253 = vld [vmem:[%s3 + $0x4a8] sm:$0xff]
  %v3254 = vld [vmem:[%s3 + $0x4b0] sm:$0xff]
  %v3255 = vld [vmem:[%s3 + $0x4b8] sm:$0xff]
  %v3256 = vld [vmem:[%s3 + $0x4c0] sm:$0xff]
  %v3257 = vld [vmem:[%s3 + $0x4c8] sm:$0xff]
  %v3258 = vld [vmem:[%s3 + $0x4d0] sm:$0xff]
  %v3259 = vld [vmem:[%s3 + $0x4d8] sm:$0xff]
  %v3260 = vld [vmem:[%s3 + $0x4e0] sm:$0xff]
  %v3261 = vld [vmem:[%s3 + $0x4e8] sm:$0xff]
  %v3262 = vld [vmem:[%s3 + $0x4f0] sm:$0xff]
  %v3263 = vld [vmem:[%s3 + $0x4f8] sm:$0xff]
  %v3264 = vld [vmem:[%s3 + $0x500] sm:$0xff]
  %v3265 = vld [vmem:[%s3 + $0x508] sm:$0xff]
  %v3266 = vld [vmem:[%s3 + $0x510] sm:$0xff]
  %v3267 = vld [vmem:[%s3 + $0x518] sm:$0xff]
  %v3268 = vld [vmem:[%s3 + $0x520] sm:$0xff]
  %v3269 = vld [vmem:[%s3 + $0x528] sm:$0xff]
  %v3270 = vld [vmem:[%s3 + $0x530] sm:$0xff]
  %v3271 = vld [vmem:[%s3 + $0x538] sm:$0xff]
  %v3272 = vld [vmem:[%s3 + $0x540] sm:$0xff]
  %v3273 = vld [vmem:[%s3 + $0x548] sm:$0xff]
  %v3274 = vld [vmem:[%s3 + $0x550] sm:$0xff]
  %v3275 = vld [vmem:[%s3 + $0x558] sm:$0xff]
  %v3276 = vld [vmem:[%s3 + $0x560] sm:$0xff]
  %v3277 = vld [vmem:[%s3 + $0x568] sm:$0xff]
  %v3278 = vld [vmem:[%s3 + $0x570] sm:$0xff]
  %v3279 = vld [vmem:[%s3 + $0x578] sm:$0xff]
  %v3280 = vld [vmem:[%s3 + $0x580] sm:$0xff]
  %v3281 = vld [vmem:[%s3 + $0x588] sm:$0xff]
  %v3282 = vld [vmem:[%s3 + $0x590] sm:$0xff]
  %v3283 = vld [vmem:[%s3 + $0x598] sm:$0xff]
  %v3284 = vld [vmem:[%s3 + $0x5a0] sm:$0xff]
  %v3285 = vld [vmem:[%s3 + $0x5a8] sm:$0xff]
  %v3286 = vld [vmem:[%s3 + $0x5b0] sm:$0xff]
  %v3287 = vld [vmem:[%s3 + $0x5b8] sm:$0xff]
  %v3288 = vld [vmem:[%s3 + $0x5c0] sm:$0xff]
  %v3289 = vld [vmem:[%s3 + $0x5c8] sm:$0xff]
  %v3290 = vld [vmem:[%s3 + $0x5d0] sm:$0xff]
  %v3291 = vld [vmem:[%s3 + $0x5d8] sm:$0xff]
  %v3292 = vld [vmem:[%s3 + $0x5e0] sm:$0xff]
  %v3293 = vld [vmem:[%s3 + $0x5e8] sm:$0xff]
  %v3294 = vld [vmem:[%s3 + $0x5f0] sm:$0xff]
  %v3295 = vld [vmem:[%s3 + $0x5f8] sm:$0xff]
  %v3296 = vld [vmem:[%s3 + $0x600] sm:$0xff]
  %v3297 = vld [vmem:[%s3 + $0x608] sm:$0xff]
  %v3298 = vld [vmem:[%s3 + $0x610] sm:$0xff]
  %v3299 = vld [vmem:[%s3 + $0x618] sm:$0xff]
  %v3300 = vld [vmem:[%s3 + $0x620] sm:$0xff]
  %v3301 = vld [vmem:[%s3 + $0x628] sm:$0xff]
  %v3302 = vld [vmem:[%s3 + $0x630] sm:$0xff]
  %v3303 = vld [vmem:[%s3 + $0x638] sm:$0xff]
  %v3304 = vld [vmem:[%s3 + $0x640] sm:$0xff]
  %v3305 = vld [vmem:[%s3 + $0x648] sm:$0xff]
  %v3306 = vld [vmem:[%s3 + $0x650] sm:$0xff]
  %v3307 = vld [vmem:[%s3 + $0x658] sm:$0xff]
  %v3308 = vld [vmem:[%s3 + $0x660] sm:$0xff]
  %v3309 = vld [vmem:[%s3 + $0x668] sm:$0xff]
  %v3310 = vld [vmem:[%s3 + $0x670] sm:$0xff]
  %v3311 = vld [vmem:[%s3 + $0x678] sm:$0xff]
  %v3312 = vld [vmem:[%s3 + $0x680] sm:$0xff]
  %v3313 = vld [vmem:[%s3 + $0x688] sm:$0xff]
  %v3314 = vld [vmem:[%s3 + $0x690] sm:$0xff]
  %v3315 = vld [vmem:[%s3 + $0x698] sm:$0xff]
  %v3316 = vld [vmem:[%s3 + $0x6a0] sm:$0xff]
  %v3317 = vld [vmem:[%s3 + $0x6a8] sm:$0xff]
  %v3318 = vld [vmem:[%s3 + $0x6b0] sm:$0xff]
  %v3319 = vld [vmem:[%s3 + $0x6b8] sm:$0xff]
  %v3320 = vld [vmem:[%s3 + $0x6c0] sm:$0xff]
  %v3321 = vld [vmem:[%s3 + $0x6c8] sm:$0xff]
  %v3322 = vld [vmem:[%s3 + $0x6d0] sm:$0xff]
  %v3323 = vld [vmem:[%s3 + $0x6d8] sm:$0xff]
  %v3324 = vld [vmem:[%s3 + $0x6e0] sm:$0xff]
  %v3325 = vld [vmem:[%s3 + $0x6e8] sm:$0xff]
  %v3326 = vld [vmem:[%s3 + $0x6f0] sm:$0xff]
  %v3327 = vld [vmem:[%s3 + $0x6f8] sm:$0xff]
  %v3328 = vld [vmem:[%s3 + $0x700] sm:$0xff]
  %v3329 = vld [vmem:[%s3 + $0x708] sm:$0xff]
  %v3330 = vld [vmem:[%s3 + $0x710] sm:$0xff]
  %v3331 = vld [vmem:[%s3 + $0x718] sm:$0xff]
  %v3332 = vld [vmem:[%s3 + $0x720] sm:$0xff]
  %v3333 = vld [vmem:[%s3 + $0x728] sm:$0xff]
  %v3334 = vld [vmem:[%s3 + $0x730] sm:$0xff]
  %v3335 = vld [vmem:[%s3 + $0x738] sm:$0xff]
  %v3336 = vld [vmem:[%s3 + $0x740] sm:$0xff]
  %v3337 = vld [vmem:[%s3 + $0x748] sm:$0xff]
  %v3338 = vld [vmem:[%s3 + $0x750] sm:$0xff]
  %v3339 = vld [vmem:[%s3 + $0x758] sm:$0xff]
  %v3340 = vld [vmem:[%s3 + $0x760] sm:$0xff]
  %v3341 = vld [vmem:[%s3 + $0x768] sm:$0xff]
  %v3342 = vld [vmem:[%s3 + $0x770] sm:$0xff]
  %v3343 = vld [vmem:[%s3 + $0x778] sm:$0xff]
  %v3344 = vld [vmem:[%s3 + $0x780] sm:$0xff]
  %v3345 = vld [vmem:[%s3 + $0x788] sm:$0xff]
  %v3346 = vld [vmem:[%s3 + $0x790] sm:$0xff]
  %v3347 = vld [vmem:[%s3 + $0x798] sm:$0xff]
  %v3348 = vld [vmem:[%s3 + $0x7a0] sm:$0xff]
  %v3349 = vld [vmem:[%s3 + $0x7a8] sm:$0xff]
  %v3350 = vld [vmem:[%s3 + $0x7b0] sm:$0xff]
  %v3351 = vld [vmem:[%s3 + $0x7b8] sm:$0xff]
  %v3352 = vld [vmem:[%s3 + $0x7c0] sm:$0xff]
  %v3353 = vld [vmem:[%s3 + $0x7c8] sm:$0xff]
  %v3354 = vld [vmem:[%s3 + $0x7d0] sm:$0xff]
  %v3355 = vld [vmem:[%s3 + $0x7d8] sm:$0xff]
  %v3356 = vld [vmem:[%s3 + $0x7e0] sm:$0xff]
  %v3357 = vld [vmem:[%s3 + $0x7e8] sm:$0xff]
  %v3358 = vld [vmem:[%s3 + $0x7f0] sm:$0xff]
  %v3359 = vld [vmem:[%s3 + $0x7f8] sm:$0xff]
  %v3360 = vld [vmem:[%s4] sm:$0xf]
  %v3362 = vlaneseq
  %v3363 = vshrl.u32 %v3362, 7
  %v3364 = vsub.s32 0, %v3363
  %v3365 = vrot.slane %v3360, %v3364
  %v3366 = vlaneseq
  %v3367 = vshrl.u32 %v3366, 7
  %v3368 = vsub.s32 1, %v3367
  %v3369 = vrot.slane %v3360, %v3368
  %v3370 = vlaneseq
  %v3371 = vshrl.u32 %v3370, 7
  %v3372 = vsub.s32 2, %v3371
  %v3373 = vrot.slane %v3360, %v3372
  %v3374 = vlaneseq
  %v3375 = vshrl.u32 %v3374, 7
  %v3376 = vsub.s32 3, %v3375
  %v3377 = vrot.slane %v3360, %v3376
  %v3638 = vunpack.c.l.b16 %v3104
  %v3639 = vunpack.c.h.b16 %v3104
  %v3640 = vunpack.c.l.b16 %v3105
  %v3641 = vunpack.c.h.b16 %v3105
  %v3642 = vunpack.c.l.b16 %v3106
  %v3643 = vunpack.c.h.b16 %v3106
  %v3644 = vunpack.c.l.b16 %v3107
  %v3645 = vunpack.c.h.b16 %v3107
  %v3646 = vunpack.c.l.b16 %v3108
  %v3647 = vunpack.c.h.b16 %v3108
  %v3648 = vunpack.c.l.b16 %v3109
  %v3649 = vunpack.c.h.b16 %v3109
  %v3650 = vunpack.c.l.b16 %v3110
  %v3651 = vunpack.c.h.b16 %v3110
  %v3652 = vunpack.c.l.b16 %v3111
  %v3653 = vunpack.c.h.b16 %v3111
  %v3654 = vunpack.c.l.b16 %v3112
  %v3655 = vunpack.c.h.b16 %v3112
  %v3656 = vunpack.c.l.b16 %v3113
  %v3657 = vunpack.c.h.b16 %v3113
  %v3658 = vunpack.c.l.b16 %v3114
  %v3659 = vunpack.c.h.b16 %v3114
  %v3660 = vunpack.c.l.b16 %v3115
  %v3661 = vunpack.c.h.b16 %v3115
  %v3662 = vunpack.c.l.b16 %v3116
  %v3663 = vunpack.c.h.b16 %v3116
  %v3664 = vunpack.c.l.b16 %v3117
  %v3665 = vunpack.c.h.b16 %v3117
  %v3666 = vunpack.c.l.b16 %v3118
  %v3667 = vunpack.c.h.b16 %v3118
  %v3668 = vunpack.c.l.b16 %v3119
  %v3669 = vunpack.c.h.b16 %v3119
  %v3670 = vunpack.c.l.b16 %v3120
  %v3671 = vunpack.c.h.b16 %v3120
  %v3672 = vunpack.c.l.b16 %v3121
  %v3673 = vunpack.c.h.b16 %v3121
  %v3674 = vunpack.c.l.b16 %v3122
  %v3675 = vunpack.c.h.b16 %v3122
  %v3676 = vunpack.c.l.b16 %v3123
  %v3677 = vunpack.c.h.b16 %v3123
  %v3678 = vunpack.c.l.b16 %v3124
  %v3679 = vunpack.c.h.b16 %v3124
  %v3680 = vunpack.c.l.b16 %v3125
  %v3681 = vunpack.c.h.b16 %v3125
  %v3682 = vunpack.c.l.b16 %v3126
  %v3683 = vunpack.c.h.b16 %v3126
  %v3684 = vunpack.c.l.b16 %v3127
  %v3685 = vunpack.c.h.b16 %v3127
  %v3686 = vunpack.c.l.b16 %v3128
  %v3687 = vunpack.c.h.b16 %v3128
  %v3688 = vunpack.c.l.b16 %v3129
  %v3689 = vunpack.c.h.b16 %v3129
  %v3690 = vunpack.c.l.b16 %v3130
  %v3691 = vunpack.c.h.b16 %v3130
  %v3692 = vunpack.c.l.b16 %v3131
  %v3693 = vunpack.c.h.b16 %v3131
  %v3694 = vunpack.c.l.b16 %v3132
  %v3695 = vunpack.c.h.b16 %v3132
  %v3696 = vunpack.c.l.b16 %v3133
  %v3697 = vunpack.c.h.b16 %v3133
  %v3698 = vunpack.c.l.b16 %v3134
  %v3699 = vunpack.c.h.b16 %v3134
  %v3700 = vunpack.c.l.b16 %v3135
  %v3701 = vunpack.c.h.b16 %v3135
  %v3702 = vunpack.c.l.b16 %v3136
  %v3703 = vunpack.c.h.b16 %v3136
  %v3704 = vunpack.c.l.b16 %v3137
  %v3705 = vunpack.c.h.b16 %v3137
  %v3706 = vunpack.c.l.b16 %v3138
  %v3707 = vunpack.c.h.b16 %v3138
  %v3708 = vunpack.c.l.b16 %v3139
  %v3709 = vunpack.c.h.b16 %v3139
  %v3710 = vunpack.c.l.b16 %v3140
  %v3711 = vunpack.c.h.b16 %v3140
  %v3712 = vunpack.c.l.b16 %v3141
  %v3713 = vunpack.c.h.b16 %v3141
  %v3714 = vunpack.c.l.b16 %v3142
  %v3715 = vunpack.c.h.b16 %v3142
  %v3716 = vunpack.c.l.b16 %v3143
  %v3717 = vunpack.c.h.b16 %v3143
  %v3718 = vunpack.c.l.b16 %v3144
  %v3719 = vunpack.c.h.b16 %v3144
  %v3720 = vunpack.c.l.b16 %v3145
  %v3721 = vunpack.c.h.b16 %v3145
  %v3722 = vunpack.c.l.b16 %v3146
  %v3723 = vunpack.c.h.b16 %v3146
  %v3724 = vunpack.c.l.b16 %v3147
  %v3725 = vunpack.c.h.b16 %v3147
  %v3726 = vunpack.c.l.b16 %v3148
  %v3727 = vunpack.c.h.b16 %v3148
  %v3728 = vunpack.c.l.b16 %v3149
  %v3729 = vunpack.c.h.b16 %v3149
  %v3730 = vunpack.c.l.b16 %v3150
  %v3731 = vunpack.c.h.b16 %v3150
  %v3732 = vunpack.c.l.b16 %v3151
  %v3733 = vunpack.c.h.b16 %v3151
  %v3734 = vunpack.c.l.b16 %v3152
  %v3735 = vunpack.c.h.b16 %v3152
  %v3736 = vunpack.c.l.b16 %v3153
  %v3737 = vunpack.c.h.b16 %v3153
  %v3738 = vunpack.c.l.b16 %v3154
  %v3739 = vunpack.c.h.b16 %v3154
  %v3740 = vunpack.c.l.b16 %v3155
  %v3741 = vunpack.c.h.b16 %v3155
  %v3742 = vunpack.c.l.b16 %v3156
  %v3743 = vunpack.c.h.b16 %v3156
  %v3744 = vunpack.c.l.b16 %v3157
  %v3745 = vunpack.c.h.b16 %v3157
  %v3746 = vunpack.c.l.b16 %v3158
  %v3747 = vunpack.c.h.b16 %v3158
  %v3748 = vunpack.c.l.b16 %v3159
  %v3749 = vunpack.c.h.b16 %v3159
  %v3750 = vunpack.c.l.b16 %v3160
  %v3751 = vunpack.c.h.b16 %v3160
  %v3752 = vunpack.c.l.b16 %v3161
  %v3753 = vunpack.c.h.b16 %v3161
  %v3754 = vunpack.c.l.b16 %v3162
  %v3755 = vunpack.c.h.b16 %v3162
  %v3756 = vunpack.c.l.b16 %v3163
  %v3757 = vunpack.c.h.b16 %v3163
  %v3758 = vunpack.c.l.b16 %v3164
  %v3759 = vunpack.c.h.b16 %v3164
  %v3760 = vunpack.c.l.b16 %v3165
  %v3761 = vunpack.c.h.b16 %v3165
  %v3762 = vunpack.c.l.b16 %v3166
  %v3763 = vunpack.c.h.b16 %v3166
  %v3764 = vunpack.c.l.b16 %v3167
  %v3765 = vunpack.c.h.b16 %v3167
  %v3766 = vunpack.c.l.b16 %v3168
  %v3767 = vunpack.c.h.b16 %v3168
  %v3768 = vunpack.c.l.b16 %v3169
  %v3769 = vunpack.c.h.b16 %v3169
  %v3770 = vunpack.c.l.b16 %v3170
  %v3771 = vunpack.c.h.b16 %v3170
  %v3772 = vunpack.c.l.b16 %v3171
  %v3773 = vunpack.c.h.b16 %v3171
  %v3774 = vunpack.c.l.b16 %v3172
  %v3775 = vunpack.c.h.b16 %v3172
  %v3776 = vunpack.c.l.b16 %v3173
  %v3777 = vunpack.c.h.b16 %v3173
  %v3778 = vunpack.c.l.b16 %v3174
  %v3779 = vunpack.c.h.b16 %v3174
  %v3780 = vunpack.c.l.b16 %v3175
  %v3781 = vunpack.c.h.b16 %v3175
  %v3782 = vunpack.c.l.b16 %v3176
  %v3783 = vunpack.c.h.b16 %v3176
  %v3784 = vunpack.c.l.b16 %v3177
  %v3785 = vunpack.c.h.b16 %v3177
  %v3786 = vunpack.c.l.b16 %v3178
  %v3787 = vunpack.c.h.b16 %v3178
  %v3788 = vunpack.c.l.b16 %v3179
  %v3789 = vunpack.c.h.b16 %v3179
  %v3790 = vunpack.c.l.b16 %v3180
  %v3791 = vunpack.c.h.b16 %v3180
  %v3792 = vunpack.c.l.b16 %v3181
  %v3793 = vunpack.c.h.b16 %v3181
  %v3794 = vunpack.c.l.b16 %v3182
  %v3795 = vunpack.c.h.b16 %v3182
  %v3796 = vunpack.c.l.b16 %v3183
  %v3797 = vunpack.c.h.b16 %v3183
  %v3798 = vunpack.c.l.b16 %v3184
  %v3799 = vunpack.c.h.b16 %v3184
  %v3800 = vunpack.c.l.b16 %v3185
  %v3801 = vunpack.c.h.b16 %v3185
  %v3802 = vunpack.c.l.b16 %v3186
  %v3803 = vunpack.c.h.b16 %v3186
  %v3804 = vunpack.c.l.b16 %v3187
  %v3805 = vunpack.c.h.b16 %v3187
  %v3806 = vunpack.c.l.b16 %v3188
  %v3807 = vunpack.c.h.b16 %v3188
  %v3808 = vunpack.c.l.b16 %v3189
  %v3809 = vunpack.c.h.b16 %v3189
  %v3810 = vunpack.c.l.b16 %v3190
  %v3811 = vunpack.c.h.b16 %v3190
  %v3812 = vunpack.c.l.b16 %v3191
  %v3813 = vunpack.c.h.b16 %v3191
  %v3814 = vunpack.c.l.b16 %v3192
  %v3815 = vunpack.c.h.b16 %v3192
  %v3816 = vunpack.c.l.b16 %v3193
  %v3817 = vunpack.c.h.b16 %v3193
  %v3818 = vunpack.c.l.b16 %v3194
  %v3819 = vunpack.c.h.b16 %v3194
  %v3820 = vunpack.c.l.b16 %v3195
  %v3821 = vunpack.c.h.b16 %v3195
  %v3822 = vunpack.c.l.b16 %v3196
  %v3823 = vunpack.c.h.b16 %v3196
  %v3824 = vunpack.c.l.b16 %v3197
  %v3825 = vunpack.c.h.b16 %v3197
  %v3826 = vunpack.c.l.b16 %v3198
  %v3827 = vunpack.c.h.b16 %v3198
  %v3828 = vunpack.c.l.b16 %v3199
  %v3829 = vunpack.c.h.b16 %v3199
  %v3830 = vunpack.c.l.b16 %v3200
  %v3831 = vunpack.c.h.b16 %v3200
  %v3832 = vunpack.c.l.b16 %v3201
  %v3833 = vunpack.c.h.b16 %v3201
  %v3834 = vunpack.c.l.b16 %v3202
  %v3835 = vunpack.c.h.b16 %v3202
  %v3836 = vunpack.c.l.b16 %v3203
  %v3837 = vunpack.c.h.b16 %v3203
  %v3838 = vunpack.c.l.b16 %v3204
  %v3839 = vunpack.c.h.b16 %v3204
  %v3840 = vunpack.c.l.b16 %v3205
  %v3841 = vunpack.c.h.b16 %v3205
  %v3842 = vunpack.c.l.b16 %v3206
  %v3843 = vunpack.c.h.b16 %v3206
  %v3844 = vunpack.c.l.b16 %v3207
  %v3845 = vunpack.c.h.b16 %v3207
  %v3846 = vunpack.c.l.b16 %v3208
  %v3847 = vunpack.c.h.b16 %v3208
  %v3848 = vunpack.c.l.b16 %v3209
  %v3849 = vunpack.c.h.b16 %v3209
  %v3850 = vunpack.c.l.b16 %v3210
  %v3851 = vunpack.c.h.b16 %v3210
  %v3852 = vunpack.c.l.b16 %v3211
  %v3853 = vunpack.c.h.b16 %v3211
  %v3854 = vunpack.c.l.b16 %v3212
  %v3855 = vunpack.c.h.b16 %v3212
  %v3856 = vunpack.c.l.b16 %v3213
  %v3857 = vunpack.c.h.b16 %v3213
  %v3858 = vunpack.c.l.b16 %v3214
  %v3859 = vunpack.c.h.b16 %v3214
  %v3860 = vunpack.c.l.b16 %v3215
  %v3861 = vunpack.c.h.b16 %v3215
  %v3862 = vunpack.c.l.b16 %v3216
  %v3863 = vunpack.c.h.b16 %v3216
  %v3864 = vunpack.c.l.b16 %v3217
  %v3865 = vunpack.c.h.b16 %v3217
  %v3866 = vunpack.c.l.b16 %v3218
  %v3867 = vunpack.c.h.b16 %v3218
  %v3868 = vunpack.c.l.b16 %v3219
  %v3869 = vunpack.c.h.b16 %v3219
  %v3870 = vunpack.c.l.b16 %v3220
  %v3871 = vunpack.c.h.b16 %v3220
  %v3872 = vunpack.c.l.b16 %v3221
  %v3873 = vunpack.c.h.b16 %v3221
  %v3874 = vunpack.c.l.b16 %v3222
  %v3875 = vunpack.c.h.b16 %v3222
  %v3876 = vunpack.c.l.b16 %v3223
  %v3877 = vunpack.c.h.b16 %v3223
  %v3878 = vunpack.c.l.b16 %v3224
  %v3879 = vunpack.c.h.b16 %v3224
  %v3880 = vunpack.c.l.b16 %v3225
  %v3881 = vunpack.c.h.b16 %v3225
  %v3882 = vunpack.c.l.b16 %v3226
  %v3883 = vunpack.c.h.b16 %v3226
  %v3884 = vunpack.c.l.b16 %v3227
  %v3885 = vunpack.c.h.b16 %v3227
  %v3886 = vunpack.c.l.b16 %v3228
  %v3887 = vunpack.c.h.b16 %v3228
  %v3888 = vunpack.c.l.b16 %v3229
  %v3889 = vunpack.c.h.b16 %v3229
  %v3890 = vunpack.c.l.b16 %v3230
  %v3891 = vunpack.c.h.b16 %v3230
  %v3892 = vunpack.c.l.b16 %v3231
  %v3893 = vunpack.c.h.b16 %v3231
  %v3894 = vunpack.c.l.b16 %v3232
  %v3895 = vunpack.c.h.b16 %v3232
  %v3896 = vunpack.c.l.b16 %v3233
  %v3897 = vunpack.c.h.b16 %v3233
  %v3898 = vunpack.c.l.b16 %v3234
  %v3899 = vunpack.c.h.b16 %v3234
  %v3900 = vunpack.c.l.b16 %v3235
  %v3901 = vunpack.c.h.b16 %v3235
  %v3902 = vunpack.c.l.b16 %v3236
  %v3903 = vunpack.c.h.b16 %v3236
  %v3904 = vunpack.c.l.b16 %v3237
  %v3905 = vunpack.c.h.b16 %v3237
  %v3906 = vunpack.c.l.b16 %v3238
  %v3907 = vunpack.c.h.b16 %v3238
  %v3908 = vunpack.c.l.b16 %v3239
  %v3909 = vunpack.c.h.b16 %v3239
  %v3910 = vunpack.c.l.b16 %v3240
  %v3911 = vunpack.c.h.b16 %v3240
  %v3912 = vunpack.c.l.b16 %v3241
  %v3913 = vunpack.c.h.b16 %v3241
  %v3914 = vunpack.c.l.b16 %v3242
  %v3915 = vunpack.c.h.b16 %v3242
  %v3916 = vunpack.c.l.b16 %v3243
  %v3917 = vunpack.c.h.b16 %v3243
  %v3918 = vunpack.c.l.b16 %v3244
  %v3919 = vunpack.c.h.b16 %v3244
  %v3920 = vunpack.c.l.b16 %v3245
  %v3921 = vunpack.c.h.b16 %v3245
  %v3922 = vunpack.c.l.b16 %v3246
  %v3923 = vunpack.c.h.b16 %v3246
  %v3924 = vunpack.c.l.b16 %v3247
  %v3925 = vunpack.c.h.b16 %v3247
  %v3926 = vunpack.c.l.b16 %v3248
  %v3927 = vunpack.c.h.b16 %v3248
  %v3928 = vunpack.c.l.b16 %v3249
  %v3929 = vunpack.c.h.b16 %v3249
  %v3930 = vunpack.c.l.b16 %v3250
  %v3931 = vunpack.c.h.b16 %v3250
  %v3932 = vunpack.c.l.b16 %v3251
  %v3933 = vunpack.c.h.b16 %v3251
  %v3934 = vunpack.c.l.b16 %v3252
  %v3935 = vunpack.c.h.b16 %v3252
  %v3936 = vunpack.c.l.b16 %v3253
  %v3937 = vunpack.c.h.b16 %v3253
  %v3938 = vunpack.c.l.b16 %v3254
  %v3939 = vunpack.c.h.b16 %v3254
  %v3940 = vunpack.c.l.b16 %v3255
  %v3941 = vunpack.c.h.b16 %v3255
  %v3942 = vunpack.c.l.b16 %v3256
  %v3943 = vunpack.c.h.b16 %v3256
  %v3944 = vunpack.c.l.b16 %v3257
  %v3945 = vunpack.c.h.b16 %v3257
  %v3946 = vunpack.c.l.b16 %v3258
  %v3947 = vunpack.c.h.b16 %v3258
  %v3948 = vunpack.c.l.b16 %v3259
  %v3949 = vunpack.c.h.b16 %v3259
  %v3950 = vunpack.c.l.b16 %v3260
  %v3951 = vunpack.c.h.b16 %v3260
  %v3952 = vunpack.c.l.b16 %v3261
  %v3953 = vunpack.c.h.b16 %v3261
  %v3954 = vunpack.c.l.b16 %v3262
  %v3955 = vunpack.c.h.b16 %v3262
  %v3956 = vunpack.c.l.b16 %v3263
  %v3957 = vunpack.c.h.b16 %v3263
  %v3958 = vunpack.c.l.b16 %v3264
  %v3959 = vunpack.c.h.b16 %v3264
  %v3960 = vunpack.c.l.b16 %v3265
  %v3961 = vunpack.c.h.b16 %v3265
  %v3962 = vunpack.c.l.b16 %v3266
  %v3963 = vunpack.c.h.b16 %v3266
  %v3964 = vunpack.c.l.b16 %v3267
  %v3965 = vunpack.c.h.b16 %v3267
  %v3966 = vunpack.c.l.b16 %v3268
  %v3967 = vunpack.c.h.b16 %v3268
  %v3968 = vunpack.c.l.b16 %v3269
  %v3969 = vunpack.c.h.b16 %v3269
  %v3970 = vunpack.c.l.b16 %v3270
  %v3971 = vunpack.c.h.b16 %v3270
  %v3972 = vunpack.c.l.b16 %v3271
  %v3973 = vunpack.c.h.b16 %v3271
  %v3974 = vunpack.c.l.b16 %v3272
  %v3975 = vunpack.c.h.b16 %v3272
  %v3976 = vunpack.c.l.b16 %v3273
  %v3977 = vunpack.c.h.b16 %v3273
  %v3978 = vunpack.c.l.b16 %v3274
  %v3979 = vunpack.c.h.b16 %v3274
  %v3980 = vunpack.c.l.b16 %v3275
  %v3981 = vunpack.c.h.b16 %v3275
  %v3982 = vunpack.c.l.b16 %v3276
  %v3983 = vunpack.c.h.b16 %v3276
  %v3984 = vunpack.c.l.b16 %v3277
  %v3985 = vunpack.c.h.b16 %v3277
  %v3986 = vunpack.c.l.b16 %v3278
  %v3987 = vunpack.c.h.b16 %v3278
  %v3988 = vunpack.c.l.b16 %v3279
  %v3989 = vunpack.c.h.b16 %v3279
  %v3990 = vunpack.c.l.b16 %v3280
  %v3991 = vunpack.c.h.b16 %v3280
  %v3992 = vunpack.c.l.b16 %v3281
  %v3993 = vunpack.c.h.b16 %v3281
  %v3994 = vunpack.c.l.b16 %v3282
  %v3995 = vunpack.c.h.b16 %v3282
  %v3996 = vunpack.c.l.b16 %v3283
  %v3997 = vunpack.c.h.b16 %v3283
  %v3998 = vunpack.c.l.b16 %v3284
  %v3999 = vunpack.c.h.b16 %v3284
  %v4000 = vunpack.c.l.b16 %v3285
  %v4001 = vunpack.c.h.b16 %v3285
  %v4002 = vunpack.c.l.b16 %v3286
  %v4003 = vunpack.c.h.b16 %v3286
  %v4004 = vunpack.c.l.b16 %v3287
  %v4005 = vunpack.c.h.b16 %v3287
  %v4006 = vunpack.c.l.b16 %v3288
  %v4007 = vunpack.c.h.b16 %v3288
  %v4008 = vunpack.c.l.b16 %v3289
  %v4009 = vunpack.c.h.b16 %v3289
  %v4010 = vunpack.c.l.b16 %v3290
  %v4011 = vunpack.c.h.b16 %v3290
  %v4012 = vunpack.c.l.b16 %v3291
  %v4013 = vunpack.c.h.b16 %v3291
  %v4014 = vunpack.c.l.b16 %v3292
  %v4015 = vunpack.c.h.b16 %v3292
  %v4016 = vunpack.c.l.b16 %v3293
  %v4017 = vunpack.c.h.b16 %v3293
  %v4018 = vunpack.c.l.b16 %v3294
  %v4019 = vunpack.c.h.b16 %v3294
  %v4020 = vunpack.c.l.b16 %v3295
  %v4021 = vunpack.c.h.b16 %v3295
  %v4022 = vunpack.c.l.b16 %v3296
  %v4023 = vunpack.c.h.b16 %v3296
  %v4024 = vunpack.c.l.b16 %v3297
  %v4025 = vunpack.c.h.b16 %v3297
  %v4026 = vunpack.c.l.b16 %v3298
  %v4027 = vunpack.c.h.b16 %v3298
  %v4028 = vunpack.c.l.b16 %v3299
  %v4029 = vunpack.c.h.b16 %v3299
  %v4030 = vunpack.c.l.b16 %v3300
  %v4031 = vunpack.c.h.b16 %v3300
  %v4032 = vunpack.c.l.b16 %v3301
  %v4033 = vunpack.c.h.b16 %v3301
  %v4034 = vunpack.c.l.b16 %v3302
  %v4035 = vunpack.c.h.b16 %v3302
  %v4036 = vunpack.c.l.b16 %v3303
  %v4037 = vunpack.c.h.b16 %v3303
  %v4038 = vunpack.c.l.b16 %v3304
  %v4039 = vunpack.c.h.b16 %v3304
  %v4040 = vunpack.c.l.b16 %v3305
  %v4041 = vunpack.c.h.b16 %v3305
  %v4042 = vunpack.c.l.b16 %v3306
  %v4043 = vunpack.c.h.b16 %v3306
  %v4044 = vunpack.c.l.b16 %v3307
  %v4045 = vunpack.c.h.b16 %v3307
  %v4046 = vunpack.c.l.b16 %v3308
  %v4047 = vunpack.c.h.b16 %v3308
  %v4048 = vunpack.c.l.b16 %v3309
  %v4049 = vunpack.c.h.b16 %v3309
  %v4050 = vunpack.c.l.b16 %v3310
  %v4051 = vunpack.c.h.b16 %v3310
  %v4052 = vunpack.c.l.b16 %v3311
  %v4053 = vunpack.c.h.b16 %v3311
  %v4054 = vunpack.c.l.b16 %v3312
  %v4055 = vunpack.c.h.b16 %v3312
  %v4056 = vunpack.c.l.b16 %v3313
  %v4057 = vunpack.c.h.b16 %v3313
  %v4058 = vunpack.c.l.b16 %v3314
  %v4059 = vunpack.c.h.b16 %v3314
  %v4060 = vunpack.c.l.b16 %v3315
  %v4061 = vunpack.c.h.b16 %v3315
  %v4062 = vunpack.c.l.b16 %v3316
  %v4063 = vunpack.c.h.b16 %v3316
  %v4064 = vunpack.c.l.b16 %v3317
  %v4065 = vunpack.c.h.b16 %v3317
  %v4066 = vunpack.c.l.b16 %v3318
  %v4067 = vunpack.c.h.b16 %v3318
  %v4068 = vunpack.c.l.b16 %v3319
  %v4069 = vunpack.c.h.b16 %v3319
  %v4070 = vunpack.c.l.b16 %v3320
  %v4071 = vunpack.c.h.b16 %v3320
  %v4072 = vunpack.c.l.b16 %v3321
  %v4073 = vunpack.c.h.b16 %v3321
  %v4074 = vunpack.c.l.b16 %v3322
  %v4075 = vunpack.c.h.b16 %v3322
  %v4076 = vunpack.c.l.b16 %v3323
  %v4077 = vunpack.c.h.b16 %v3323
  %v4078 = vunpack.c.l.b16 %v3324
  %v4079 = vunpack.c.h.b16 %v3324
  %v4080 = vunpack.c.l.b16 %v3325
  %v4081 = vunpack.c.h.b16 %v3325
  %v4082 = vunpack.c.l.b16 %v3326
  %v4083 = vunpack.c.h.b16 %v3326
  %v4084 = vunpack.c.l.b16 %v3327
  %v4085 = vunpack.c.h.b16 %v3327
  %v4086 = vunpack.c.l.b16 %v3328
  %v4087 = vunpack.c.h.b16 %v3328
  %v4088 = vunpack.c.l.b16 %v3329
  %v4089 = vunpack.c.h.b16 %v3329
  %v4090 = vunpack.c.l.b16 %v3330
  %v4091 = vunpack.c.h.b16 %v3330
  %v4092 = vunpack.c.l.b16 %v3331
  %v4093 = vunpack.c.h.b16 %v3331
  %v4094 = vunpack.c.l.b16 %v3332
  %v4095 = vunpack.c.h.b16 %v3332
  %v4096 = vunpack.c.l.b16 %v3333
  %v4097 = vunpack.c.h.b16 %v3333
  %v4098 = vunpack.c.l.b16 %v3334
  %v4099 = vunpack.c.h.b16 %v3334
  %v4100 = vunpack.c.l.b16 %v3335
  %v4101 = vunpack.c.h.b16 %v3335
  %v4102 = vunpack.c.l.b16 %v3336
  %v4103 = vunpack.c.h.b16 %v3336
  %v4104 = vunpack.c.l.b16 %v3337
  %v4105 = vunpack.c.h.b16 %v3337
  %v4106 = vunpack.c.l.b16 %v3338
  %v4107 = vunpack.c.h.b16 %v3338
  %v4108 = vunpack.c.l.b16 %v3339
  %v4109 = vunpack.c.h.b16 %v3339
  %v4110 = vunpack.c.l.b16 %v3340
  %v4111 = vunpack.c.h.b16 %v3340
  %v4112 = vunpack.c.l.b16 %v3341
  %v4113 = vunpack.c.h.b16 %v3341
  %v4114 = vunpack.c.l.b16 %v3342
  %v4115 = vunpack.c.h.b16 %v3342
  %v4116 = vunpack.c.l.b16 %v3343
  %v4117 = vunpack.c.h.b16 %v3343
  %v4118 = vunpack.c.l.b16 %v3344
  %v4119 = vunpack.c.h.b16 %v3344
  %v4120 = vunpack.c.l.b16 %v3345
  %v4121 = vunpack.c.h.b16 %v3345
  %v4122 = vunpack.c.l.b16 %v3346
  %v4123 = vunpack.c.h.b16 %v3346
  %v4124 = vunpack.c.l.b16 %v3347
  %v4125 = vunpack.c.h.b16 %v3347
  %v4126 = vunpack.c.l.b16 %v3348
  %v4127 = vunpack.c.h.b16 %v3348
  %v4128 = vunpack.c.l.b16 %v3349
  %v4129 = vunpack.c.h.b16 %v3349
  %v4130 = vunpack.c.l.b16 %v3350
  %v4131 = vunpack.c.h.b16 %v3350
  %v4132 = vunpack.c.l.b16 %v3351
  %v4133 = vunpack.c.h.b16 %v3351
  %v4134 = vunpack.c.l.b16 %v3352
  %v4135 = vunpack.c.h.b16 %v3352
  %v4136 = vunpack.c.l.b16 %v3353
  %v4137 = vunpack.c.h.b16 %v3353
  %v4138 = vunpack.c.l.b16 %v3354
  %v4139 = vunpack.c.h.b16 %v3354
  %v4140 = vunpack.c.l.b16 %v3355
  %v4141 = vunpack.c.h.b16 %v3355
  %v4142 = vunpack.c.l.b16 %v3356
  %v4143 = vunpack.c.h.b16 %v3356
  %v4144 = vunpack.c.l.b16 %v3357
  %v4145 = vunpack.c.h.b16 %v3357
  %v4146 = vunpack.c.l.b16 %v3358
  %v4147 = vunpack.c.h.b16 %v3358
  %v4148 = vunpack.c.l.b16 %v3359
  %v4149 = vunpack.c.h.b16 %v3359
  %v4150 = vpack.c.b16 %v3642, %v3638
  %v4151 = vpack.c.b16 %v3643, %v3639
  %v4152 = vpack.c.b16 %v3644, %v3640
  %v4153 = vpack.c.b16 %v3645, %v3641
  %v4154 = vpack.c.b16 %v3650, %v3646
  %v4155 = vpack.c.b16 %v3651, %v3647
  %v4156 = vpack.c.b16 %v3652, %v3648
  %v4157 = vpack.c.b16 %v3653, %v3649
  %v4158 = vpack.c.b16 %v3658, %v3654
  %v4159 = vpack.c.b16 %v3659, %v3655
  %v4160 = vpack.c.b16 %v3660, %v3656
  %v4161 = vpack.c.b16 %v3661, %v3657
  %v4162 = vpack.c.b16 %v3666, %v3662
  %v4163 = vpack.c.b16 %v3667, %v3663
  %v4164 = vpack.c.b16 %v3668, %v3664
  %v4165 = vpack.c.b16 %v3669, %v3665
  %v4166 = vpack.c.b16 %v3674, %v3670
  %v4167 = vpack.c.b16 %v3675, %v3671
  %v4168 = vpack.c.b16 %v3676, %v3672
  %v4169 = vpack.c.b16 %v3677, %v3673
  %v4170 = vpack.c.b16 %v3682, %v3678
  %v4171 = vpack.c.b16 %v3683, %v3679
  %v4172 = vpack.c.b16 %v3684, %v3680
  %v4173 = vpack.c.b16 %v3685, %v3681
  %v4174 = vpack.c.b16 %v3690, %v3686
  %v4175 = vpack.c.b16 %v3691, %v3687
  %v4176 = vpack.c.b16 %v3692, %v3688
  %v4177 = vpack.c.b16 %v3693, %v3689
  %v4178 = vpack.c.b16 %v3698, %v3694
  %v4179 = vpack.c.b16 %v3699, %v3695
  %v4180 = vpack.c.b16 %v3700, %v3696
  %v4181 = vpack.c.b16 %v3701, %v3697
  %v4182 = vpack.c.b16 %v3706, %v3702
  %v4183 = vpack.c.b16 %v3707, %v3703
  %v4184 = vpack.c.b16 %v3708, %v3704
  %v4185 = vpack.c.b16 %v3709, %v3705
  %v4186 = vpack.c.b16 %v3714, %v3710
  %v4187 = vpack.c.b16 %v3715, %v3711
  %v4188 = vpack.c.b16 %v3716, %v3712
  %v4189 = vpack.c.b16 %v3717, %v3713
  %v4190 = vpack.c.b16 %v3722, %v3718
  %v4191 = vpack.c.b16 %v3723, %v3719
  %v4192 = vpack.c.b16 %v3724, %v3720
  %v4193 = vpack.c.b16 %v3725, %v3721
  %v4194 = vpack.c.b16 %v3730, %v3726
  %v4195 = vpack.c.b16 %v3731, %v3727
  %v4196 = vpack.c.b16 %v3732, %v3728
  %v4197 = vpack.c.b16 %v3733, %v3729
  %v4198 = vpack.c.b16 %v3738, %v3734
  %v4199 = vpack.c.b16 %v3739, %v3735
  %v4200 = vpack.c.b16 %v3740, %v3736
  %v4201 = vpack.c.b16 %v3741, %v3737
  %v4202 = vpack.c.b16 %v3746, %v3742
  %v4203 = vpack.c.b16 %v3747, %v3743
  %v4204 = vpack.c.b16 %v3748, %v3744
  %v4205 = vpack.c.b16 %v3749, %v3745
  %v4206 = vpack.c.b16 %v3754, %v3750
  %v4207 = vpack.c.b16 %v3755, %v3751
  %v4208 = vpack.c.b16 %v3756, %v3752
  %v4209 = vpack.c.b16 %v3757, %v3753
  %v4210 = vpack.c.b16 %v3762, %v3758
  %v4211 = vpack.c.b16 %v3763, %v3759
  %v4212 = vpack.c.b16 %v3764, %v3760
  %v4213 = vpack.c.b16 %v3765, %v3761
  %v4214 = vpack.c.b16 %v3770, %v3766
  %v4215 = vpack.c.b16 %v3771, %v3767
  %v4216 = vpack.c.b16 %v3772, %v3768
  %v4217 = vpack.c.b16 %v3773, %v3769
  %v4218 = vpack.c.b16 %v3778, %v3774
  %v4219 = vpack.c.b16 %v3779, %v3775
  %v4220 = vpack.c.b16 %v3780, %v3776
  %v4221 = vpack.c.b16 %v3781, %v3777
  %v4222 = vpack.c.b16 %v3786, %v3782
  %v4223 = vpack.c.b16 %v3787, %v3783
  %v4224 = vpack.c.b16 %v3788, %v3784
  %v4225 = vpack.c.b16 %v3789, %v3785
  %v4226 = vpack.c.b16 %v3794, %v3790
  %v4227 = vpack.c.b16 %v3795, %v3791
  %v4228 = vpack.c.b16 %v3796, %v3792
  %v4229 = vpack.c.b16 %v3797, %v3793
  %v4230 = vpack.c.b16 %v3802, %v3798
  %v4231 = vpack.c.b16 %v3803, %v3799
  %v4232 = vpack.c.b16 %v3804, %v3800
  %v4233 = vpack.c.b16 %v3805, %v3801
  %v4234 = vpack.c.b16 %v3810, %v3806
  %v4235 = vpack.c.b16 %v3811, %v3807
  %v4236 = vpack.c.b16 %v3812, %v3808
  %v4237 = vpack.c.b16 %v3813, %v3809
  %v4238 = vpack.c.b16 %v3818, %v3814
  %v4239 = vpack.c.b16 %v3819, %v3815
  %v4240 = vpack.c.b16 %v3820, %v3816
  %v4241 = vpack.c.b16 %v3821, %v3817
  %v4242 = vpack.c.b16 %v3826, %v3822
  %v4243 = vpack.c.b16 %v3827, %v3823
  %v4244 = vpack.c.b16 %v3828, %v3824
  %v4245 = vpack.c.b16 %v3829, %v3825
  %v4246 = vpack.c.b16 %v3834, %v3830
  %v4247 = vpack.c.b16 %v3835, %v3831
  %v4248 = vpack.c.b16 %v3836, %v3832
  %v4249 = vpack.c.b16 %v3837, %v3833
  %v4250 = vpack.c.b16 %v3842, %v3838
  %v4251 = vpack.c.b16 %v3843, %v3839
  %v4252 = vpack.c.b16 %v3844, %v3840
  %v4253 = vpack.c.b16 %v3845, %v3841
  %v4254 = vpack.c.b16 %v3850, %v3846
  %v4255 = vpack.c.b16 %v3851, %v3847
  %v4256 = vpack.c.b16 %v3852, %v3848
  %v4257 = vpack.c.b16 %v3853, %v3849
  %v4258 = vpack.c.b16 %v3858, %v3854
  %v4259 = vpack.c.b16 %v3859, %v3855
  %v4260 = vpack.c.b16 %v3860, %v3856
  %v4261 = vpack.c.b16 %v3861, %v3857
  %v4262 = vpack.c.b16 %v3866, %v3862
  %v4263 = vpack.c.b16 %v3867, %v3863
  %v4264 = vpack.c.b16 %v3868, %v3864
  %v4265 = vpack.c.b16 %v3869, %v3865
  %v4266 = vpack.c.b16 %v3874, %v3870
  %v4267 = vpack.c.b16 %v3875, %v3871
  %v4268 = vpack.c.b16 %v3876, %v3872
  %v4269 = vpack.c.b16 %v3877, %v3873
  %v4270 = vpack.c.b16 %v3882, %v3878
  %v4271 = vpack.c.b16 %v3883, %v3879
  %v4272 = vpack.c.b16 %v3884, %v3880
  %v4273 = vpack.c.b16 %v3885, %v3881
  %v4274 = vpack.c.b16 %v3890, %v3886
  %v4275 = vpack.c.b16 %v3891, %v3887
  %v4276 = vpack.c.b16 %v3892, %v3888
  %v4277 = vpack.c.b16 %v3893, %v3889
  %v4278 = vpack.c.b16 %v3898, %v3894
  %v4279 = vpack.c.b16 %v3899, %v3895
  %v4280 = vpack.c.b16 %v3900, %v3896
  %v4281 = vpack.c.b16 %v3901, %v3897
  %v4282 = vpack.c.b16 %v3906, %v3902
  %v4283 = vpack.c.b16 %v3907, %v3903
  %v4284 = vpack.c.b16 %v3908, %v3904
  %v4285 = vpack.c.b16 %v3909, %v3905
  %v4286 = vpack.c.b16 %v3914, %v3910
  %v4287 = vpack.c.b16 %v3915, %v3911
  %v4288 = vpack.c.b16 %v3916, %v3912
  %v4289 = vpack.c.b16 %v3917, %v3913
  %v4290 = vpack.c.b16 %v3922, %v3918
  %v4291 = vpack.c.b16 %v3923, %v3919
  %v4292 = vpack.c.b16 %v3924, %v3920
  %v4293 = vpack.c.b16 %v3925, %v3921
  %v4294 = vpack.c.b16 %v3930, %v3926
  %v4295 = vpack.c.b16 %v3931, %v3927
  %v4296 = vpack.c.b16 %v3932, %v3928
  %v4297 = vpack.c.b16 %v3933, %v3929
  %v4298 = vpack.c.b16 %v3938, %v3934
  %v4299 = vpack.c.b16 %v3939, %v3935
  %v4300 = vpack.c.b16 %v3940, %v3936
  %v4301 = vpack.c.b16 %v3941, %v3937
  %v4302 = vpack.c.b16 %v3946, %v3942
  %v4303 = vpack.c.b16 %v3947, %v3943
  %v4304 = vpack.c.b16 %v3948, %v3944
  %v4305 = vpack.c.b16 %v3949, %v3945
  %v4306 = vpack.c.b16 %v3954, %v3950
  %v4307 = vpack.c.b16 %v3955, %v3951
  %v4308 = vpack.c.b16 %v3956, %v3952
  %v4309 = vpack.c.b16 %v3957, %v3953
  %v4310 = vpack.c.b16 %v3962, %v3958
  %v4311 = vpack.c.b16 %v3963, %v3959
  %v4312 = vpack.c.b16 %v3964, %v3960
  %v4313 = vpack.c.b16 %v3965, %v3961
  %v4314 = vpack.c.b16 %v3970, %v3966
  %v4315 = vpack.c.b16 %v3971, %v3967
  %v4316 = vpack.c.b16 %v3972, %v3968
  %v4317 = vpack.c.b16 %v3973, %v3969
  %v4318 = vpack.c.b16 %v3978, %v3974
  %v4319 = vpack.c.b16 %v3979, %v3975
  %v4320 = vpack.c.b16 %v3980, %v3976
  %v4321 = vpack.c.b16 %v3981, %v3977
  %v4322 = vpack.c.b16 %v3986, %v3982
  %v4323 = vpack.c.b16 %v3987, %v3983
  %v4324 = vpack.c.b16 %v3988, %v3984
  %v4325 = vpack.c.b16 %v3989, %v3985
  %v4326 = vpack.c.b16 %v3994, %v3990
  %v4327 = vpack.c.b16 %v3995, %v3991
  %v4328 = vpack.c.b16 %v3996, %v3992
  %v4329 = vpack.c.b16 %v3997, %v3993
  %v4330 = vpack.c.b16 %v4002, %v3998
  %v4331 = vpack.c.b16 %v4003, %v3999
  %v4332 = vpack.c.b16 %v4004, %v4000
  %v4333 = vpack.c.b16 %v4005, %v4001
  %v4334 = vpack.c.b16 %v4010, %v4006
  %v4335 = vpack.c.b16 %v4011, %v4007
  %v4336 = vpack.c.b16 %v4012, %v4008
  %v4337 = vpack.c.b16 %v4013, %v4009
  %v4338 = vpack.c.b16 %v4018, %v4014
  %v4339 = vpack.c.b16 %v4019, %v4015
  %v4340 = vpack.c.b16 %v4020, %v4016
  %v4341 = vpack.c.b16 %v4021, %v4017
  %v4342 = vpack.c.b16 %v4026, %v4022
  %v4343 = vpack.c.b16 %v4027, %v4023
  %v4344 = vpack.c.b16 %v4028, %v4024
  %v4345 = vpack.c.b16 %v4029, %v4025
  %v4346 = vpack.c.b16 %v4034, %v4030
  %v4347 = vpack.c.b16 %v4035, %v4031
  %v4348 = vpack.c.b16 %v4036, %v4032
  %v4349 = vpack.c.b16 %v4037, %v4033
  %v4350 = vpack.c.b16 %v4042, %v4038
  %v4351 = vpack.c.b16 %v4043, %v4039
  %v4352 = vpack.c.b16 %v4044, %v4040
  %v4353 = vpack.c.b16 %v4045, %v4041
  %v4354 = vpack.c.b16 %v4050, %v4046
  %v4355 = vpack.c.b16 %v4051, %v4047
  %v4356 = vpack.c.b16 %v4052, %v4048
  %v4357 = vpack.c.b16 %v4053, %v4049
  %v4358 = vpack.c.b16 %v4058, %v4054
  %v4359 = vpack.c.b16 %v4059, %v4055
  %v4360 = vpack.c.b16 %v4060, %v4056
  %v4361 = vpack.c.b16 %v4061, %v4057
  %v4362 = vpack.c.b16 %v4066, %v4062
  %v4363 = vpack.c.b16 %v4067, %v4063
  %v4364 = vpack.c.b16 %v4068, %v4064
  %v4365 = vpack.c.b16 %v4069, %v4065
  %v4366 = vpack.c.b16 %v4074, %v4070
  %v4367 = vpack.c.b16 %v4075, %v4071
  %v4368 = vpack.c.b16 %v4076, %v4072
  %v4369 = vpack.c.b16 %v4077, %v4073
  %v4370 = vpack.c.b16 %v4082, %v4078
  %v4371 = vpack.c.b16 %v4083, %v4079
  %v4372 = vpack.c.b16 %v4084, %v4080
  %v4373 = vpack.c.b16 %v4085, %v4081
  %v4374 = vpack.c.b16 %v4090, %v4086
  %v4375 = vpack.c.b16 %v4091, %v4087
  %v4376 = vpack.c.b16 %v4092, %v4088
  %v4377 = vpack.c.b16 %v4093, %v4089
  %v4378 = vpack.c.b16 %v4098, %v4094
  %v4379 = vpack.c.b16 %v4099, %v4095
  %v4380 = vpack.c.b16 %v4100, %v4096
  %v4381 = vpack.c.b16 %v4101, %v4097
  %v4382 = vpack.c.b16 %v4106, %v4102
  %v4383 = vpack.c.b16 %v4107, %v4103
  %v4384 = vpack.c.b16 %v4108, %v4104
  %v4385 = vpack.c.b16 %v4109, %v4105
  %v4386 = vpack.c.b16 %v4114, %v4110
  %v4387 = vpack.c.b16 %v4115, %v4111
  %v4388 = vpack.c.b16 %v4116, %v4112
  %v4389 = vpack.c.b16 %v4117, %v4113
  %v4390 = vpack.c.b16 %v4122, %v4118
  %v4391 = vpack.c.b16 %v4123, %v4119
  %v4392 = vpack.c.b16 %v4124, %v4120
  %v4393 = vpack.c.b16 %v4125, %v4121
  %v4394 = vpack.c.b16 %v4130, %v4126
  %v4395 = vpack.c.b16 %v4131, %v4127
  %v4396 = vpack.c.b16 %v4132, %v4128
  %v4397 = vpack.c.b16 %v4133, %v4129
  %v4398 = vpack.c.b16 %v4138, %v4134
  %v4399 = vpack.c.b16 %v4139, %v4135
  %v4400 = vpack.c.b16 %v4140, %v4136
  %v4401 = vpack.c.b16 %v4141, %v4137
  %v4402 = vpack.c.b16 %v4146, %v4142
  %v4403 = vpack.c.b16 %v4147, %v4143
  %v4404 = vpack.c.b16 %v4148, %v4144
  %v4405 = vpack.c.b16 %v4149, %v4145
  %4662 = vmatprep.subr.bf16.mxu0 %v4179
  %4663 = vmatpush1.bf16.msra.mxu0 %v4178
  %4664 = vmatprep.subr.bf16.mxu0 %v4175
  %4665 = vmatpush1.bf16.msra.mxu0 %v4174
  %4666 = vmatprep.subr.bf16.mxu0 %v4171
  %4667 = vmatpush1.bf16.msra.mxu0 %v4170
  %4668 = vmatprep.subr.bf16.mxu0 %v4167
  %4669 = vmatpush1.bf16.msra.mxu0 %v4166
  %4670 = vmatprep.subr.bf16.mxu0 %v4163
  %4671 = vmatpush1.bf16.msra.mxu0 %v4162
  %4672 = vmatprep.subr.bf16.mxu0 %v4159
  %4673 = vmatpush1.bf16.msra.mxu0 %v4158
  %4674 = vmatprep.subr.bf16.mxu0 %v4155
  %4675 = vmatpush1.bf16.msra.mxu0 %v4154
  %4676 = vmatprep.subr.bf16.mxu0 %v4151
  %4677 = vmatpush1.bf16.msra.mxu0 %v4150
  %4678 = vmatprep.subr.bf16.mxu0 %v4211
  %4679 = vmatpush2.bf16.msra.mxu0 %v4210
  %4680 = vmatprep.subr.bf16.mxu0 %v4207
  %4681 = vmatpush2.bf16.msra.mxu0 %v4206
  %4682 = vmatprep.subr.bf16.mxu0 %v4203
  %4683 = vmatpush2.bf16.msra.mxu0 %v4202
  %4684 = vmatprep.subr.bf16.mxu0 %v4199
  %4685 = vmatpush2.bf16.msra.mxu0 %v4198
  %4686 = vmatprep.subr.bf16.mxu0 %v4195
  %4687 = vmatpush2.bf16.msra.mxu0 %v4194
  %4688 = vmatprep.subr.bf16.mxu0 %v4191
  %4689 = vmatpush2.bf16.msra.mxu0 %v4190
  %4690 = vmatprep.subr.bf16.mxu0 %v4187
  %4691 = vmatpush2.bf16.msra.mxu0 %v4186
  %4692 = vmatprep.subr.bf16.mxu0 %v4183
  %4693 = vmatpush2.bf16.msra.mxu0 %v4182
  %4694 = vmatprep.mubr.bf16.mxu0 %v3097
  %4695 = vmatmul.mubr.bf16.gmra.mxu0 %v3096
  %v4696 = vpop.f32.mrf.mxu0
  %v4697 = vadd.f32 %v3365, %v4696
  %v4698 = vpop.f32.mrf.mxu0
  %v4699 = vadd.f32 %v3369, %v4698
  %v4700 = vpop.f32.mrf.mxu0
  %v4701 = vpop.f32.mrf.mxu0
  %4702 = vdwg.mxu0
  %4703 = vmatprep.subr.bf16.mxu0 %v4243
  %4704 = vmatpush1.bf16.msra.mxu0 %v4242
  %4705 = vmatprep.subr.bf16.mxu0 %v4239
  %4706 = vmatpush1.bf16.msra.mxu0 %v4238
  %4707 = vmatprep.subr.bf16.mxu0 %v4235
  %4708 = vmatpush1.bf16.msra.mxu0 %v4234
  %4709 = vmatprep.subr.bf16.mxu0 %v4231
  %4710 = vmatpush1.bf16.msra.mxu0 %v4230
  %4711 = vmatprep.subr.bf16.mxu0 %v4227
  %4712 = vmatpush1.bf16.msra.mxu0 %v4226
  %4713 = vmatprep.subr.bf16.mxu0 %v4223
  %4714 = vmatpush1.bf16.msra.mxu0 %v4222
  %4715 = vmatprep.subr.bf16.mxu0 %v4219
  %4716 = vmatpush1.bf16.msra.mxu0 %v4218
  %4717 = vmatprep.subr.bf16.mxu0 %v4215
  %4718 = vmatpush1.bf16.msra.mxu0 %v4214
  %4719 = vmatprep.subr.bf16.mxu0 %v4275
  %4720 = vmatpush2.bf16.msra.mxu0 %v4274
  %4721 = vmatprep.subr.bf16.mxu0 %v4271
  %4722 = vmatpush2.bf16.msra.mxu0 %v4270
  %4723 = vmatprep.subr.bf16.mxu0 %v4267
  %4724 = vmatpush2.bf16.msra.mxu0 %v4266
  %4725 = vmatprep.subr.bf16.mxu0 %v4263
  %4726 = vmatpush2.bf16.msra.mxu0 %v4262
  %4727 = vmatprep.subr.bf16.mxu0 %v4259
  %4728 = vmatpush2.bf16.msra.mxu0 %v4258
  %4729 = vmatprep.subr.bf16.mxu0 %v4255
  %4730 = vmatpush2.bf16.msra.mxu0 %v4254
  %4731 = vmatprep.subr.bf16.mxu0 %v4251
  %4732 = vmatpush2.bf16.msra.mxu0 %v4250
  %4733 = vmatprep.subr.bf16.mxu0 %v4247
  %4734 = vmatpush2.bf16.msra.mxu0 %v4246
  %4735 = vmatprep.mubr.bf16.mxu0 %v3099
  %4736 = vmatmul.mubr.bf16.gmra.mxu0 %v3098
  %v4737 = vpop.f32.mrf.mxu0
  %v4738 = vadd.f32 %v4697, %v4737
  %v4739 = vpop.f32.mrf.mxu0
  %v4740 = vadd.f32 %v4699, %v4739
  %v4741 = vpop.f32.mrf.mxu0
  %v4742 = vpop.f32.mrf.mxu0
  %4743 = vdwg.mxu0
  %4744 = vmatprep.subr.bf16.mxu0 %v4307
  %4745 = vmatpush1.bf16.msra.mxu0 %v4306
  %4746 = vmatprep.subr.bf16.mxu0 %v4303
  %4747 = vmatpush1.bf16.msra.mxu0 %v4302
  %4748 = vmatprep.subr.bf16.mxu0 %v4299
  %4749 = vmatpush1.bf16.msra.mxu0 %v4298
  %4750 = vmatprep.subr.bf16.mxu0 %v4295
  %4751 = vmatpush1.bf16.msra.mxu0 %v4294
  %4752 = vmatprep.subr.bf16.mxu0 %v4291
  %4753 = vmatpush1.bf16.msra.mxu0 %v4290
  %4754 = vmatprep.subr.bf16.mxu0 %v4287
  %4755 = vmatpush1.bf16.msra.mxu0 %v4286
  %4756 = vmatprep.subr.bf16.mxu0 %v4283
  %4757 = vmatpush1.bf16.msra.mxu0 %v4282
  %4758 = vmatprep.subr.bf16.mxu0 %v4279
  %4759 = vmatpush1.bf16.msra.mxu0 %v4278
  %4760 = vmatprep.subr.bf16.mxu0 %v4339
  %4761 = vmatpush2.bf16.msra.mxu0 %v4338
  %4762 = vmatprep.subr.bf16.mxu0 %v4335
  %4763 = vmatpush2.bf16.msra.mxu0 %v4334
  %4764 = vmatprep.subr.bf16.mxu0 %v4331
  %4765 = vmatpush2.bf16.msra.mxu0 %v4330
  %4766 = vmatprep.subr.bf16.mxu0 %v4327
  %4767 = vmatpush2.bf16.msra.mxu0 %v4326
  %4768 = vmatprep.subr.bf16.mxu0 %v4323
  %4769 = vmatpush2.bf16.msra.mxu0 %v4322
  %4770 = vmatprep.subr.bf16.mxu0 %v4319
  %4771 = vmatpush2.bf16.msra.mxu0 %v4318
  %4772 = vmatprep.subr.bf16.mxu0 %v4315
  %4773 = vmatpush2.bf16.msra.mxu0 %v4314
  %4774 = vmatprep.subr.bf16.mxu0 %v4311
  %4775 = vmatpush2.bf16.msra.mxu0 %v4310
  %4776 = vmatprep.mubr.bf16.mxu0 %v3101
  %4777 = vmatmul.mubr.bf16.gmra.mxu0 %v3100
  %v4778 = vpop.f32.mrf.mxu0
  %v4779 = vadd.f32 %v4738, %v4778
  %v4780 = vpop.f32.mrf.mxu0
  %v4781 = vadd.f32 %v4740, %v4780
  %v4782 = vpop.f32.mrf.mxu0
  %v4783 = vpop.f32.mrf.mxu0
  %4784 = vdwg.mxu0
  %4785 = vmatprep.subr.bf16.mxu0 %v4371
  %4786 = vmatpush1.bf16.msra.mxu0 %v4370
  %4787 = vmatprep.subr.bf16.mxu0 %v4367
  %4788 = vmatpush1.bf16.msra.mxu0 %v4366
  %4789 = vmatprep.subr.bf16.mxu0 %v4363
  %4790 = vmatpush1.bf16.msra.mxu0 %v4362
  %4791 = vmatprep.subr.bf16.mxu0 %v4359
  %4792 = vmatpush1.bf16.msra.mxu0 %v4358
  %4793 = vmatprep.subr.bf16.mxu0 %v4355
  %4794 = vmatpush1.bf16.msra.mxu0 %v4354
  %4795 = vmatprep.subr.bf16.mxu0 %v4351
  %4796 = vmatpush1.bf16.msra.mxu0 %v4350
  %4797 = vmatprep.subr.bf16.mxu0 %v4347
  %4798 = vmatpush1.bf16.msra.mxu0 %v4346
  %4799 = vmatprep.subr.bf16.mxu0 %v4343
  %4800 = vmatpush1.bf16.msra.mxu0 %v4342
  %4801 = vmatprep.subr.bf16.mxu0 %v4403
  %4802 = vmatpush2.bf16.msra.mxu0 %v4402
  %4803 = vmatprep.subr.bf16.mxu0 %v4399
  %4804 = vmatpush2.bf16.msra.mxu0 %v4398
  %4805 = vmatprep.subr.bf16.mxu0 %v4395
  %4806 = vmatpush2.bf16.msra.mxu0 %v4394
  %4807 = vmatprep.subr.bf16.mxu0 %v4391
  %4808 = vmatpush2.bf16.msra.mxu0 %v4390
  %4809 = vmatprep.subr.bf16.mxu0 %v4387
  %4810 = vmatpush2.bf16.msra.mxu0 %v4386
  %4811 = vmatprep.subr.bf16.mxu0 %v4383
  %4812 = vmatpush2.bf16.msra.mxu0 %v4382
  %4813 = vmatprep.subr.bf16.mxu0 %v4379
  %4814 = vmatpush2.bf16.msra.mxu0 %v4378
  %4815 = vmatprep.subr.bf16.mxu0 %v4375
  %4816 = vmatpush2.bf16.msra.mxu0 %v4374
  %4817 = vmatprep.mubr.bf16.mxu0 %v3103
  %4818 = vmatmul.mubr.bf16.gmra.mxu0 %v3102
  %v4819 = vpop.f32.mrf.mxu0
  %v4820 = vadd.f32 %v4779, %v4819
  %v4821 = vpop.f32.mrf.mxu0
  %v4822 = vadd.f32 %v4781, %v4821
  %v4823 = vpop.f32.mrf.mxu0
  %v4824 = vpop.f32.mrf.mxu0
  %4825 = vdwg.mxu0
  %4826 = vmatprep.subr.bf16.mxu0 %v4181
  %4827 = vmatpush1.bf16.msra.mxu0 %v4180
  %4828 = vmatprep.subr.bf16.mxu0 %v4177
  %4829 = vmatpush1.bf16.msra.mxu0 %v4176
  %4830 = vmatprep.subr.bf16.mxu0 %v4173
  %4831 = vmatpush1.bf16.msra.mxu0 %v4172
  %4832 = vmatprep.subr.bf16.mxu0 %v4169
  %4833 = vmatpush1.bf16.msra.mxu0 %v4168
  %4834 = vmatprep.subr.bf16.mxu0 %v4165
  %4835 = vmatpush1.bf16.msra.mxu0 %v4164
  %4836 = vmatprep.subr.bf16.mxu0 %v4161
  %4837 = vmatpush1.bf16.msra.mxu0 %v4160
  %4838 = vmatprep.subr.bf16.mxu0 %v4157
  %4839 = vmatpush1.bf16.msra.mxu0 %v4156
  %4840 = vmatprep.subr.bf16.mxu0 %v4153
  %4841 = vmatpush1.bf16.msra.mxu0 %v4152
  %4842 = vmatprep.subr.bf16.mxu0 %v4213
  %4843 = vmatpush2.bf16.msra.mxu0 %v4212
  %4844 = vmatprep.subr.bf16.mxu0 %v4209
  %4845 = vmatpush2.bf16.msra.mxu0 %v4208
  %4846 = vmatprep.subr.bf16.mxu0 %v4205
  %4847 = vmatpush2.bf16.msra.mxu0 %v4204
  %4848 = vmatprep.subr.bf16.mxu0 %v4201
  %4849 = vmatpush2.bf16.msra.mxu0 %v4200
  %4850 = vmatprep.subr.bf16.mxu0 %v4197
  %4851 = vmatpush2.bf16.msra.mxu0 %v4196
  %4852 = vmatprep.subr.bf16.mxu0 %v4193
  %4853 = vmatpush2.bf16.msra.mxu0 %v4192
  %4854 = vmatprep.subr.bf16.mxu0 %v4189
  %4855 = vmatpush2.bf16.msra.mxu0 %v4188
  %4856 = vmatprep.subr.bf16.mxu0 %v4185
  %4857 = vmatpush2.bf16.msra.mxu0 %v4184
  %4858 = vmatprep.mubr.bf16.mxu0 %v3097
  %4859 = vmatmul.mubr.bf16.gmra.mxu0 %v3096
  %v4860 = vpop.f32.mrf.mxu0
  %v4861 = vadd.f32 %v3373, %v4860
  %v4862 = vpop.f32.mrf.mxu0
  %v4863 = vadd.f32 %v3377, %v4862
  %v4864 = vpop.f32.mrf.mxu0
  %v4865 = vpop.f32.mrf.mxu0
  %4866 = vdwg.mxu0
  %4867 = vmatprep.subr.bf16.mxu0 %v4245
  %4868 = vmatpush1.bf16.msra.mxu0 %v4244
  %4869 = vmatprep.subr.bf16.mxu0 %v4241
  %4870 = vmatpush1.bf16.msra.mxu0 %v4240
  %4871 = vmatprep.subr.bf16.mxu0 %v4237
  %4872 = vmatpush1.bf16.msra.mxu0 %v4236
  %4873 = vmatprep.subr.bf16.mxu0 %v4233
  %4874 = vmatpush1.bf16.msra.mxu0 %v4232
  %4875 = vmatprep.subr.bf16.mxu0 %v4229
  %4876 = vmatpush1.bf16.msra.mxu0 %v4228
  %4877 = vmatprep.subr.bf16.mxu0 %v4225
  %4878 = vmatpush1.bf16.msra.mxu0 %v4224
  %4879 = vmatprep.subr.bf16.mxu0 %v4221
  %4880 = vmatpush1.bf16.msra.mxu0 %v4220
  %4881 = vmatprep.subr.bf16.mxu0 %v4217
  %4882 = vmatpush1.bf16.msra.mxu0 %v4216
  %4883 = vmatprep.subr.bf16.mxu0 %v4277
  %4884 = vmatpush2.bf16.msra.mxu0 %v4276
  %4885 = vmatprep.subr.bf16.mxu0 %v4273
  %4886 = vmatpush2.bf16.msra.mxu0 %v4272
  %4887 = vmatprep.subr.bf16.mxu0 %v4269
  %4888 = vmatpush2.bf16.msra.mxu0 %v4268
  %4889 = vmatprep.subr.bf16.mxu0 %v4265
  %4890 = vmatpush2.bf16.msra.mxu0 %v4264
  %4891 = vmatprep.subr.bf16.mxu0 %v4261
  %4892 = vmatpush2.bf16.msra.mxu0 %v4260
  %4893 = vmatprep.subr.bf16.mxu0 %v4257
  %4894 = vmatpush2.bf16.msra.mxu0 %v4256
  %4895 = vmatprep.subr.bf16.mxu0 %v4253
  %4896 = vmatpush2.bf16.msra.mxu0 %v4252
  %4897 = vmatprep.subr.bf16.mxu0 %v4249
  %4898 = vmatpush2.bf16.msra.mxu0 %v4248
  %4899 = vmatprep.mubr.bf16.mxu0 %v3099
  %4900 = vmatmul.mubr.bf16.gmra.mxu0 %v3098
  %v4901 = vpop.f32.mrf.mxu0
  %v4902 = vadd.f32 %v4861, %v4901
  %v4903 = vpop.f32.mrf.mxu0
  %v4904 = vadd.f32 %v4863, %v4903
  %v4905 = vpop.f32.mrf.mxu0
  %v4906 = vpop.f32.mrf.mxu0
  %4907 = vdwg.mxu0
  %4908 = vmatprep.subr.bf16.mxu0 %v4309
  %4909 = vmatpush1.bf16.msra.mxu0 %v4308
  %4910 = vmatprep.subr.bf16.mxu0 %v4305
  %4911 = vmatpush1.bf16.msra.mxu0 %v4304
  %4912 = vmatprep.subr.bf16.mxu0 %v4301
  %4913 = vmatpush1.bf16.msra.mxu0 %v4300
  %4914 = vmatprep.subr.bf16.mxu0 %v4297
  %4915 = vmatpush1.bf16.msra.mxu0 %v4296
  %4916 = vmatprep.subr.bf16.mxu0 %v4293
  %4917 = vmatpush1.bf16.msra.mxu0 %v4292
  %4918 = vmatprep.subr.bf16.mxu0 %v4289
  %4919 = vmatpush1.bf16.msra.mxu0 %v4288
  %4920 = vmatprep.subr.bf16.mxu0 %v4285
  %4921 = vmatpush1.bf16.msra.mxu0 %v4284
  %4922 = vmatprep.subr.bf16.mxu0 %v4281
  %4923 = vmatpush1.bf16.msra.mxu0 %v4280
  %4924 = vmatprep.subr.bf16.mxu0 %v4341
  %4925 = vmatpush2.bf16.msra.mxu0 %v4340
  %4926 = vmatprep.subr.bf16.mxu0 %v4337
  %4927 = vmatpush2.bf16.msra.mxu0 %v4336
  %4928 = vmatprep.subr.bf16.mxu0 %v4333
  %4929 = vmatpush2.bf16.msra.mxu0 %v4332
  %4930 = vmatprep.subr.bf16.mxu0 %v4329
  %4931 = vmatpush2.bf16.msra.mxu0 %v4328
  %4932 = vmatprep.subr.bf16.mxu0 %v4325
  %4933 = vmatpush2.bf16.msra.mxu0 %v4324
  %4934 = vmatprep.subr.bf16.mxu0 %v4321
  %4935 = vmatpush2.bf16.msra.mxu0 %v4320
  %4936 = vmatprep.subr.bf16.mxu0 %v4317
  %4937 = vmatpush2.bf16.msra.mxu0 %v4316
  %4938 = vmatprep.subr.bf16.mxu0 %v4313
  %4939 = vmatpush2.bf16.msra.mxu0 %v4312
  %4940 = vmatprep.mubr.bf16.mxu0 %v3101
  %4941 = vmatmul.mubr.bf16.gmra.mxu0 %v3100
  %v4942 = vpop.f32.mrf.mxu0
  %v4943 = vadd.f32 %v4902, %v4942
  %v4944 = vpop.f32.mrf.mxu0
  %v4945 = vadd.f32 %v4904, %v4944
  %v4946 = vpop.f32.mrf.mxu0
  %v4947 = vpop.f32.mrf.mxu0
  %4948 = vdwg.mxu0
  %4949 = vmatprep.subr.bf16.mxu0 %v4373
  %4950 = vmatpush1.bf16.msra.mxu0 %v4372
  %4951 = vmatprep.subr.bf16.mxu0 %v4369
  %4952 = vmatpush1.bf16.msra.mxu0 %v4368
  %4953 = vmatprep.subr.bf16.mxu0 %v4365
  %4954 = vmatpush1.bf16.msra.mxu0 %v4364
  %4955 = vmatprep.subr.bf16.mxu0 %v4361
  %4956 = vmatpush1.bf16.msra.mxu0 %v4360
  %4957 = vmatprep.subr.bf16.mxu0 %v4357
  %4958 = vmatpush1.bf16.msra.mxu0 %v4356
  %4959 = vmatprep.subr.bf16.mxu0 %v4353
  %4960 = vmatpush1.bf16.msra.mxu0 %v4352
  %4961 = vmatprep.subr.bf16.mxu0 %v4349
  %4962 = vmatpush1.bf16.msra.mxu0 %v4348
  %4963 = vmatprep.subr.bf16.mxu0 %v4345
  %4964 = vmatpush1.bf16.msra.mxu0 %v4344
  %4965 = vmatprep.subr.bf16.mxu0 %v4405
  %4966 = vmatpush2.bf16.msra.mxu0 %v4404
  %4967 = vmatprep.subr.bf16.mxu0 %v4401
  %4968 = vmatpush2.bf16.msra.mxu0 %v4400
  %4969 = vmatprep.subr.bf16.mxu0 %v4397
  %4970 = vmatpush2.bf16.msra.mxu0 %v4396
  %4971 = vmatprep.subr.bf16.mxu0 %v4393
  %4972 = vmatpush2.bf16.msra.mxu0 %v4392
  %4973 = vmatprep.subr.bf16.mxu0 %v4389
  %4974 = vmatpush2.bf16.msra.mxu0 %v4388
  %4975 = vmatprep.subr.bf16.mxu0 %v4385
  %4976 = vmatpush2.bf16.msra.mxu0 %v4384
  %4977 = vmatprep.subr.bf16.mxu0 %v4381
  %4978 = vmatpush2.bf16.msra.mxu0 %v4380
  %4979 = vmatprep.subr.bf16.mxu0 %v4377
  %4980 = vmatpush2.bf16.msra.mxu0 %v4376
  %4981 = vmatprep.mubr.bf16.mxu0 %v3103
  %4982 = vmatmul.mubr.bf16.gmra.mxu0 %v3102
  %v4983 = vpop.f32.mrf.mxu0
  %v4984 = vadd.f32 %v4943, %v4983
  %v4985 = vpop.f32.mrf.mxu0
  %v4986 = vadd.f32 %v4945, %v4985
  %v4987 = vpop.f32.mrf.mxu0
  %v4988 = vpop.f32.mrf.mxu0
  %4989 = vdwg.mxu0
  %v4990 = vmax.f32 %v4820, 0.0
  %v4991 = vmax.f32 %v4822, 0.0
  %v4992 = vmax.f32 %v4984, 0.0
  %v4993 = vmax.f32 %v4986, 0.0
  %v4994 = vpack.c.bf16 %v4990, %v4990
  %v4995 = vpack.c.bf16 %v4991, %v4991
  %v4996 = vpack.c.bf16 %v4992, %v4992
  %v4997 = vpack.c.bf16 %v4993, %v4993
  %v4998 = vld [vmem:[%s5] sm:$0xff]
  %v4999 = vld [vmem:[%s5 + $0x8] sm:$0xff]
  %v5000 = vld [vmem:[%s5 + $0x10] sm:$0xff]
  %v5001 = vld [vmem:[%s5 + $0x18] sm:$0xff]
  %v5002 = vld [vmem:[%s5 + $0x20] sm:$0xff]
  %v5003 = vld [vmem:[%s5 + $0x28] sm:$0xff]
  %v5004 = vld [vmem:[%s5 + $0x30] sm:$0xff]
  %v5005 = vld [vmem:[%s5 + $0x38] sm:$0xff]
  %v5006 = vld [vmem:[%s5 + $0x40] sm:$0xff]
  %v5007 = vld [vmem:[%s5 + $0x48] sm:$0xff]
  %v5008 = vld [vmem:[%s5 + $0x50] sm:$0xff]
  %v5009 = vld [vmem:[%s5 + $0x58] sm:$0xff]
  %v5010 = vld [vmem:[%s5 + $0x60] sm:$0xff]
  %v5011 = vld [vmem:[%s5 + $0x68] sm:$0xff]
  %v5012 = vld [vmem:[%s5 + $0x70] sm:$0xff]
  %v5013 = vld [vmem:[%s5 + $0x78] sm:$0xff]
  %v5014 = vld [vmem:[%s5 + $0x80] sm:$0xff]
  %v5015 = vld [vmem:[%s5 + $0x88] sm:$0xff]
  %v5016 = vld [vmem:[%s5 + $0x90] sm:$0xff]
  %v5017 = vld [vmem:[%s5 + $0x98] sm:$0xff]
  %v5018 = vld [vmem:[%s5 + $0xa0] sm:$0xff]
  %v5019 = vld [vmem:[%s5 + $0xa8] sm:$0xff]
  %v5020 = vld [vmem:[%s5 + $0xb0] sm:$0xff]
  %v5021 = vld [vmem:[%s5 + $0xb8] sm:$0xff]
  %v5022 = vld [vmem:[%s5 + $0xc0] sm:$0xff]
  %v5023 = vld [vmem:[%s5 + $0xc8] sm:$0xff]
  %v5024 = vld [vmem:[%s5 + $0xd0] sm:$0xff]
  %v5025 = vld [vmem:[%s5 + $0xd8] sm:$0xff]
  %v5026 = vld [vmem:[%s5 + $0xe0] sm:$0xff]
  %v5027 = vld [vmem:[%s5 + $0xe8] sm:$0xff]
  %v5028 = vld [vmem:[%s5 + $0xf0] sm:$0xff]
  %v5029 = vld [vmem:[%s5 + $0xf8] sm:$0xff]
  %v5030 = vld [vmem:[%s5 + $0x100] sm:$0xff]
  %v5031 = vld [vmem:[%s5 + $0x108] sm:$0xff]
  %v5032 = vld [vmem:[%s5 + $0x110] sm:$0xff]
  %v5033 = vld [vmem:[%s5 + $0x118] sm:$0xff]
  %v5034 = vld [vmem:[%s5 + $0x120] sm:$0xff]
  %v5035 = vld [vmem:[%s5 + $0x128] sm:$0xff]
  %v5036 = vld [vmem:[%s5 + $0x130] sm:$0xff]
  %v5037 = vld [vmem:[%s5 + $0x138] sm:$0xff]
  %v5038 = vld [vmem:[%s5 + $0x140] sm:$0xff]
  %v5039 = vld [vmem:[%s5 + $0x148] sm:$0xff]
  %v5040 = vld [vmem:[%s5 + $0x150] sm:$0xff]
  %v5041 = vld [vmem:[%s5 + $0x158] sm:$0xff]
  %v5042 = vld [vmem:[%s5 + $0x160] sm:$0xff]
  %v5043 = vld [vmem:[%s5 + $0x168] sm:$0xff]
  %v5044 = vld [vmem:[%s5 + $0x170] sm:$0xff]
  %v5045 = vld [vmem:[%s5 + $0x178] sm:$0xff]
  %v5046 = vld [vmem:[%s5 + $0x180] sm:$0xff]
  %v5047 = vld [vmem:[%s5 + $0x188] sm:$0xff]
  %v5048 = vld [vmem:[%s5 + $0x190] sm:$0xff]
  %v5049 = vld [vmem:[%s5 + $0x198] sm:$0xff]
  %v5050 = vld [vmem:[%s5 + $0x1a0] sm:$0xff]
  %v5051 = vld [vmem:[%s5 + $0x1a8] sm:$0xff]
  %v5052 = vld [vmem:[%s5 + $0x1b0] sm:$0xff]
  %v5053 = vld [vmem:[%s5 + $0x1b8] sm:$0xff]
  %v5054 = vld [vmem:[%s5 + $0x1c0] sm:$0xff]
  %v5055 = vld [vmem:[%s5 + $0x1c8] sm:$0xff]
  %v5056 = vld [vmem:[%s5 + $0x1d0] sm:$0xff]
  %v5057 = vld [vmem:[%s5 + $0x1d8] sm:$0xff]
  %v5058 = vld [vmem:[%s5 + $0x1e0] sm:$0xff]
  %v5059 = vld [vmem:[%s5 + $0x1e8] sm:$0xff]
  %v5060 = vld [vmem:[%s5 + $0x1f0] sm:$0xff]
  %v5061 = vld [vmem:[%s5 + $0x1f8] sm:$0xff]
  %v5062 = vld [vmem:[%s6] sm:$0x3]
  %v5064 = vlaneseq
  %v5065 = vshrl.u32 %v5064, 7
  %v5066 = vsub.s32 0, %v5065
  %v5067 = vrot.slane %v5062, %v5066
  %v5068 = vlaneseq
  %v5069 = vshrl.u32 %v5068, 7
  %v5070 = vsub.s32 1, %v5069
  %v5071 = vrot.slane %v5062, %v5070
  %v5138 = vunpack.c.l.b16 %v4998
  %v5139 = vunpack.c.h.b16 %v4998
  %v5140 = vunpack.c.l.b16 %v4999
  %v5141 = vunpack.c.h.b16 %v4999
  %v5142 = vunpack.c.l.b16 %v5000
  %v5143 = vunpack.c.h.b16 %v5000
  %v5144 = vunpack.c.l.b16 %v5001
  %v5145 = vunpack.c.h.b16 %v5001
  %v5146 = vunpack.c.l.b16 %v5002
  %v5147 = vunpack.c.h.b16 %v5002
  %v5148 = vunpack.c.l.b16 %v5003
  %v5149 = vunpack.c.h.b16 %v5003
  %v5150 = vunpack.c.l.b16 %v5004
  %v5151 = vunpack.c.h.b16 %v5004
  %v5152 = vunpack.c.l.b16 %v5005
  %v5153 = vunpack.c.h.b16 %v5005
  %v5154 = vunpack.c.l.b16 %v5006
  %v5155 = vunpack.c.h.b16 %v5006
  %v5156 = vunpack.c.l.b16 %v5007
  %v5157 = vunpack.c.h.b16 %v5007
  %v5158 = vunpack.c.l.b16 %v5008
  %v5159 = vunpack.c.h.b16 %v5008
  %v5160 = vunpack.c.l.b16 %v5009
  %v5161 = vunpack.c.h.b16 %v5009
  %v5162 = vunpack.c.l.b16 %v5010
  %v5163 = vunpack.c.h.b16 %v5010
  %v5164 = vunpack.c.l.b16 %v5011
  %v5165 = vunpack.c.h.b16 %v5011
  %v5166 = vunpack.c.l.b16 %v5012
  %v5167 = vunpack.c.h.b16 %v5012
  %v5168 = vunpack.c.l.b16 %v5013
  %v5169 = vunpack.c.h.b16 %v5013
  %v5170 = vunpack.c.l.b16 %v5014
  %v5171 = vunpack.c.h.b16 %v5014
  %v5172 = vunpack.c.l.b16 %v5015
  %v5173 = vunpack.c.h.b16 %v5015
  %v5174 = vunpack.c.l.b16 %v5016
  %v5175 = vunpack.c.h.b16 %v5016
  %v5176 = vunpack.c.l.b16 %v5017
  %v5177 = vunpack.c.h.b16 %v5017
  %v5178 = vunpack.c.l.b16 %v5018
  %v5179 = vunpack.c.h.b16 %v5018
  %v5180 = vunpack.c.l.b16 %v5019
  %v5181 = vunpack.c.h.b16 %v5019
  %v5182 = vunpack.c.l.b16 %v5020
  %v5183 = vunpack.c.h.b16 %v5020
  %v5184 = vunpack.c.l.b16 %v5021
  %v5185 = vunpack.c.h.b16 %v5021
  %v5186 = vunpack.c.l.b16 %v5022
  %v5187 = vunpack.c.h.b16 %v5022
  %v5188 = vunpack.c.l.b16 %v5023
  %v5189 = vunpack.c.h.b16 %v5023
  %v5190 = vunpack.c.l.b16 %v5024
  %v5191 = vunpack.c.h.b16 %v5024
  %v5192 = vunpack.c.l.b16 %v5025
  %v5193 = vunpack.c.h.b16 %v5025
  %v5194 = vunpack.c.l.b16 %v5026
  %v5195 = vunpack.c.h.b16 %v5026
  %v5196 = vunpack.c.l.b16 %v5027
  %v5197 = vunpack.c.h.b16 %v5027
  %v5198 = vunpack.c.l.b16 %v5028
  %v5199 = vunpack.c.h.b16 %v5028
  %v5200 = vunpack.c.l.b16 %v5029
  %v5201 = vunpack.c.h.b16 %v5029
  %v5202 = vunpack.c.l.b16 %v5030
  %v5203 = vunpack.c.h.b16 %v5030
  %v5204 = vunpack.c.l.b16 %v5031
  %v5205 = vunpack.c.h.b16 %v5031
  %v5206 = vunpack.c.l.b16 %v5032
  %v5207 = vunpack.c.h.b16 %v5032
  %v5208 = vunpack.c.l.b16 %v5033
  %v5209 = vunpack.c.h.b16 %v5033
  %v5210 = vunpack.c.l.b16 %v5034
  %v5211 = vunpack.c.h.b16 %v5034
  %v5212 = vunpack.c.l.b16 %v5035
  %v5213 = vunpack.c.h.b16 %v5035
  %v5214 = vunpack.c.l.b16 %v5036
  %v5215 = vunpack.c.h.b16 %v5036
  %v5216 = vunpack.c.l.b16 %v5037
  %v5217 = vunpack.c.h.b16 %v5037
  %v5218 = vunpack.c.l.b16 %v5038
  %v5219 = vunpack.c.h.b16 %v5038
  %v5220 = vunpack.c.l.b16 %v5039
  %v5221 = vunpack.c.h.b16 %v5039
  %v5222 = vunpack.c.l.b16 %v5040
  %v5223 = vunpack.c.h.b16 %v5040
  %v5224 = vunpack.c.l.b16 %v5041
  %v5225 = vunpack.c.h.b16 %v5041
  %v5226 = vunpack.c.l.b16 %v5042
  %v5227 = vunpack.c.h.b16 %v5042
  %v5228 = vunpack.c.l.b16 %v5043
  %v5229 = vunpack.c.h.b16 %v5043
  %v5230 = vunpack.c.l.b16 %v5044
  %v5231 = vunpack.c.h.b16 %v5044
  %v5232 = vunpack.c.l.b16 %v5045
  %v5233 = vunpack.c.h.b16 %v5045
  %v5234 = vunpack.c.l.b16 %v5046
  %v5235 = vunpack.c.h.b16 %v5046
  %v5236 = vunpack.c.l.b16 %v5047
  %v5237 = vunpack.c.h.b16 %v5047
  %v5238 = vunpack.c.l.b16 %v5048
  %v5239 = vunpack.c.h.b16 %v5048
  %v5240 = vunpack.c.l.b16 %v5049
  %v5241 = vunpack.c.h.b16 %v5049
  %v5242 = vunpack.c.l.b16 %v5050
  %v5243 = vunpack.c.h.b16 %v5050
  %v5244 = vunpack.c.l.b16 %v5051
  %v5245 = vunpack.c.h.b16 %v5051
  %v5246 = vunpack.c.l.b16 %v5052
  %v5247 = vunpack.c.h.b16 %v5052
  %v5248 = vunpack.c.l.b16 %v5053
  %v5249 = vunpack.c.h.b16 %v5053
  %v5250 = vunpack.c.l.b16 %v5054
  %v5251 = vunpack.c.h.b16 %v5054
  %v5252 = vunpack.c.l.b16 %v5055
  %v5253 = vunpack.c.h.b16 %v5055
  %v5254 = vunpack.c.l.b16 %v5056
  %v5255 = vunpack.c.h.b16 %v5056
  %v5256 = vunpack.c.l.b16 %v5057
  %v5257 = vunpack.c.h.b16 %v5057
  %v5258 = vunpack.c.l.b16 %v5058
  %v5259 = vunpack.c.h.b16 %v5058
  %v5260 = vunpack.c.l.b16 %v5059
  %v5261 = vunpack.c.h.b16 %v5059
  %v5262 = vunpack.c.l.b16 %v5060
  %v5263 = vunpack.c.h.b16 %v5060
  %v5264 = vunpack.c.l.b16 %v5061
  %v5265 = vunpack.c.h.b16 %v5061
  %v5266 = vpack.c.b16 %v5140, %v5138
  %v5267 = vpack.c.b16 %v5141, %v5139
  %v5268 = vpack.c.b16 %v5144, %v5142
  %v5269 = vpack.c.b16 %v5145, %v5143
  %v5270 = vpack.c.b16 %v5148, %v5146
  %v5271 = vpack.c.b16 %v5149, %v5147
  %v5272 = vpack.c.b16 %v5152, %v5150
  %v5273 = vpack.c.b16 %v5153, %v5151
  %v5274 = vpack.c.b16 %v5156, %v5154
  %v5275 = vpack.c.b16 %v5157, %v5155
  %v5276 = vpack.c.b16 %v5160, %v5158
  %v5277 = vpack.c.b16 %v5161, %v5159
  %v5278 = vpack.c.b16 %v5164, %v5162
  %v5279 = vpack.c.b16 %v5165, %v5163
  %v5280 = vpack.c.b16 %v5168, %v5166
  %v5281 = vpack.c.b16 %v5169, %v5167
  %v5282 = vpack.c.b16 %v5172, %v5170
  %v5283 = vpack.c.b16 %v5173, %v5171
  %v5284 = vpack.c.b16 %v5176, %v5174
  %v5285 = vpack.c.b16 %v5177, %v5175
  %v5286 = vpack.c.b16 %v5180, %v5178
  %v5287 = vpack.c.b16 %v5181, %v5179
  %v5288 = vpack.c.b16 %v5184, %v5182
  %v5289 = vpack.c.b16 %v5185, %v5183
  %v5290 = vpack.c.b16 %v5188, %v5186
  %v5291 = vpack.c.b16 %v5189, %v5187
  %v5292 = vpack.c.b16 %v5192, %v5190
  %v5293 = vpack.c.b16 %v5193, %v5191
  %v5294 = vpack.c.b16 %v5196, %v5194
  %v5295 = vpack.c.b16 %v5197, %v5195
  %v5296 = vpack.c.b16 %v5200, %v5198
  %v5297 = vpack.c.b16 %v5201, %v5199
  %v5298 = vpack.c.b16 %v5204, %v5202
  %v5299 = vpack.c.b16 %v5205, %v5203
  %v5300 = vpack.c.b16 %v5208, %v5206
  %v5301 = vpack.c.b16 %v5209, %v5207
  %v5302 = vpack.c.b16 %v5212, %v5210
  %v5303 = vpack.c.b16 %v5213, %v5211
  %v5304 = vpack.c.b16 %v5216, %v5214
  %v5305 = vpack.c.b16 %v5217, %v5215
  %v5306 = vpack.c.b16 %v5220, %v5218
  %v5307 = vpack.c.b16 %v5221, %v5219
  %v5308 = vpack.c.b16 %v5224, %v5222
  %v5309 = vpack.c.b16 %v5225, %v5223
  %v5310 = vpack.c.b16 %v5228, %v5226
  %v5311 = vpack.c.b16 %v5229, %v5227
  %v5312 = vpack.c.b16 %v5232, %v5230
  %v5313 = vpack.c.b16 %v5233, %v5231
  %v5314 = vpack.c.b16 %v5236, %v5234
  %v5315 = vpack.c.b16 %v5237, %v5235
  %v5316 = vpack.c.b16 %v5240, %v5238
  %v5317 = vpack.c.b16 %v5241, %v5239
  %v5318 = vpack.c.b16 %v5244, %v5242
  %v5319 = vpack.c.b16 %v5245, %v5243
  %v5320 = vpack.c.b16 %v5248, %v5246
  %v5321 = vpack.c.b16 %v5249, %v5247
  %v5322 = vpack.c.b16 %v5252, %v5250
  %v5323 = vpack.c.b16 %v5253, %v5251
  %v5324 = vpack.c.b16 %v5256, %v5254
  %v5325 = vpack.c.b16 %v5257, %v5255
  %v5326 = vpack.c.b16 %v5260, %v5258
  %v5327 = vpack.c.b16 %v5261, %v5259
  %v5328 = vpack.c.b16 %v5264, %v5262
  %v5329 = vpack.c.b16 %v5265, %v5263
  %5394 = vmatprep.subr.bf16.mxu0 %v5281
  %5395 = vmatpush1.bf16.msra.mxu0 %v5280
  %5396 = vmatprep.subr.bf16.mxu0 %v5279
  %5397 = vmatpush1.bf16.msra.mxu0 %v5278
  %5398 = vmatprep.subr.bf16.mxu0 %v5277
  %5399 = vmatpush1.bf16.msra.mxu0 %v5276
  %5400 = vmatprep.subr.bf16.mxu0 %v5275
  %5401 = vmatpush1.bf16.msra.mxu0 %v5274
  %5402 = vmatprep.subr.bf16.mxu0 %v5273
  %5403 = vmatpush1.bf16.msra.mxu0 %v5272
  %5404 = vmatprep.subr.bf16.mxu0 %v5271
  %5405 = vmatpush1.bf16.msra.mxu0 %v5270
  %5406 = vmatprep.subr.bf16.mxu0 %v5269
  %5407 = vmatpush1.bf16.msra.mxu0 %v5268
  %5408 = vmatprep.subr.bf16.mxu0 %v5267
  %5409 = vmatpush1.bf16.msra.mxu0 %v5266
  %5410 = vmatprep.subr.bf16.mxu0 %v5297
  %5411 = vmatpush2.bf16.msra.mxu0 %v5296
  %5412 = vmatprep.subr.bf16.mxu0 %v5295
  %5413 = vmatpush2.bf16.msra.mxu0 %v5294
  %5414 = vmatprep.subr.bf16.mxu0 %v5293
  %5415 = vmatpush2.bf16.msra.mxu0 %v5292
  %5416 = vmatprep.subr.bf16.mxu0 %v5291
  %5417 = vmatpush2.bf16.msra.mxu0 %v5290
  %5418 = vmatprep.subr.bf16.mxu0 %v5289
  %5419 = vmatpush2.bf16.msra.mxu0 %v5288
  %5420 = vmatprep.subr.bf16.mxu0 %v5287
  %5421 = vmatpush2.bf16.msra.mxu0 %v5286
  %5422 = vmatprep.subr.bf16.mxu0 %v5285
  %5423 = vmatpush2.bf16.msra.mxu0 %v5284
  %5424 = vmatprep.subr.bf16.mxu0 %v5283
  %5425 = vmatpush2.bf16.msra.mxu0 %v5282
  %5426 = vmatprep.mubr.bf16.mxu0 %v4995
  %5427 = vmatmul.mubr.bf16.gmra.mxu0 %v4994
  %v5428 = vpop.f32.mrf.mxu0
  %v5429 = vadd.f32 %v5067, %v5428
  %v5430 = vpop.f32.mrf.mxu0
  %v5431 = vadd.f32 %v5071, %v5430
  %v5432 = vpop.f32.mrf.mxu0
  %v5433 = vpop.f32.mrf.mxu0
  %5434 = vdwg.mxu0
  %5435 = vmatprep.subr.bf16.mxu0 %v5313
  %5436 = vmatpush1.bf16.msra.mxu0 %v5312
  %5437 = vmatprep.subr.bf16.mxu0 %v5311
  %5438 = vmatpush1.bf16.msra.mxu0 %v5310
  %5439 = vmatprep.subr.bf16.mxu0 %v5309
  %5440 = vmatpush1.bf16.msra.mxu0 %v5308
  %5441 = vmatprep.subr.bf16.mxu0 %v5307
  %5442 = vmatpush1.bf16.msra.mxu0 %v5306
  %5443 = vmatprep.subr.bf16.mxu0 %v5305
  %5444 = vmatpush1.bf16.msra.mxu0 %v5304
  %5445 = vmatprep.subr.bf16.mxu0 %v5303
  %5446 = vmatpush1.bf16.msra.mxu0 %v5302
  %5447 = vmatprep.subr.bf16.mxu0 %v5301
  %5448 = vmatpush1.bf16.msra.mxu0 %v5300
  %5449 = vmatprep.subr.bf16.mxu0 %v5299
  %5450 = vmatpush1.bf16.msra.mxu0 %v5298
  %5451 = vmatprep.subr.bf16.mxu0 %v5329
  %5452 = vmatpush2.bf16.msra.mxu0 %v5328
  %5453 = vmatprep.subr.bf16.mxu0 %v5327
  %5454 = vmatpush2.bf16.msra.mxu0 %v5326
  %5455 = vmatprep.subr.bf16.mxu0 %v5325
  %5456 = vmatpush2.bf16.msra.mxu0 %v5324
  %5457 = vmatprep.subr.bf16.mxu0 %v5323
  %5458 = vmatpush2.bf16.msra.mxu0 %v5322
  %5459 = vmatprep.subr.bf16.mxu0 %v5321
  %5460 = vmatpush2.bf16.msra.mxu0 %v5320
  %5461 = vmatprep.subr.bf16.mxu0 %v5319
  %5462 = vmatpush2.bf16.msra.mxu0 %v5318
  %5463 = vmatprep.subr.bf16.mxu0 %v5317
  %5464 = vmatpush2.bf16.msra.mxu0 %v5316
  %5465 = vmatprep.subr.bf16.mxu0 %v5315
  %5466 = vmatpush2.bf16.msra.mxu0 %v5314
  %5467 = vmatprep.mubr.bf16.mxu0 %v4997
  %5468 = vmatmul.mubr.bf16.gmra.mxu0 %v4996
  %v5469 = vpop.f32.mrf.mxu0
  %v5470 = vadd.f32 %v5429, %v5469
  %v5471 = vpop.f32.mrf.mxu0
  %v5472 = vadd.f32 %v5431, %v5471
  %v5473 = vpop.f32.mrf.mxu0
  %v5474 = vpop.f32.mrf.mxu0
  %5475 = vdwg.mxu0
  %v5476 = vmax.f32 %v5470, 0.0
  %v5477 = vmax.f32 %v5472, 0.0
  %v5478 = vpack.c.bf16 %v5476, %v5476
  %v5479 = vpack.c.bf16 %v5477, %v5477
  %v5480 = vld [vmem:[%s7] sm:$0xf]
  %v5481 = vld [vmem:[%s7 + $0x4] sm:$0xf]
  %v5482 = vld [vmem:[%s7 + $0x8] sm:$0xf]
  %v5483 = vld [vmem:[%s7 + $0xc] sm:$0xf]
  %v5484 = vld [vmem:[%s7 + $0x10] sm:$0xf]
  %v5485 = vld [vmem:[%s7 + $0x14] sm:$0xf]
  %v5486 = vld [vmem:[%s7 + $0x18] sm:$0xf]
  %v5487 = vld [vmem:[%s7 + $0x1c] sm:$0xf]
  %v5488 = vld [vmem:[%s7 + $0x20] sm:$0xf]
  %v5489 = vld [vmem:[%s7 + $0x24] sm:$0xf]
  %v5490 = vld [vmem:[%s7 + $0x28] sm:$0xf]
  %v5491 = vld [vmem:[%s7 + $0x2c] sm:$0xf]
  %v5492 = vld [vmem:[%s7 + $0x30] sm:$0xf]
  %v5493 = vld [vmem:[%s7 + $0x34] sm:$0xf]
  %v5494 = vld [vmem:[%s7 + $0x38] sm:$0xf]
  %v5495 = vld [vmem:[%s7 + $0x3c] sm:$0xf]
  %v5496 = vld [vmem:[%s7 + $0x40] sm:$0xf]
  %v5497 = vld [vmem:[%s7 + $0x44] sm:$0xf]
  %v5498 = vld [vmem:[%s7 + $0x48] sm:$0xf]
  %v5499 = vld [vmem:[%s7 + $0x4c] sm:$0xf]
  %v5500 = vld [vmem:[%s7 + $0x50] sm:$0xf]
  %v5501 = vld [vmem:[%s7 + $0x54] sm:$0xf]
  %v5502 = vld [vmem:[%s7 + $0x58] sm:$0xf]
  %v5503 = vld [vmem:[%s7 + $0x5c] sm:$0xf]
  %v5504 = vld [vmem:[%s7 + $0x60] sm:$0xf]
  %v5505 = vld [vmem:[%s7 + $0x64] sm:$0xf]
  %v5506 = vld [vmem:[%s7 + $0x68] sm:$0xf]
  %v5507 = vld [vmem:[%s7 + $0x6c] sm:$0xf]
  %v5508 = vld [vmem:[%s7 + $0x70] sm:$0xf]
  %v5509 = vld [vmem:[%s7 + $0x74] sm:$0xf]
  %v5510 = vld [vmem:[%s7 + $0x78] sm:$0xf]
  %v5511 = vld [vmem:[%s7 + $0x7c] sm:$0xf]
  %v5512 = vld [vmem:[%s8] sm:$0x1]
  %v5514 = vlaneseq
  %v5515 = vshrl.u32 %v5514, 7
  %v5516 = vsub.s32 0, %v5515
  %v5517 = vrot.slane %v5512, %v5516
  %v5551 = vunpack.c.l.b16 %v5480
  %v5552 = vunpack.c.l.b16 %v5481
  %v5553 = vunpack.c.l.b16 %v5482
  %v5554 = vunpack.c.l.b16 %v5483
  %v5555 = vunpack.c.l.b16 %v5484
  %v5556 = vunpack.c.l.b16 %v5485
  %v5557 = vunpack.c.l.b16 %v5486
  %v5558 = vunpack.c.l.b16 %v5487
  %v5559 = vunpack.c.l.b16 %v5488
  %v5560 = vunpack.c.l.b16 %v5489
  %v5561 = vunpack.c.l.b16 %v5490
  %v5562 = vunpack.c.l.b16 %v5491
  %v5563 = vunpack.c.l.b16 %v5492
  %v5564 = vunpack.c.l.b16 %v5493
  %v5565 = vunpack.c.l.b16 %v5494
  %v5566 = vunpack.c.l.b16 %v5495
  %v5567 = vunpack.c.l.b16 %v5496
  %v5568 = vunpack.c.l.b16 %v5497
  %v5569 = vunpack.c.l.b16 %v5498
  %v5570 = vunpack.c.l.b16 %v5499
  %v5571 = vunpack.c.l.b16 %v5500
  %v5572 = vunpack.c.l.b16 %v5501
  %v5573 = vunpack.c.l.b16 %v5502
  %v5574 = vunpack.c.l.b16 %v5503
  %v5575 = vunpack.c.l.b16 %v5504
  %v5576 = vunpack.c.l.b16 %v5505
  %v5577 = vunpack.c.l.b16 %v5506
  %v5578 = vunpack.c.l.b16 %v5507
  %v5579 = vunpack.c.l.b16 %v5508
  %v5580 = vunpack.c.l.b16 %v5509
  %v5581 = vunpack.c.l.b16 %v5510
  %v5582 = vunpack.c.l.b16 %v5511
  %v5583 = vpack.c.b16 %v5552, %v5551
  %v5584 = vpack.c.b16 %v5554, %v5553
  %v5585 = vpack.c.b16 %v5556, %v5555
  %v5586 = vpack.c.b16 %v5558, %v5557
  %v5587 = vpack.c.b16 %v5560, %v5559
  %v5588 = vpack.c.b16 %v5562, %v5561
  %v5589 = vpack.c.b16 %v5564, %v5563
  %v5590 = vpack.c.b16 %v5566, %v5565
  %v5591 = vpack.c.b16 %v5568, %v5567
  %v5592 = vpack.c.b16 %v5570, %v5569
  %v5593 = vpack.c.b16 %v5572, %v5571
  %v5594 = vpack.c.b16 %v5574, %v5573
  %v5595 = vpack.c.b16 %v5576, %v5575
  %v5596 = vpack.c.b16 %v5578, %v5577
  %v5597 = vpack.c.b16 %v5580, %v5579
  %v5598 = vpack.c.b16 %v5582, %v5581
  %5615 = vmatprep.subr.bf16.mxu0 0
  %5616 = vmatpush1.bf16.msra.mxu0 %v5590
  %5617 = vmatprep.subr.bf16.mxu0 0
  %5618 = vmatpush1.bf16.msra.mxu0 %v5589
  %5619 = vmatprep.subr.bf16.mxu0 0
  %5620 = vmatpush1.bf16.msra.mxu0 %v5588
  %5621 = vmatprep.subr.bf16.mxu0 0
  %5622 = vmatpush1.bf16.msra.mxu0 %v5587
  %5623 = vmatprep.subr.bf16.mxu0 0
  %5624 = vmatpush1.bf16.msra.mxu0 %v5586
  %5625 = vmatprep.subr.bf16.mxu0 0
  %5626 = vmatpush1.bf16.msra.mxu0 %v5585
  %5627 = vmatprep.subr.bf16.mxu0 0
  %5628 = vmatpush1.bf16.msra.mxu0 %v5584
  %5629 = vmatprep.subr.bf16.mxu0 0
  %5630 = vmatpush1.bf16.msra.mxu0 %v5583
  %5631 = vmatprep.subr.bf16.mxu0 0
  %5632 = vmatpush2.bf16.msra.mxu0 %v5598
  %5633 = vmatprep.subr.bf16.mxu0 0
  %5634 = vmatpush2.bf16.msra.mxu0 %v5597
  %5635 = vmatprep.subr.bf16.mxu0 0
  %5636 = vmatpush2.bf16.msra.mxu0 %v5596
  %5637 = vmatprep.subr.bf16.mxu0 0
  %5638 = vmatpush2.bf16.msra.mxu0 %v5595
  %5639 = vmatprep.subr.bf16.mxu0 0
  %5640 = vmatpush2.bf16.msra.mxu0 %v5594
  %5641 = vmatprep.subr.bf16.mxu0 0
  %5642 = vmatpush2.bf16.msra.mxu0 %v5593
  %5643 = vmatprep.subr.bf16.mxu0 0
  %5644 = vmatpush2.bf16.msra.mxu0 %v5592
  %5645 = vmatprep.subr.bf16.mxu0 0
  %5646 = vmatpush2.bf16.msra.mxu0 %v5591
  %5647 = vmatprep.mubr.bf16.mxu0 %v5479
  %5648 = vmatmul.mubr.bf16.gmra.mxu0 %v5478
  %v5649 = vpop.f32.mrf.mxu0
  %v5650 = vadd.f32 %v5517, %v5649
  %v5651 = vpop.f32.mrf.mxu0
  %v5652 = vpop.f32.mrf.mxu0
  %v5653 = vpop.f32.mrf.mxu0
  %5654 = vdwg.mxu0
  %v5657 = vunpack.c.l.s4 1966171168
  %v5658 = vunpack.c.0.s8 %v5657
  %v5659 = vlaneseq
  %v5660 = vshrl.u32 %v5659, 7
  %v5661 = vsub.s32 %v5658, %v5660
  %v5662 = vrot.slane %v5650, %v5661
  %v5663 = vcombine.high %v5662, %v5662
  %v5665 = vunpack.c.l.s4 1966171168
  %v5666 = vunpack.c.0.s8 %v5665
  %v5667 = vlaneseq
  %v5668 = vshrl.u32 %v5667, 7
  %v5669 = vsub.s32 %v5666, %v5668
  %v5670 = vrot.slane %v5662, %v5669
  %v5672 = vunpack.c.l.s4 1966171168
  %v5673 = vunpack.c.0.s8 %v5672
  %v5674 = vlaneseq
  %v5675 = vshrl.u32 %v5674, 7
  %v5676 = vsub.s32 %v5673, %v5675
  %v5677 = vrot.slane %v5663, %v5676
  %5680 = vst [vmem:[%s9] sm:$0x1] %v5670
  %5681 = vst [vmem:[%s9 + $0x1] sm:$0x1] %v5677
  // Predicated region
  $region38: #{sentinel_resnet_forward.1} parent=0 // pred_check
    _
  $region39: #{sentinel_resnet_forward.1} parent=0 // pred_check_branch
    %5683 = sbr.rel (0) target = $region41
  $region40: #{sentinel_resnet_forward.1} parent=0 // pred_region
    _
  $region41: #{sentinel_resnet_forward.1} parent=0 // pred_fallthru
    _
  // Predicated region
  $region42: #{sentinel_resnet_forward.1} parent=0 // pred_check
    _
  $region43: #{sentinel_resnet_forward.1} parent=0 // pred_check_branch
    %5685 = sbr.rel (0) target = $region45
  $region44: #{sentinel_resnet_forward.1} parent=0 // pred_region
    _
  $region45: #{sentinel_resnet_forward.1} parent=0 // pred_fallthru
    _

</llo_original>
